<compile_context>
chip_gen: v6e
topology: v6e:2x2x1
jax: 0.10.0
libtpu: 0.0.40
codegen_flags: <defaults>
</compile_context>

<pallas_src>
import functools

import jax
import jax.numpy as jnp
from jax import lax
from jax.experimental import pallas as pl
from jax.experimental.pallas import tpu as pltpu

NUM_REGIONS = 29
FEAT_DIM = 1024
HID1 = 512
HID2 = 128
POS_WEIGHT = 2.0  # deterministic synthetic pos_weight for BCEWithLogitsLoss


def _abnormal_classifier_kernel(x_ref, w1_ref, b1_ref, w2_ref, b2_ref,
                                w3_ref, b3_ref, mask_ref, tgt_ref,
                                logits_ref, partial_ref, *, pos_weight):
    # ---- MLP hot path: bf16 MXU matmuls with f32 accumulation ----
    x = x_ref[...]                                                    # (TILE_R, 1024) bf16
    h1 = jnp.dot(x, w1_ref[...], preferred_element_type=jnp.float32) + b1_ref[...]
    h1 = jnp.maximum(h1, 0.0).astype(jnp.bfloat16)                    # (TILE_R, 512)
    h2 = jnp.dot(h1, w2_ref[...], preferred_element_type=jnp.float32) + b2_ref[...]
    h2 = jnp.maximum(h2, 0.0)                                         # (TILE_R, 128) f32

    # ---- 128 -> 1 projection, emitted directly as a lane-dense row ----
    # w3 lives in row 0 of an (8,128) slab; (8,128) @ (TILE_R,128)^T -> (8,TILE_R)
    # is a negligible extra MXU push and avoids both a [TILE_R,1] masked store
    # and a column->row transpose.
    proj = lax.dot_general(w3_ref[...], h2,
                           dimension_numbers=(((1,), (1,)), ((), ())),
                           preferred_element_type=jnp.float32)        # (8, TILE_R)
    logits = proj[0:1, :] + b3_ref[0, 0]                              # (1, TILE_R)
    logits_ref[...] = logits

    # ---- masked BCE-with-logits, reduced to per-tile (num, den) partials ----
    #   l = pos_weight * y * softplus(-x) + (1 - y) * softplus(x)
    y = tgt_ref[...]                                                  # (1, TILE_R)
    m = mask_ref[...]                                                 # (1, TILE_R)
    ax = jnp.abs(logits)
    log1p_term = jnp.log1p(jnp.exp(-ax))
    sp_pos = jnp.maximum(logits, 0.0) + log1p_term                    # softplus(x)
    sp_neg = jnp.maximum(-logits, 0.0) + log1p_term                   # softplus(-x)
    elem = pos_weight * y * sp_neg + (1.0 - y) * sp_pos
    num = jnp.sum(m * elem)
    den = jnp.sum(m)
    lane = lax.broadcasted_iota(jnp.int32, (1, 128), 1)
    partial_ref[...] = (jnp.where(lane == 0, num, 0.0)
                        + jnp.where(lane == 1, den, 0.0))


def init_params(key):
    """Deterministic PyTorch-Linear-style init (uniform(-1/sqrt(fan_in), ...)), f32."""
    ks = jax.random.split(key, 6)

    def lin(kw, kb, fan_in, fan_out):
        bound = 1.0 / jnp.sqrt(fan_in)
        w = jax.random.uniform(kw, (fan_in, fan_out), jnp.float32, -bound, bound)
        b = jax.random.uniform(kb, (fan_out,), jnp.float32, -bound, bound)
        return w, b

    w1, b1 = lin(ks[0], ks[1], FEAT_DIM, HID1)
    w2, b2 = lin(ks[2], ks[3], HID1, HID2)
    w3, b3 = lin(ks[4], ks[5], HID2, 1)
    return dict(w1=w1, b1=b1, w2=w2, b2=b2, w3=w3, b3=b3)


def pack_params(p):
    """Kernel-ready layout: bf16 matmul weights (f32 accumulation), f32 biases,
    final 128->1 weight embedded in row 0 of an (8, 128) f32 slab."""
    w3_slab = jnp.zeros((8, HID2), jnp.float32).at[0, :].set(p["w3"][:, 0])
    return dict(
        w1=p["w1"].astype(jnp.bfloat16),
        b1=p["b1"].reshape(1, HID1).astype(jnp.float32),
        w2=p["w2"].astype(jnp.bfloat16),
        b2=p["b2"].reshape(1, HID2).astype(jnp.float32),
        w3=w3_slab,
        b3=p["b3"].reshape(1, 1).astype(jnp.float32),
    )


def _choose_tile(num_rows):
    # 128..512 rows per tile: lane-dense outputs, MXU-friendly M, and a per-step
    # working set (<~8 MiB incl. double buffers + resident weights) that fits
    # v5e's 16 MiB scoped VMEM default and v7x's smaller physical VMEM.
    return min(512, ((num_rows + 127) // 128) * 128)


def _run_kernel(x_pad, params, mask_td, tgt_td, tile_r):
    num_tiles = mask_td.shape[0]
    kernel = functools.partial(_abnormal_classifier_kernel, pos_weight=POS_WEIGHT)
    grid_spec = pltpu.PrefetchScalarGridSpec(
        num_scalar_prefetch=0,
        grid=(num_tiles,),
        in_specs=[
            pl.BlockSpec((tile_r, FEAT_DIM), lambda i: (i, 0)),   # x (streamed)
            pl.BlockSpec((FEAT_DIM, HID1), lambda i: (0, 0)),     # w1 (resident)
            pl.BlockSpec((1, HID1), lambda i: (0, 0)),            # b1
            pl.BlockSpec((HID1, HID2), lambda i: (0, 0)),         # w2 (resident)
            pl.BlockSpec((1, HID2), lambda i: (0, 0)),            # b2
            pl.BlockSpec((8, HID2), lambda i: (0, 0)),            # w3 slab
            pl.BlockSpec((1, 1), lambda i: (0, 0)),               # b3
            pl.BlockSpec((1, tile_r), lambda i: (i, 0)),          # mask (lane-dense)
            pl.BlockSpec((1, tile_r), lambda i: (i, 0)),          # targets (lane-dense)
        ],
        out_specs=(
            pl.BlockSpec((1, tile_r), lambda i: (i, 0)),          # logits (lane-dense)
            pl.BlockSpec((1, 128), lambda i: (i, 0)),             # (num, den) partials
        ),
    )
    logits_td, partials = pl.pallas_call(
        kernel,
        out_shape=(
            jax.ShapeDtypeStruct((num_tiles, tile_r), jnp.float32),
            jax.ShapeDtypeStruct((num_tiles, 128), jnp.float32),
        ),
        grid_spec=grid_spec,
        compiler_params=pltpu.CompilerParams(
            dimension_semantics=("parallel",)),  # row tiles are independent -> 2 TCs on v7x
    )(x_pad, params["w1"], params["b1"], params["w2"], params["b2"],
      params["w3"], params["b3"], mask_td, tgt_td)
    return logits_td, partials


def binary_classifier_region_abnormal_forward(params,
                                              object_detector_features,
                                              object_detector_detected_classes,
                                              abnormal_classifier_targets=None,
                                              training=False):
    """Mirrors BinaryClassifierRegionAbnormalWrapper.forward.

    training -> (loss, None); validation -> (loss, preds); inference -> (None, preds).
    """
    B = object_detector_features.shape[0]
    R = B * NUM_REGIONS
    tile_r = _choose_tile(R)
    num_tiles = (R + tile_r - 1) // tile_r
    r_pad = num_tiles * tile_r

    x = object_detector_features.reshape(R, FEAT_DIM).astype(jnp.bfloat16)
    x_pad = jnp.pad(x, ((0, r_pad - R), (0, 0)))

    mask = object_detector_detected_classes.reshape(R).astype(jnp.float32)
    mask_td = jnp.pad(mask, (0, r_pad - R)).reshape(num_tiles, tile_r)

    have_targets = abnormal_classifier_targets is not None
    if have_targets:
        tgt = abnormal_classifier_targets.reshape(R).astype(jnp.float32)
    else:
        tgt = jnp.zeros((R,), jnp.float32)
    tgt_td = jnp.pad(tgt, (0, r_pad - R)).reshape(num_tiles, tile_r)

    logits_td, partials = _run_kernel(x_pad, params, mask_td, tgt_td, tile_r)

    logits = logits_td.reshape(r_pad)[:R].reshape(B, NUM_REGIONS)
    num = jnp.sum(partials[:, 0])
    den = jnp.sum(partials[:, 1])
    # NOTE: PyTorch BCEWithLogitsLoss(reduction='mean') over zero selected
    # elements would produce NaN; max(den, 1) is a deliberate guard.
    loss_scalar = num / jnp.maximum(den, 1.0)

    if training:
        return loss_scalar, None

    # eval: predicted abnormal iff logit > 0 AND the region was detected
    preds = (logits > 0.0) & object_detector_detected_classes.astype(jnp.bool_)
    if have_targets:
        return loss_scalar, preds
    return None, preds


def _reference_forward(params_f32, feats, detected, targets):
    """Pure-JAX reference, matching the kernel's bf16 input rounding."""
    q = lambda a: a.astype(jnp.bfloat16).astype(jnp.float32)
    x = q(feats.astype(jnp.float32))
    h1 = jax.nn.relu(x @ q(params_f32["w1"]) + params_f32["b1"])
    h1 = q(h1)
    h2 = jax.nn.relu(h1 @ q(params_f32["w2"]) + params_f32["b2"])
    logits = h2 @ params_f32["w3"][:, 0] + params_f32["b3"][0]        # [B, 29]
    m = detected.astype(jnp.float32)
    y = targets.astype(jnp.float32)
    elem = (POS_WEIGHT * y * jax.nn.softplus(-logits)
            + (1.0 - y) * jax.nn.softplus(logits))
    loss = (m * elem).sum() / jnp.maximum(m.sum(), 1.0)
    preds = (logits > 0.0) & detected.astype(jnp.bool_)
    return loss, preds, logits


if __name__ == "__main__":
    key = jax.random.PRNGKey(0)
    k_params, k_x, k_det, k_abn = jax.random.split(key, 4)

    params_f32 = init_params(k_params)
    params = pack_params(params_f32)

    def check(B, kx, kd, ka):
        feats = jax.random.normal(kx, (B, NUM_REGIONS, FEAT_DIM), dtype=jnp.float32)
        det = jax.random.bernoulli(kd, 0.7, (B, NUM_REGIONS))
        tgt = jax.random.bernoulli(ka, 0.3, (B, NUM_REGIONS))

        loss, preds = binary_classifier_region_abnormal_forward(
            params, feats, det, tgt, training=False)
        loss = jax.block_until_ready(loss)
        preds = jax.block_until_ready(preds)

        ref_loss, ref_preds, ref_logits = _reference_forward(params_f32, feats, det, tgt)
        assert preds.shape == (B, NUM_REGIONS) and preds.dtype == jnp.bool_
        # preds may only disagree where the reference logit is razor-thin near 0
        safe = jnp.abs(ref_logits) > 1e-3
        assert bool(jnp.all((preds == ref_preds) | ~safe))
        assert abs(float(loss) - float(ref_loss)) < 1e-2, (float(loss), float(ref_loss))

    # single-tile case (grid=1) and a multi-tile case (grid>1, 'parallel' row axis)
    check(2, k_x, k_det, k_abn)
    k_x2, k_det2, k_abn2 = jax.random.split(jax.random.PRNGKey(1), 3)
    check(20, k_x2, k_det2, k_abn2)

    # exercise the training / inference mode branches of the wrapper
    feats = jax.random.normal(k_x, (2, NUM_REGIONS, FEAT_DIM), dtype=jnp.float32)
    det = jax.random.bernoulli(k_det, 0.7, (2, NUM_REGIONS))
    tgt = jax.random.bernoulli(k_abn, 0.3, (2, NUM_REGIONS))
    tr_loss, tr_preds = binary_classifier_region_abnormal_forward(
        params, feats, det, tgt, training=True)
    assert tr_preds is None
    jax.block_until_ready(tr_loss)
    inf_loss, inf_preds = binary_classifier_region_abnormal_forward(
        params, feats, det, None, training=False)
    assert inf_loss is None and inf_preds is not None
    jax.block_until_ready(inf_preds)

    print("KERNEL_OK")
</pallas_src>

<mosaic_0001>
module attributes {stable_mosaic.version = 11 : i64} {
  func.func @_abnormal_classifier_kernel(%arg0: i32, %arg1: memref<128x1024xbf16, #tpu.memory_space<vmem>>, %arg2: memref<1024x512xbf16, #tpu.memory_space<vmem>>, %arg3: memref<1x512xf32, #tpu.memory_space<vmem>>, %arg4: memref<512x128xbf16, #tpu.memory_space<vmem>>, %arg5: memref<1x128xf32, #tpu.memory_space<vmem>>, %arg6: memref<8x128xf32, #tpu.memory_space<vmem>>, %arg7: memref<1x1xf32, #tpu.memory_space<vmem>>, %arg8: memref<1x128xf32, #tpu.memory_space<vmem>>, %arg9: memref<1x128xf32, #tpu.memory_space<vmem>>, %arg10: memref<1x128xf32, #tpu.memory_space<vmem>>, %arg11: memref<1x128xf32, #tpu.memory_space<vmem>>) attributes {dimension_semantics = [#tpu.dimension_semantics<parallel>], iteration_bounds = array<i64: 1>, scalar_prefetch = 0 : i64, scratch_operands = 0 : i64, tpu.core_type = #tpu.core_type<tc>, window_params = [{transform_indices = @transform_0, window_bounds = array<i64: 128, 1024>}, {pipeline_mode = #tpu.pipeline_mode<synchronous>, transform_indices = @transform_1, window_bounds = array<i64: 1024, 512>}, {pipeline_mode = #tpu.pipeline_mode<synchronous>, transform_indices = @transform_2, window_bounds = array<i64: 1, 512>}, {pipeline_mode = #tpu.pipeline_mode<synchronous>, transform_indices = @transform_3, window_bounds = array<i64: 512, 128>}, {pipeline_mode = #tpu.pipeline_mode<synchronous>, transform_indices = @transform_4, window_bounds = array<i64: 1, 128>}, {pipeline_mode = #tpu.pipeline_mode<synchronous>, transform_indices = @transform_5, window_bounds = array<i64: 8, 128>}, {pipeline_mode = #tpu.pipeline_mode<synchronous>, transform_indices = @transform_6, window_bounds = array<i64: 1, 1>}, {transform_indices = @transform_7, window_bounds = array<i64: 1, 128>}, {transform_indices = @transform_8, window_bounds = array<i64: 1, 128>}, {transform_indices = @transform_9, window_bounds = array<i64: 1, 128>}, {transform_indices = @transform_10, window_bounds = array<i64: 1, 128>}]} {
    %c0 = arith.constant 0 : index
    %c0_0 = arith.constant 0 : index
    %0 = vector.load %arg1[%c0, %c0_0] : memref<128x1024xbf16, #tpu.memory_space<vmem>>, vector<128x1024xbf16>
    %c0_1 = arith.constant 0 : index
    %c0_2 = arith.constant 0 : index
    %1 = vector.load %arg2[%c0_1, %c0_2] : memref<1024x512xbf16, #tpu.memory_space<vmem>>, vector<1024x512xbf16>
    %cst = arith.constant dense<0.000000e+00> : vector<128x512xf32>
    %2 = tpu.matmul %0, %1, %cst {dimension_numbers = #tpu.dot_dimension_numbers<[1], [0], [0], [1], [0, 0, 1, 1], [], []>} : vector<128x1024xbf16>, vector<1024x512xbf16>, vector<128x512xf32> -> vector<128x512xf32>
    %c0_3 = arith.constant 0 : index
    %c0_4 = arith.constant 0 : index
    %3 = vector.load %arg3[%c0_3, %c0_4] : memref<1x512xf32, #tpu.memory_space<vmem>>, vector<1x512xf32>
    %4 = vector.broadcast %3 : vector<1x512xf32> to vector<128x512xf32>
    %5 = arith.addf %2, %4 : vector<128x512xf32>
    %cst_5 = arith.constant 0.000000e+00 : f32
    %6 = vector.broadcast %cst_5 : f32 to vector<128x512xf32>
    %7 = arith.maximumf %5, %6 : vector<128x512xf32>
    %8 = arith.truncf %7 : vector<128x512xf32> to vector<128x512xbf16>
    %c0_6 = arith.constant 0 : index
    %c0_7 = arith.constant 0 : index
    %9 = vector.load %arg4[%c0_6, %c0_7] : memref<512x128xbf16, #tpu.memory_space<vmem>>, vector<512x128xbf16>
    %cst_8 = arith.constant dense<0.000000e+00> : vector<128x128xf32>
    %10 = tpu.matmul %8, %9, %cst_8 {dimension_numbers = #tpu.dot_dimension_numbers<[1], [0], [0], [1], [0, 0, 1, 1], [], []>} : vector<128x512xbf16>, vector<512x128xbf16>, vector<128x128xf32> -> vector<128x128xf32>
    %c0_9 = arith.constant 0 : index
    %c0_10 = arith.constant 0 : index
    %11 = vector.load %arg5[%c0_9, %c0_10] : memref<1x128xf32, #tpu.memory_space<vmem>>, vector<1x128xf32>
    %12 = vector.broadcast %11 : vector<1x128xf32> to vector<128x128xf32>
    %13 = arith.addf %10, %12 : vector<128x128xf32>
    %cst_11 = arith.constant 0.000000e+00 : f32
    %14 = vector.broadcast %cst_11 : f32 to vector<128x128xf32>
    %15 = arith.maximumf %13, %14 : vector<128x128xf32>
    %c0_12 = arith.constant 0 : index
    %c0_13 = arith.constant 0 : index
    %16 = vector.load %arg6[%c0_12, %c0_13] : memref<8x128xf32, #tpu.memory_space<vmem>>, vector<8x128xf32>
    %cst_14 = arith.constant dense<0.000000e+00> : vector<8x128xf32>
    %17 = tpu.matmul %16, %15, %cst_14 {dimension_numbers = #tpu.dot_dimension_numbers<[1], [1], [0], [0], [0, 0, 1, 0], [], []>} : vector<8x128xf32>, vector<128x128xf32>, vector<8x128xf32> -> vector<8x128xf32>
    %18 = vector.extract_strided_slice %17 {offsets = [0, 0], sizes = [1, 128], strides = [1, 1]} : vector<8x128xf32> to vector<1x128xf32>
    %c0_15 = arith.constant 0 : index
    %c0_16 = arith.constant 0 : index
    %19 = vector.load %arg7[%c0_15, %c0_16] : memref<1x1xf32, #tpu.memory_space<vmem>>, vector<1x1xf32>
    %20 = vector.extract %19[0, 0] : f32 from vector<1x1xf32>
    %21 = vector.broadcast %20 : f32 to vector<1x128xf32>
    %22 = arith.addf %18, %21 : vector<1x128xf32>
    %c0_17 = arith.constant 0 : index
    %c0_18 = arith.constant 0 : index
    %23 = vector.load %arg10[%c0_17, %c0_18] : memref<1x128xf32, #tpu.memory_space<vmem>>, vector<1x128xf32>
    tpu.vector_store %arg10[%c0_17, %c0_18], %22 {strides = array<i32>} : memref<1x128xf32, #tpu.memory_space<vmem>>, vector<1x128xf32>,
    %c0_19 = arith.constant 0 : index
    %c0_20 = arith.constant 0 : index
    %24 = vector.load %arg9[%c0_19, %c0_20] : memref<1x128xf32, #tpu.memory_space<vmem>>, vector<1x128xf32>
    %c0_21 = arith.constant 0 : index
    %c0_22 = arith.constant 0 : index
    %25 = vector.load %arg8[%c0_21, %c0_22] : memref<1x128xf32, #tpu.memory_space<vmem>>, vector<1x128xf32>
    %26 = math.absf %22 : vector<1x128xf32>
    %cst_23 = arith.constant 0.000000e+00 : f32
    %27 = vector.broadcast %cst_23 : f32 to vector<1x128xf32>
    %28 = arith.subf %27, %26 : vector<1x128xf32>
    %29 = math.exp %28 : vector<1x128xf32>
    %30 = math.log1p %29 : vector<1x128xf32>
    %cst_24 = arith.constant 0.000000e+00 : f32
    %31 = vector.broadcast %cst_24 : f32 to vector<1x128xf32>
    %32 = arith.maximumf %22, %31 : vector<1x128xf32>
    %33 = arith.addf %32, %30 : vector<1x128xf32>
    %cst_25 = arith.constant 0.000000e+00 : f32
    %34 = vector.broadcast %cst_25 : f32 to vector<1x128xf32>
    %35 = arith.subf %34, %22 : vector<1x128xf32>
    %cst_26 = arith.constant 0.000000e+00 : f32
    %36 = vector.broadcast %cst_26 : f32 to vector<1x128xf32>
    %37 = arith.maximumf %35, %36 : vector<1x128xf32>
    %38 = arith.addf %37, %30 : vector<1x128xf32>
    %cst_27 = arith.constant 2.000000e+00 : f32
    %39 = vector.broadcast %cst_27 : f32 to vector<1x128xf32>
    %40 = arith.mulf %39, %24 : vector<1x128xf32>
    %41 = arith.mulf %40, %38 : vector<1x128xf32>
    %cst_28 = arith.constant 1.000000e+00 : f32
    %42 = vector.broadcast %cst_28 : f32 to vector<1x128xf32>
    %43 = arith.subf %42, %24 : vector<1x128xf32>
    %44 = arith.mulf %43, %33 : vector<1x128xf32>
    %45 = arith.addf %41, %44 : vector<1x128xf32>
    %46 = arith.mulf %25, %45 : vector<1x128xf32>
    %47 = vector.shape_cast %46 : vector<1x128xf32> to vector<1x1x128xf32>
    %cst_29 = arith.constant dense<0.000000e+00> : vector<1xf32>
    %48 = vector.multi_reduction <add>, %47, %cst_29 [1, 2] : vector<1x1x128xf32> to vector<1xf32>
    %49 = vector.shape_cast %48 : vector<1xf32> to vector<1x1x1xf32>
    %50 = vector.extract %49[0, 0, 0] : f32 from vector<1x1x1xf32>
    %51 = vector.shape_cast %25 : vector<1x128xf32> to vector<1x1x128xf32>
    %cst_30 = arith.constant dense<0.000000e+00> : vector<1xf32>
    %52 = vector.multi_reduction <add>, %51, %cst_30 [1, 2] : vector<1x1x128xf32> to vector<1xf32>
    %53 = vector.shape_cast %52 : vector<1xf32> to vector<1x1x1xf32>
    %54 = vector.extract %53[0, 0, 0] : f32 from vector<1x1x1xf32>
    %55 = tpu.iota {dimensions = array<i32: 1>} : vector<1x128xi32>
    %c0_i32 = arith.constant 0 : i32
    %56 = vector.broadcast %c0_i32 : i32 to vector<1x128xi32>
    %57 = arith.cmpi eq, %55, %56 : vector<1x128xi32>
    %cst_31 = arith.constant 0.000000e+00 : f32
    %58 = vector.broadcast %50 : f32 to vector<1x128xf32>
    %59 = vector.broadcast %cst_31 : f32 to vector<1x128xf32>
    %60 = arith.select %57, %58, %59 : vector<1x128xi1>, vector<1x128xf32>
    %c1_i32 = arith.constant 1 : i32
    %61 = vector.broadcast %c1_i32 : i32 to vector<1x128xi32>
    %62 = arith.cmpi eq, %55, %61 : vector<1x128xi32>
    %cst_32 = arith.constant 0.000000e+00 : f32
    %63 = vector.broadcast %54 : f32 to vector<1x128xf32>
    %64 = vector.broadcast %cst_32 : f32 to vector<1x128xf32>
    %65 = arith.select %62, %63, %64 : vector<1x128xi1>, vector<1x128xf32>
    %66 = arith.addf %60, %65 : vector<1x128xf32>
    %c0_33 = arith.constant 0 : index
    %c0_34 = arith.constant 0 : index
    %67 = vector.load %arg11[%c0_33, %c0_34] : memref<1x128xf32, #tpu.memory_space<vmem>>, vector<1x128xf32>
    tpu.vector_store %arg11[%c0_33, %c0_34], %66 {strides = array<i32>} : memref<1x128xf32, #tpu.memory_space<vmem>>, vector<1x128xf32>,
    return
  }
  func.func @transform_0(%arg0: i32) -> (i32, i32) {
    %c0_i32 = arith.constant 0 : i32
    %c0_i32_0 = arith.constant 0 : i32
    return %arg0, %c0_i32 : i32, i32
  }
  func.func @transform_1(%arg0: i32) -> (i32, i32) {
    %c0_i32 = arith.constant 0 : i32
    %c0_i32_0 = arith.constant 0 : i32
    %c0_i32_1 = arith.constant 0 : i32
    return %c0_i32, %c0_i32_0 : i32, i32
  }
  func.func @transform_2(%arg0: i32) -> (i32, i32) {
    %c0_i32 = arith.constant 0 : i32
    %c0_i32_0 = arith.constant 0 : i32
    %c0_i32_1 = arith.constant 0 : i32
    return %c0_i32, %c0_i32_0 : i32, i32
  }
  func.func @transform_3(%arg0: i32) -> (i32, i32) {
    %c0_i32 = arith.constant 0 : i32
    %c0_i32_0 = arith.constant 0 : i32
    %c0_i32_1 = arith.constant 0 : i32
    return %c0_i32, %c0_i32_0 : i32, i32
  }
  func.func @transform_4(%arg0: i32) -> (i32, i32) {
    %c0_i32 = arith.constant 0 : i32
    %c0_i32_0 = arith.constant 0 : i32
    %c0_i32_1 = arith.constant 0 : i32
    return %c0_i32, %c0_i32_0 : i32, i32
  }
  func.func @transform_5(%arg0: i32) -> (i32, i32) {
    %c0_i32 = arith.constant 0 : i32
    %c0_i32_0 = arith.constant 0 : i32
    %c0_i32_1 = arith.constant 0 : i32
    return %c0_i32, %c0_i32_0 : i32, i32
  }
  func.func @transform_6(%arg0: i32) -> (i32, i32) {
    %c0_i32 = arith.constant 0 : i32
    %c0_i32_0 = arith.constant 0 : i32
    %c0_i32_1 = arith.constant 0 : i32
    return %c0_i32, %c0_i32_0 : i32, i32
  }
  func.func @transform_7(%arg0: i32) -> (i32, i32) {
    %c0_i32 = arith.constant 0 : i32
    %c0_i32_0 = arith.constant 0 : i32
    return %arg0, %c0_i32 : i32, i32
  }
  func.func @transform_8(%arg0: i32) -> (i32, i32) {
    %c0_i32 = arith.constant 0 : i32
    %c0_i32_0 = arith.constant 0 : i32
    return %arg0, %c0_i32 : i32, i32
  }
  func.func @transform_9(%arg0: i32) -> (i32, i32) {
    %c0_i32 = arith.constant 0 : i32
    %c0_i32_0 = arith.constant 0 : i32
    return %arg0, %c0_i32 : i32, i32
  }
  func.func @transform_10(%arg0: i32) -> (i32, i32) {
    %c0_i32 = arith.constant 0 : i32
    %c0_i32_0 = arith.constant 0 : i32
    return %arg0, %c0_i32 : i32, i32
  }
}

</mosaic_0001>

<llo_original>
// kernel: tpu_custom_call.1
$region0: #{tpu_custom_call.1}
  #allocation0 [shape = 'u32[]', space=smem, size = 0x4, offset = 0x4, fixed_abs, tag = 'smem constant byte address 0x4 - core index']
  #allocation1 [shape = 'u32[144,128]{1,0:T(1,128)}', space=vmem, size = 0x12000, scoped, tag = 'internal scratch']
  #allocation2 [shape = 'f32[1,1]{1,0:T(1,128)S(1)}', space=vmem, size = 0x200, scoped, tag = 'scoped memory for tpu_custom_call.1']
  %s0 = inlined_call_operand.hbm [shape: bf16[128,1024], index: 0, kind: input, shape index: {}]
  %s1 = inlined_call_operand.hbm [shape: bf16[1024,512], index: 1, kind: input, shape index: {}]
  %s2 = inlined_call_operand.hbm [shape: f32[1,512], index: 2, kind: input, shape index: {}]
  %s3 = inlined_call_operand.hbm [shape: bf16[512,128], index: 3, kind: input, shape index: {}]
  %s4 = inlined_call_operand.vmem [shape: f32[1,128], index: 4, kind: input, shape index: {}]
  %s5 = inlined_call_operand.vmem [shape: f32[8,128], index: 5, kind: input, shape index: {}]
  %s6 = inlined_call_operand.<no memory space> [shape: f32[1,1], index: 6, kind: input, shape index: {}]
  %s7 = inlined_call_operand.vmem [shape: f32[1,128], index: 7, kind: input, shape index: {}]
  %s8 = inlined_call_operand.vmem [shape: f32[1,128], index: 8, kind: input, shape index: {}]
  %s9 = inlined_call_operand.hbm [shape: f32[1,128], index: 9, kind: output, shape index: {0}]
  %s10 = inlined_call_operand.hbm [shape: f32[1,128], index: 10, kind: output, shape index: {1}]
  %11 = xla_tuple %s9, %s10
  %s12 = sld [smem:[#allocation0]]
  $region70: #{tpu_custom_call.1} parent=0
    _
  %s14 = ssub.s32 1, %s12
  %s15 = scalar_select 0, %s14, %s12
  %v16 = vstv %s6
  %17 = vst [vmem:[#allocation2] sm:$0x1] %v16
  $region1: #{tpu_custom_call.1} parent=0
    #allocation3 [shape = 'u8[262144]{0}', space=vmem, size = 0x40000, scoped, tag = 'input window, operand 0, single buffered']
    #allocation4 [shape = 's32[1]{0}', space=sflag, size = 0x4, scoped, tag = 'scoped memory for tpu_custom_call.1']
    #allocation5 [shape = 's32[1]{0}', space=sflag, size = 0x4, scoped, tag = 'scoped memory for tpu_custom_call.1']
    #allocation6 [shape = 'u8[1048576]{0}', space=vmem, size = 0x100000, scoped, tag = 'input window, operand 1, single buffered']
    #allocation7 [shape = 's32[1]{0}', space=sflag, size = 0x4, scoped, tag = 'scoped memory for tpu_custom_call.1']
    #allocation8 [shape = 'u8[2048]{0}', space=vmem, size = 0x800, scoped, tag = 'input window, operand 2, single buffered']
    #allocation9 [shape = 'u8[131072]{0}', space=vmem, size = 0x20000, scoped, tag = 'input window, operand 3, single buffered']
    #allocation10 [shape = 's32[1]{0}', space=sflag, size = 0x4, scoped, tag = 'scoped memory for tpu_custom_call.1']
    #allocation11 [shape = 'u8[512]{0}', space=vmem, size = 0x400, scoped, tag = 'output window, operand 0, single buffered']
    #allocation12 [shape = 'u8[512]{0}', space=vmem, size = 0x400, scoped, tag = 'output window, operand 1, single buffered']
    #allocation13 [shape = 's32[1]{0}', space=sflag, size = 0x4, scoped, tag = 'scoped memory for tpu_custom_call.1']
    %18 = vsyncpa [#allocation4], 0
    %19 = vsyncpa [#allocation7], 0
    %20 = vsyncpa [#allocation10], 0
    %21 = vsyncpa [#allocation5], 0
    %22 = vsyncpa [#allocation13], 0
    // Predicated region
    $region2: #{tpu_custom_call.1} parent=1 // pred_check
      _
    $region3: #{tpu_custom_call.1} parent=1 // pred_check_branch
      %24 = sbr.rel (0) target = $region5
    $region4: #{tpu_custom_call.1} parent=1 // pred_region
      %s26 = ssub.s32 8192, 8192
      %27 = vsyncadd [#allocation4], %s26
      %s28 = sshll.u32 [#allocation3], 4
      %s29 = int_to_ptr.vmem [resolvable:$true] %s28
      %34 = dma.hbm_to_vmem [thread:$0]  %s0, 8192, %s29, [#allocation4], 512, 512, 32
    $region5: #{tpu_custom_call.1} parent=1 // pred_fallthru
      _
    // Predicated region
    $region6: #{tpu_custom_call.1} parent=1 // pred_check
      _
    $region7: #{tpu_custom_call.1} parent=1 // pred_check_branch
      %36 = sbr.rel (0) target = $region9
    $region8: #{tpu_custom_call.1} parent=1 // pred_region
      %s38 = ssub.s32 32768, 32768
      %39 = vsyncadd [#allocation7], %s38
      %s40 = sshll.u32 [#allocation6], 4
      %s41 = int_to_ptr.vmem [resolvable:$true] %s40
      %46 = dma.hbm_to_vmem [thread:$0]  %s1, 32768, %s41, [#allocation7], 256, 256, 16
    $region9: #{tpu_custom_call.1} parent=1 // pred_fallthru
      _
    // Predicated region
    $region10: #{tpu_custom_call.1} parent=1 // pred_check
      _
    $region11: #{tpu_custom_call.1} parent=1 // pred_check_branch
      %48 = sbr.rel (0) target = $region13
    $region12: #{tpu_custom_call.1} parent=1 // pred_region
      %s50 = ssub.s32 64, 64
      %51 = vsyncadd [#allocation7], %s50
      %s53 = sshll.u32 [#allocation8], 4
      %s54 = int_to_ptr.vmem [resolvable:$true] %s53
      %56 = dma.hbm_to_vmem [thread:$0]  %s2, 64, %s54, [#allocation7]
    $region13: #{tpu_custom_call.1} parent=1 // pred_fallthru
      _
    // Predicated region
    $region14: #{tpu_custom_call.1} parent=1 // pred_check
      _
    $region15: #{tpu_custom_call.1} parent=1 // pred_check_branch
      %58 = sbr.rel (0) target = $region17
    $region16: #{tpu_custom_call.1} parent=1 // pred_region
      %s60 = ssub.s32 4096, 4096
      %61 = vsyncadd [#allocation10], %s60
      %s62 = sshll.u32 [#allocation9], 4
      %s63 = int_to_ptr.vmem [resolvable:$true] %s62
      %68 = dma.hbm_to_vmem [thread:$0]  %s3, 4096, %s63, [#allocation10], 64, 64, 4
    $region17: #{tpu_custom_call.1} parent=1 // pred_fallthru
      _
    // Predicated region
    $region18: #{tpu_custom_call.1} parent=1 // pred_check
      _
    $region19: #{tpu_custom_call.1} parent=1 // pred_check_branch
      %70 = sbr.rel (0) target = $region21
    $region20: #{tpu_custom_call.1} parent=1 // pred_region
      _
    $region21: #{tpu_custom_call.1} parent=1 // pred_fallthru
      _
    // Predicated region
    $region22: #{tpu_custom_call.1} parent=1 // pred_check
      _
    $region23: #{tpu_custom_call.1} parent=1 // pred_check_branch
      %72 = sbr.rel (0) target = $region25
    $region24: #{tpu_custom_call.1} parent=1 // pred_region
      _
    $region25: #{tpu_custom_call.1} parent=1 // pred_fallthru
      _
    // Predicated region
    $region26: #{tpu_custom_call.1} parent=1 // pred_check
      _
    $region27: #{tpu_custom_call.1} parent=1 // pred_check_branch
      %74 = sbr.rel (0) target = $region29
    $region28: #{tpu_custom_call.1} parent=1 // pred_region
      _
    $region29: #{tpu_custom_call.1} parent=1 // pred_fallthru
      _
    // Predicated region
    $region30: #{tpu_custom_call.1} parent=1 // pred_check
      _
    $region31: #{tpu_custom_call.1} parent=1 // pred_check_branch
      %76 = sbr.rel (0) target = $region33
    $region32: #{tpu_custom_call.1} parent=1 // pred_region
      _
    $region33: #{tpu_custom_call.1} parent=1 // pred_fallthru
      _
    // Predicated region
    $region34: #{tpu_custom_call.1} parent=1 // pred_check
      _
    $region35: #{tpu_custom_call.1} parent=1 // pred_check_branch
      %78 = sbr.rel (0) target = $region37
    $region36: #{tpu_custom_call.1} parent=1 // pred_region
      _
    $region37: #{tpu_custom_call.1} parent=1 // pred_fallthru
      _
    // Predicated region
    $region38: #{tpu_custom_call.1} parent=1 // pred_check
      _
    $region39: #{tpu_custom_call.1} parent=1 // pred_check_branch
      %80 = sbr.rel (0) target = $region41
    $region40: #{tpu_custom_call.1} parent=1 // pred_region
      %81 = dma.done [#allocation4], 8192
    $region41: #{tpu_custom_call.1} parent=1 // pred_fallthru
      _
    // Predicated region
    $region42: #{tpu_custom_call.1} parent=1 // pred_check
      _
    $region43: #{tpu_custom_call.1} parent=1 // pred_check_branch
      %83 = sbr.rel (0) target = $region45
    $region44: #{tpu_custom_call.1} parent=1 // pred_region
      %84 = dma.done [#allocation7], 32768
    $region45: #{tpu_custom_call.1} parent=1 // pred_fallthru
      _
    // Predicated region
    $region46: #{tpu_custom_call.1} parent=1 // pred_check
      _
    $region47: #{tpu_custom_call.1} parent=1 // pred_check_branch
      %86 = sbr.rel (0) target = $region49
    $region48: #{tpu_custom_call.1} parent=1 // pred_region
      %87 = dma.done [#allocation7], 64
    $region49: #{tpu_custom_call.1} parent=1 // pred_fallthru
      _
    // Predicated region
    $region50: #{tpu_custom_call.1} parent=1 // pred_check
      _
    $region51: #{tpu_custom_call.1} parent=1 // pred_check_branch
      %89 = sbr.rel (0) target = $region53
    $region52: #{tpu_custom_call.1} parent=1 // pred_region
      %90 = dma.done [#allocation10], 4096
    $region53: #{tpu_custom_call.1} parent=1 // pred_fallthru
      _
    %v92 = vld [vmem:[#allocation3] sm:$0xff]
    %v93 = vld [vmem:[#allocation3 + $0x8] sm:$0xff]
    %v94 = vld [vmem:[#allocation3 + $0x10] sm:$0xff]
    %v95 = vld [vmem:[#allocation3 + $0x18] sm:$0xff]
    %v96 = vld [vmem:[#allocation3 + $0x20] sm:$0xff]
    %v97 = vld [vmem:[#allocation3 + $0x28] sm:$0xff]
    %v98 = vld [vmem:[#allocation3 + $0x30] sm:$0xff]
    %v99 = vld [vmem:[#allocation3 + $0x38] sm:$0xff]
    %v100 = vld [vmem:[#allocation3 + $0x40] sm:$0xff]
    %v101 = vld [vmem:[#allocation3 + $0x48] sm:$0xff]
    %v102 = vld [vmem:[#allocation3 + $0x50] sm:$0xff]
    %v103 = vld [vmem:[#allocation3 + $0x58] sm:$0xff]
    %v104 = vld [vmem:[#allocation3 + $0x60] sm:$0xff]
    %v105 = vld [vmem:[#allocation3 + $0x68] sm:$0xff]
    %v106 = vld [vmem:[#allocation3 + $0x70] sm:$0xff]
    %v107 = vld [vmem:[#allocation3 + $0x78] sm:$0xff]
    %v108 = vld [vmem:[#allocation3 + $0x80] sm:$0xff]
    %v109 = vld [vmem:[#allocation3 + $0x88] sm:$0xff]
    %v110 = vld [vmem:[#allocation3 + $0x90] sm:$0xff]
    %v111 = vld [vmem:[#allocation3 + $0x98] sm:$0xff]
    %v112 = vld [vmem:[#allocation3 + $0xa0] sm:$0xff]
    %v113 = vld [vmem:[#allocation3 + $0xa8] sm:$0xff]
    %v114 = vld [vmem:[#allocation3 + $0xb0] sm:$0xff]
    %v115 = vld [vmem:[#allocation3 + $0xb8] sm:$0xff]
    %v116 = vld [vmem:[#allocation3 + $0xc0] sm:$0xff]
    %v117 = vld [vmem:[#allocation3 + $0xc8] sm:$0xff]
    %v118 = vld [vmem:[#allocation3 + $0xd0] sm:$0xff]
    %v119 = vld [vmem:[#allocation3 + $0xd8] sm:$0xff]
    %v120 = vld [vmem:[#allocation3 + $0xe0] sm:$0xff]
    %v121 = vld [vmem:[#allocation3 + $0xe8] sm:$0xff]
    %v122 = vld [vmem:[#allocation3 + $0xf0] sm:$0xff]
    %v123 = vld [vmem:[#allocation3 + $0xf8] sm:$0xff]
    %v124 = vld [vmem:[#allocation3 + $0x100] sm:$0xff]
    %v125 = vld [vmem:[#allocation3 + $0x108] sm:$0xff]
    %v126 = vld [vmem:[#allocation3 + $0x110] sm:$0xff]
    %v127 = vld [vmem:[#allocation3 + $0x118] sm:$0xff]
    %v128 = vld [vmem:[#allocation3 + $0x120] sm:$0xff]
    %v129 = vld [vmem:[#allocation3 + $0x128] sm:$0xff]
    %v130 = vld [vmem:[#allocation3 + $0x130] sm:$0xff]
    %v131 = vld [vmem:[#allocation3 + $0x138] sm:$0xff]
    %v132 = vld [vmem:[#allocation3 + $0x140] sm:$0xff]
    %v133 = vld [vmem:[#allocation3 + $0x148] sm:$0xff]
    %v134 = vld [vmem:[#allocation3 + $0x150] sm:$0xff]
    %v135 = vld [vmem:[#allocation3 + $0x158] sm:$0xff]
    %v136 = vld [vmem:[#allocation3 + $0x160] sm:$0xff]
    %v137 = vld [vmem:[#allocation3 + $0x168] sm:$0xff]
    %v138 = vld [vmem:[#allocation3 + $0x170] sm:$0xff]
    %v139 = vld [vmem:[#allocation3 + $0x178] sm:$0xff]
    %v140 = vld [vmem:[#allocation3 + $0x180] sm:$0xff]
    %v141 = vld [vmem:[#allocation3 + $0x188] sm:$0xff]
    %v142 = vld [vmem:[#allocation3 + $0x190] sm:$0xff]
    %v143 = vld [vmem:[#allocation3 + $0x198] sm:$0xff]
    %v144 = vld [vmem:[#allocation3 + $0x1a0] sm:$0xff]
    %v145 = vld [vmem:[#allocation3 + $0x1a8] sm:$0xff]
    %v146 = vld [vmem:[#allocation3 + $0x1b0] sm:$0xff]
    %v147 = vld [vmem:[#allocation3 + $0x1b8] sm:$0xff]
    %v148 = vld [vmem:[#allocation3 + $0x1c0] sm:$0xff]
    %v149 = vld [vmem:[#allocation3 + $0x1c8] sm:$0xff]
    %v150 = vld [vmem:[#allocation3 + $0x1d0] sm:$0xff]
    %v151 = vld [vmem:[#allocation3 + $0x1d8] sm:$0xff]
    %v152 = vld [vmem:[#allocation3 + $0x1e0] sm:$0xff]
    %v153 = vld [vmem:[#allocation3 + $0x1e8] sm:$0xff]
    %v154 = vld [vmem:[#allocation3 + $0x1f0] sm:$0xff]
    %v155 = vld [vmem:[#allocation3 + $0x1f8] sm:$0xff]
    %v156 = vld [vmem:[#allocation6] sm:$0xff]
    %v157 = vld [vmem:[#allocation6 + $0x8] sm:$0xff]
    %v158 = vld [vmem:[#allocation6 + $0x10] sm:$0xff]
    %v159 = vld [vmem:[#allocation6 + $0x18] sm:$0xff]
    %v160 = vld [vmem:[#allocation6 + $0x20] sm:$0xff]
    %v161 = vld [vmem:[#allocation6 + $0x28] sm:$0xff]
    %v162 = vld [vmem:[#allocation6 + $0x30] sm:$0xff]
    %v163 = vld [vmem:[#allocation6 + $0x38] sm:$0xff]
    %v164 = vld [vmem:[#allocation6 + $0x40] sm:$0xff]
    %v165 = vld [vmem:[#allocation6 + $0x48] sm:$0xff]
    %v166 = vld [vmem:[#allocation6 + $0x50] sm:$0xff]
    %v167 = vld [vmem:[#allocation6 + $0x58] sm:$0xff]
    %v168 = vld [vmem:[#allocation6 + $0x60] sm:$0xff]
    %v169 = vld [vmem:[#allocation6 + $0x68] sm:$0xff]
    %v170 = vld [vmem:[#allocation6 + $0x70] sm:$0xff]
    %v171 = vld [vmem:[#allocation6 + $0x78] sm:$0xff]
    %v172 = vld [vmem:[#allocation6 + $0x80] sm:$0xff]
    %v173 = vld [vmem:[#allocation6 + $0x88] sm:$0xff]
    %v174 = vld [vmem:[#allocation6 + $0x90] sm:$0xff]
    %v175 = vld [vmem:[#allocation6 + $0x98] sm:$0xff]
    %v176 = vld [vmem:[#allocation6 + $0xa0] sm:$0xff]
    %v177 = vld [vmem:[#allocation6 + $0xa8] sm:$0xff]
    %v178 = vld [vmem:[#allocation6 + $0xb0] sm:$0xff]
    %v179 = vld [vmem:[#allocation6 + $0xb8] sm:$0xff]
    %v180 = vld [vmem:[#allocation6 + $0xc0] sm:$0xff]
    %v181 = vld [vmem:[#allocation6 + $0xc8] sm:$0xff]
    %v182 = vld [vmem:[#allocation6 + $0xd0] sm:$0xff]
    %v183 = vld [vmem:[#allocation6 + $0xd8] sm:$0xff]
    %v184 = vld [vmem:[#allocation6 + $0xe0] sm:$0xff]
    %v185 = vld [vmem:[#allocation6 + $0xe8] sm:$0xff]
    %v186 = vld [vmem:[#allocation6 + $0xf0] sm:$0xff]
    %v187 = vld [vmem:[#allocation6 + $0xf8] sm:$0xff]
    %v188 = vld [vmem:[#allocation6 + $0x100] sm:$0xff]
    %v189 = vld [vmem:[#allocation6 + $0x108] sm:$0xff]
    %v190 = vld [vmem:[#allocation6 + $0x110] sm:$0xff]
    %v191 = vld [vmem:[#allocation6 + $0x118] sm:$0xff]
    %v192 = vld [vmem:[#allocation6 + $0x120] sm:$0xff]
    %v193 = vld [vmem:[#allocation6 + $0x128] sm:$0xff]
    %v194 = vld [vmem:[#allocation6 + $0x130] sm:$0xff]
    %v195 = vld [vmem:[#allocation6 + $0x138] sm:$0xff]
    %v196 = vld [vmem:[#allocation6 + $0x140] sm:$0xff]
    %v197 = vld [vmem:[#allocation6 + $0x148] sm:$0xff]
    %v198 = vld [vmem:[#allocation6 + $0x150] sm:$0xff]
    %v199 = vld [vmem:[#allocation6 + $0x158] sm:$0xff]
    %v200 = vld [vmem:[#allocation6 + $0x160] sm:$0xff]
    %v201 = vld [vmem:[#allocation6 + $0x168] sm:$0xff]
    %v202 = vld [vmem:[#allocation6 + $0x170] sm:$0xff]
    %v203 = vld [vmem:[#allocation6 + $0x178] sm:$0xff]
    %v204 = vld [vmem:[#allocation6 + $0x180] sm:$0xff]
    %v205 = vld [vmem:[#allocation6 + $0x188] sm:$0xff]
    %v206 = vld [vmem:[#allocation6 + $0x190] sm:$0xff]
    %v207 = vld [vmem:[#allocation6 + $0x198] sm:$0xff]
    %v208 = vld [vmem:[#allocation6 + $0x1a0] sm:$0xff]
    %v209 = vld [vmem:[#allocation6 + $0x1a8] sm:$0xff]
    %v210 = vld [vmem:[#allocation6 + $0x1b0] sm:$0xff]
    %v211 = vld [vmem:[#allocation6 + $0x1b8] sm:$0xff]
    %v212 = vld [vmem:[#allocation6 + $0x1c0] sm:$0xff]
    %v213 = vld [vmem:[#allocation6 + $0x1c8] sm:$0xff]
    %v214 = vld [vmem:[#allocation6 + $0x1d0] sm:$0xff]
    %v215 = vld [vmem:[#allocation6 + $0x1d8] sm:$0xff]
    %v216 = vld [vmem:[#allocation6 + $0x1e0] sm:$0xff]
    %v217 = vld [vmem:[#allocation6 + $0x1e8] sm:$0xff]
    %v218 = vld [vmem:[#allocation6 + $0x1f0] sm:$0xff]
    %v219 = vld [vmem:[#allocation6 + $0x1f8] sm:$0xff]
    %v220 = vld [vmem:[#allocation6 + $0x200] sm:$0xff]
    %v221 = vld [vmem:[#allocation6 + $0x208] sm:$0xff]
    %v222 = vld [vmem:[#allocation6 + $0x210] sm:$0xff]
    %v223 = vld [vmem:[#allocation6 + $0x218] sm:$0xff]
    %v224 = vld [vmem:[#allocation6 + $0x220] sm:$0xff]
    %v225 = vld [vmem:[#allocation6 + $0x228] sm:$0xff]
    %v226 = vld [vmem:[#allocation6 + $0x230] sm:$0xff]
    %v227 = vld [vmem:[#allocation6 + $0x238] sm:$0xff]
    %v228 = vld [vmem:[#allocation6 + $0x240] sm:$0xff]
    %v229 = vld [vmem:[#allocation6 + $0x248] sm:$0xff]
    %v230 = vld [vmem:[#allocation6 + $0x250] sm:$0xff]
    %v231 = vld [vmem:[#allocation6 + $0x258] sm:$0xff]
    %v232 = vld [vmem:[#allocation6 + $0x260] sm:$0xff]
    %v233 = vld [vmem:[#allocation6 + $0x268] sm:$0xff]
    %v234 = vld [vmem:[#allocation6 + $0x270] sm:$0xff]
    %v235 = vld [vmem:[#allocation6 + $0x278] sm:$0xff]
    %v236 = vld [vmem:[#allocation6 + $0x280] sm:$0xff]
    %v237 = vld [vmem:[#allocation6 + $0x288] sm:$0xff]
    %v238 = vld [vmem:[#allocation6 + $0x290] sm:$0xff]
    %v239 = vld [vmem:[#allocation6 + $0x298] sm:$0xff]
    %v240 = vld [vmem:[#allocation6 + $0x2a0] sm:$0xff]
    %v241 = vld [vmem:[#allocation6 + $0x2a8] sm:$0xff]
    %v242 = vld [vmem:[#allocation6 + $0x2b0] sm:$0xff]
    %v243 = vld [vmem:[#allocation6 + $0x2b8] sm:$0xff]
    %v244 = vld [vmem:[#allocation6 + $0x2c0] sm:$0xff]
    %v245 = vld [vmem:[#allocation6 + $0x2c8] sm:$0xff]
    %v246 = vld [vmem:[#allocation6 + $0x2d0] sm:$0xff]
    %v247 = vld [vmem:[#allocation6 + $0x2d8] sm:$0xff]
    %v248 = vld [vmem:[#allocation6 + $0x2e0] sm:$0xff]
    %v249 = vld [vmem:[#allocation6 + $0x2e8] sm:$0xff]
    %v250 = vld [vmem:[#allocation6 + $0x2f0] sm:$0xff]
    %v251 = vld [vmem:[#allocation6 + $0x2f8] sm:$0xff]
    %v252 = vld [vmem:[#allocation6 + $0x300] sm:$0xff]
    %v253 = vld [vmem:[#allocation6 + $0x308] sm:$0xff]
    %v254 = vld [vmem:[#allocation6 + $0x310] sm:$0xff]
    %v255 = vld [vmem:[#allocation6 + $0x318] sm:$0xff]
    %v256 = vld [vmem:[#allocation6 + $0x320] sm:$0xff]
    %v257 = vld [vmem:[#allocation6 + $0x328] sm:$0xff]
    %v258 = vld [vmem:[#allocation6 + $0x330] sm:$0xff]
    %v259 = vld [vmem:[#allocation6 + $0x338] sm:$0xff]
    %v260 = vld [vmem:[#allocation6 + $0x340] sm:$0xff]
    %v261 = vld [vmem:[#allocation6 + $0x348] sm:$0xff]
    %v262 = vld [vmem:[#allocation6 + $0x350] sm:$0xff]
    %v263 = vld [vmem:[#allocation6 + $0x358] sm:$0xff]
    %v264 = vld [vmem:[#allocation6 + $0x360] sm:$0xff]
    %v265 = vld [vmem:[#allocation6 + $0x368] sm:$0xff]
    %v266 = vld [vmem:[#allocation6 + $0x370] sm:$0xff]
    %v267 = vld [vmem:[#allocation6 + $0x378] sm:$0xff]
    %v268 = vld [vmem:[#allocation6 + $0x380] sm:$0xff]
    %v269 = vld [vmem:[#allocation6 + $0x388] sm:$0xff]
    %v270 = vld [vmem:[#allocation6 + $0x390] sm:$0xff]
    %v271 = vld [vmem:[#allocation6 + $0x398] sm:$0xff]
    %v272 = vld [vmem:[#allocation6 + $0x3a0] sm:$0xff]
    %v273 = vld [vmem:[#allocation6 + $0x3a8] sm:$0xff]
    %v274 = vld [vmem:[#allocation6 + $0x3b0] sm:$0xff]
    %v275 = vld [vmem:[#allocation6 + $0x3b8] sm:$0xff]
    %v276 = vld [vmem:[#allocation6 + $0x3c0] sm:$0xff]
    %v277 = vld [vmem:[#allocation6 + $0x3c8] sm:$0xff]
    %v278 = vld [vmem:[#allocation6 + $0x3d0] sm:$0xff]
    %v279 = vld [vmem:[#allocation6 + $0x3d8] sm:$0xff]
    %v280 = vld [vmem:[#allocation6 + $0x3e0] sm:$0xff]
    %v281 = vld [vmem:[#allocation6 + $0x3e8] sm:$0xff]
    %v282 = vld [vmem:[#allocation6 + $0x3f0] sm:$0xff]
    %v283 = vld [vmem:[#allocation6 + $0x3f8] sm:$0xff]
    %v284 = vld [vmem:[#allocation6 + $0x400] sm:$0xff]
    %v285 = vld [vmem:[#allocation6 + $0x408] sm:$0xff]
    %v286 = vld [vmem:[#allocation6 + $0x410] sm:$0xff]
    %v287 = vld [vmem:[#allocation6 + $0x418] sm:$0xff]
    %v288 = vld [vmem:[#allocation6 + $0x420] sm:$0xff]
    %v289 = vld [vmem:[#allocation6 + $0x428] sm:$0xff]
    %v290 = vld [vmem:[#allocation6 + $0x430] sm:$0xff]
    %v291 = vld [vmem:[#allocation6 + $0x438] sm:$0xff]
    %v292 = vld [vmem:[#allocation6 + $0x440] sm:$0xff]
    %v293 = vld [vmem:[#allocation6 + $0x448] sm:$0xff]
    %v294 = vld [vmem:[#allocation6 + $0x450] sm:$0xff]
    %v295 = vld [vmem:[#allocation6 + $0x458] sm:$0xff]
    %v296 = vld [vmem:[#allocation6 + $0x460] sm:$0xff]
    %v297 = vld [vmem:[#allocation6 + $0x468] sm:$0xff]
    %v298 = vld [vmem:[#allocation6 + $0x470] sm:$0xff]
    %v299 = vld [vmem:[#allocation6 + $0x478] sm:$0xff]
    %v300 = vld [vmem:[#allocation6 + $0x480] sm:$0xff]
    %v301 = vld [vmem:[#allocation6 + $0x488] sm:$0xff]
    %v302 = vld [vmem:[#allocation6 + $0x490] sm:$0xff]
    %v303 = vld [vmem:[#allocation6 + $0x498] sm:$0xff]
    %v304 = vld [vmem:[#allocation6 + $0x4a0] sm:$0xff]
    %v305 = vld [vmem:[#allocation6 + $0x4a8] sm:$0xff]
    %v306 = vld [vmem:[#allocation6 + $0x4b0] sm:$0xff]
    %v307 = vld [vmem:[#allocation6 + $0x4b8] sm:$0xff]
    %v308 = vld [vmem:[#allocation6 + $0x4c0] sm:$0xff]
    %v309 = vld [vmem:[#allocation6 + $0x4c8] sm:$0xff]
    %v310 = vld [vmem:[#allocation6 + $0x4d0] sm:$0xff]
    %v311 = vld [vmem:[#allocation6 + $0x4d8] sm:$0xff]
    %v312 = vld [vmem:[#allocation6 + $0x4e0] sm:$0xff]
    %v313 = vld [vmem:[#allocation6 + $0x4e8] sm:$0xff]
    %v314 = vld [vmem:[#allocation6 + $0x4f0] sm:$0xff]
    %v315 = vld [vmem:[#allocation6 + $0x4f8] sm:$0xff]
    %v316 = vld [vmem:[#allocation6 + $0x500] sm:$0xff]
    %v317 = vld [vmem:[#allocation6 + $0x508] sm:$0xff]
    %v318 = vld [vmem:[#allocation6 + $0x510] sm:$0xff]
    %v319 = vld [vmem:[#allocation6 + $0x518] sm:$0xff]
    %v320 = vld [vmem:[#allocation6 + $0x520] sm:$0xff]
    %v321 = vld [vmem:[#allocation6 + $0x528] sm:$0xff]
    %v322 = vld [vmem:[#allocation6 + $0x530] sm:$0xff]
    %v323 = vld [vmem:[#allocation6 + $0x538] sm:$0xff]
    %v324 = vld [vmem:[#allocation6 + $0x540] sm:$0xff]
    %v325 = vld [vmem:[#allocation6 + $0x548] sm:$0xff]
    %v326 = vld [vmem:[#allocation6 + $0x550] sm:$0xff]
    %v327 = vld [vmem:[#allocation6 + $0x558] sm:$0xff]
    %v328 = vld [vmem:[#allocation6 + $0x560] sm:$0xff]
    %v329 = vld [vmem:[#allocation6 + $0x568] sm:$0xff]
    %v330 = vld [vmem:[#allocation6 + $0x570] sm:$0xff]
    %v331 = vld [vmem:[#allocation6 + $0x578] sm:$0xff]
    %v332 = vld [vmem:[#allocation6 + $0x580] sm:$0xff]
    %v333 = vld [vmem:[#allocation6 + $0x588] sm:$0xff]
    %v334 = vld [vmem:[#allocation6 + $0x590] sm:$0xff]
    %v335 = vld [vmem:[#allocation6 + $0x598] sm:$0xff]
    %v336 = vld [vmem:[#allocation6 + $0x5a0] sm:$0xff]
    %v337 = vld [vmem:[#allocation6 + $0x5a8] sm:$0xff]
    %v338 = vld [vmem:[#allocation6 + $0x5b0] sm:$0xff]
    %v339 = vld [vmem:[#allocation6 + $0x5b8] sm:$0xff]
    %v340 = vld [vmem:[#allocation6 + $0x5c0] sm:$0xff]
    %v341 = vld [vmem:[#allocation6 + $0x5c8] sm:$0xff]
    %v342 = vld [vmem:[#allocation6 + $0x5d0] sm:$0xff]
    %v343 = vld [vmem:[#allocation6 + $0x5d8] sm:$0xff]
    %v344 = vld [vmem:[#allocation6 + $0x5e0] sm:$0xff]
    %v345 = vld [vmem:[#allocation6 + $0x5e8] sm:$0xff]
    %v346 = vld [vmem:[#allocation6 + $0x5f0] sm:$0xff]
    %v347 = vld [vmem:[#allocation6 + $0x5f8] sm:$0xff]
    %v348 = vld [vmem:[#allocation6 + $0x600] sm:$0xff]
    %v349 = vld [vmem:[#allocation6 + $0x608] sm:$0xff]
    %v350 = vld [vmem:[#allocation6 + $0x610] sm:$0xff]
    %v351 = vld [vmem:[#allocation6 + $0x618] sm:$0xff]
    %v352 = vld [vmem:[#allocation6 + $0x620] sm:$0xff]
    %v353 = vld [vmem:[#allocation6 + $0x628] sm:$0xff]
    %v354 = vld [vmem:[#allocation6 + $0x630] sm:$0xff]
    %v355 = vld [vmem:[#allocation6 + $0x638] sm:$0xff]
    %v356 = vld [vmem:[#allocation6 + $0x640] sm:$0xff]
    %v357 = vld [vmem:[#allocation6 + $0x648] sm:$0xff]
    %v358 = vld [vmem:[#allocation6 + $0x650] sm:$0xff]
    %v359 = vld [vmem:[#allocation6 + $0x658] sm:$0xff]
    %v360 = vld [vmem:[#allocation6 + $0x660] sm:$0xff]
    %v361 = vld [vmem:[#allocation6 + $0x668] sm:$0xff]
    %v362 = vld [vmem:[#allocation6 + $0x670] sm:$0xff]
    %v363 = vld [vmem:[#allocation6 + $0x678] sm:$0xff]
    %v364 = vld [vmem:[#allocation6 + $0x680] sm:$0xff]
    %v365 = vld [vmem:[#allocation6 + $0x688] sm:$0xff]
    %v366 = vld [vmem:[#allocation6 + $0x690] sm:$0xff]
    %v367 = vld [vmem:[#allocation6 + $0x698] sm:$0xff]
    %v368 = vld [vmem:[#allocation6 + $0x6a0] sm:$0xff]
    %v369 = vld [vmem:[#allocation6 + $0x6a8] sm:$0xff]
    %v370 = vld [vmem:[#allocation6 + $0x6b0] sm:$0xff]
    %v371 = vld [vmem:[#allocation6 + $0x6b8] sm:$0xff]
    %v372 = vld [vmem:[#allocation6 + $0x6c0] sm:$0xff]
    %v373 = vld [vmem:[#allocation6 + $0x6c8] sm:$0xff]
    %v374 = vld [vmem:[#allocation6 + $0x6d0] sm:$0xff]
    %v375 = vld [vmem:[#allocation6 + $0x6d8] sm:$0xff]
    %v376 = vld [vmem:[#allocation6 + $0x6e0] sm:$0xff]
    %v377 = vld [vmem:[#allocation6 + $0x6e8] sm:$0xff]
    %v378 = vld [vmem:[#allocation6 + $0x6f0] sm:$0xff]
    %v379 = vld [vmem:[#allocation6 + $0x6f8] sm:$0xff]
    %v380 = vld [vmem:[#allocation6 + $0x700] sm:$0xff]
    %v381 = vld [vmem:[#allocation6 + $0x708] sm:$0xff]
    %v382 = vld [vmem:[#allocation6 + $0x710] sm:$0xff]
    %v383 = vld [vmem:[#allocation6 + $0x718] sm:$0xff]
    %v384 = vld [vmem:[#allocation6 + $0x720] sm:$0xff]
    %v385 = vld [vmem:[#allocation6 + $0x728] sm:$0xff]
    %v386 = vld [vmem:[#allocation6 + $0x730] sm:$0xff]
    %v387 = vld [vmem:[#allocation6 + $0x738] sm:$0xff]
    %v388 = vld [vmem:[#allocation6 + $0x740] sm:$0xff]
    %v389 = vld [vmem:[#allocation6 + $0x748] sm:$0xff]
    %v390 = vld [vmem:[#allocation6 + $0x750] sm:$0xff]
    %v391 = vld [vmem:[#allocation6 + $0x758] sm:$0xff]
    %v392 = vld [vmem:[#allocation6 + $0x760] sm:$0xff]
    %v393 = vld [vmem:[#allocation6 + $0x768] sm:$0xff]
    %v394 = vld [vmem:[#allocation6 + $0x770] sm:$0xff]
    %v395 = vld [vmem:[#allocation6 + $0x778] sm:$0xff]
    %v396 = vld [vmem:[#allocation6 + $0x780] sm:$0xff]
    %v397 = vld [vmem:[#allocation6 + $0x788] sm:$0xff]
    %v398 = vld [vmem:[#allocation6 + $0x790] sm:$0xff]
    %v399 = vld [vmem:[#allocation6 + $0x798] sm:$0xff]
    %v400 = vld [vmem:[#allocation6 + $0x7a0] sm:$0xff]
    %v401 = vld [vmem:[#allocation6 + $0x7a8] sm:$0xff]
    %v402 = vld [vmem:[#allocation6 + $0x7b0] sm:$0xff]
    %v403 = vld [vmem:[#allocation6 + $0x7b8] sm:$0xff]
    %v404 = vld [vmem:[#allocation6 + $0x7c0] sm:$0xff]
    %v405 = vld [vmem:[#allocation6 + $0x7c8] sm:$0xff]
    %v406 = vld [vmem:[#allocation6 + $0x7d0] sm:$0xff]
    %v407 = vld [vmem:[#allocation6 + $0x7d8] sm:$0xff]
    %v408 = vld [vmem:[#allocation6 + $0x7e0] sm:$0xff]
    %v409 = vld [vmem:[#allocation6 + $0x7e8] sm:$0xff]
    %v410 = vld [vmem:[#allocation6 + $0x7f0] sm:$0xff]
    %v411 = vld [vmem:[#allocation6 + $0x7f8] sm:$0xff]
    %v412 = vld [vmem:[#allocation8] sm:$0xf]
    %v414 = vlaneseq
    %v415 = vshrl.u32 %v414, 7
    %v416 = vsub.s32 0, %v415
    %v417 = vrot.slane %v412, %v416
    %v418 = vlaneseq
    %v419 = vshrl.u32 %v418, 7
    %v420 = vsub.s32 1, %v419
    %v421 = vrot.slane %v412, %v420
    %v422 = vlaneseq
    %v423 = vshrl.u32 %v422, 7
    %v424 = vsub.s32 2, %v423
    %v425 = vrot.slane %v412, %v424
    %v426 = vlaneseq
    %v427 = vshrl.u32 %v426, 7
    %v428 = vsub.s32 3, %v427
    %v429 = vrot.slane %v412, %v428
    %v498 = vunpack.c.l.b16 %v92
    %v499 = vunpack.c.h.b16 %v92
    %v500 = vunpack.c.l.b16 %v93
    %v501 = vunpack.c.h.b16 %v93
    %v502 = vunpack.c.l.b16 %v94
    %v503 = vunpack.c.h.b16 %v94
    %v504 = vunpack.c.l.b16 %v95
    %v505 = vunpack.c.h.b16 %v95
    %v506 = vunpack.c.l.b16 %v96
    %v507 = vunpack.c.h.b16 %v96
    %v508 = vunpack.c.l.b16 %v97
    %v509 = vunpack.c.h.b16 %v97
    %v510 = vunpack.c.l.b16 %v98
    %v511 = vunpack.c.h.b16 %v98
    %v512 = vunpack.c.l.b16 %v99
    %v513 = vunpack.c.h.b16 %v99
    %v514 = vunpack.c.l.b16 %v100
    %v515 = vunpack.c.h.b16 %v100
    %v516 = vunpack.c.l.b16 %v101
    %v517 = vunpack.c.h.b16 %v101
    %v518 = vunpack.c.l.b16 %v102
    %v519 = vunpack.c.h.b16 %v102
    %v520 = vunpack.c.l.b16 %v103
    %v521 = vunpack.c.h.b16 %v103
    %v522 = vunpack.c.l.b16 %v104
    %v523 = vunpack.c.h.b16 %v104
    %v524 = vunpack.c.l.b16 %v105
    %v525 = vunpack.c.h.b16 %v105
    %v526 = vunpack.c.l.b16 %v106
    %v527 = vunpack.c.h.b16 %v106
    %v528 = vunpack.c.l.b16 %v107
    %v529 = vunpack.c.h.b16 %v107
    %v530 = vunpack.c.l.b16 %v108
    %v531 = vunpack.c.h.b16 %v108
    %v532 = vunpack.c.l.b16 %v109
    %v533 = vunpack.c.h.b16 %v109
    %v534 = vunpack.c.l.b16 %v110
    %v535 = vunpack.c.h.b16 %v110
    %v536 = vunpack.c.l.b16 %v111
    %v537 = vunpack.c.h.b16 %v111
    %v538 = vunpack.c.l.b16 %v112
    %v539 = vunpack.c.h.b16 %v112
    %v540 = vunpack.c.l.b16 %v113
    %v541 = vunpack.c.h.b16 %v113
    %v542 = vunpack.c.l.b16 %v114
    %v543 = vunpack.c.h.b16 %v114
    %v544 = vunpack.c.l.b16 %v115
    %v545 = vunpack.c.h.b16 %v115
    %v546 = vunpack.c.l.b16 %v116
    %v547 = vunpack.c.h.b16 %v116
    %v548 = vunpack.c.l.b16 %v117
    %v549 = vunpack.c.h.b16 %v117
    %v550 = vunpack.c.l.b16 %v118
    %v551 = vunpack.c.h.b16 %v118
    %v552 = vunpack.c.l.b16 %v119
    %v553 = vunpack.c.h.b16 %v119
    %v554 = vunpack.c.l.b16 %v120
    %v555 = vunpack.c.h.b16 %v120
    %v556 = vunpack.c.l.b16 %v121
    %v557 = vunpack.c.h.b16 %v121
    %v558 = vunpack.c.l.b16 %v122
    %v559 = vunpack.c.h.b16 %v122
    %v560 = vunpack.c.l.b16 %v123
    %v561 = vunpack.c.h.b16 %v123
    %v562 = vunpack.c.l.b16 %v124
    %v563 = vunpack.c.h.b16 %v124
    %v564 = vunpack.c.l.b16 %v125
    %v565 = vunpack.c.h.b16 %v125
    %v566 = vunpack.c.l.b16 %v126
    %v567 = vunpack.c.h.b16 %v126
    %v568 = vunpack.c.l.b16 %v127
    %v569 = vunpack.c.h.b16 %v127
    %v570 = vunpack.c.l.b16 %v128
    %v571 = vunpack.c.h.b16 %v128
    %v572 = vunpack.c.l.b16 %v129
    %v573 = vunpack.c.h.b16 %v129
    %v574 = vunpack.c.l.b16 %v130
    %v575 = vunpack.c.h.b16 %v130
    %v576 = vunpack.c.l.b16 %v131
    %v577 = vunpack.c.h.b16 %v131
    %v578 = vunpack.c.l.b16 %v132
    %v579 = vunpack.c.h.b16 %v132
    %v580 = vunpack.c.l.b16 %v133
    %v581 = vunpack.c.h.b16 %v133
    %v582 = vunpack.c.l.b16 %v134
    %v583 = vunpack.c.h.b16 %v134
    %v584 = vunpack.c.l.b16 %v135
    %v585 = vunpack.c.h.b16 %v135
    %v586 = vunpack.c.l.b16 %v136
    %v587 = vunpack.c.h.b16 %v136
    %v588 = vunpack.c.l.b16 %v137
    %v589 = vunpack.c.h.b16 %v137
    %v590 = vunpack.c.l.b16 %v138
    %v591 = vunpack.c.h.b16 %v138
    %v592 = vunpack.c.l.b16 %v139
    %v593 = vunpack.c.h.b16 %v139
    %v594 = vunpack.c.l.b16 %v140
    %v595 = vunpack.c.h.b16 %v140
    %v596 = vunpack.c.l.b16 %v141
    %v597 = vunpack.c.h.b16 %v141
    %v598 = vunpack.c.l.b16 %v142
    %v599 = vunpack.c.h.b16 %v142
    %v600 = vunpack.c.l.b16 %v143
    %v601 = vunpack.c.h.b16 %v143
    %v602 = vunpack.c.l.b16 %v144
    %v603 = vunpack.c.h.b16 %v144
    %v604 = vunpack.c.l.b16 %v145
    %v605 = vunpack.c.h.b16 %v145
    %v606 = vunpack.c.l.b16 %v146
    %v607 = vunpack.c.h.b16 %v146
    %v608 = vunpack.c.l.b16 %v147
    %v609 = vunpack.c.h.b16 %v147
    %v610 = vunpack.c.l.b16 %v148
    %v611 = vunpack.c.h.b16 %v148
    %v612 = vunpack.c.l.b16 %v149
    %v613 = vunpack.c.h.b16 %v149
    %v614 = vunpack.c.l.b16 %v150
    %v615 = vunpack.c.h.b16 %v150
    %v616 = vunpack.c.l.b16 %v151
    %v617 = vunpack.c.h.b16 %v151
    %v618 = vunpack.c.l.b16 %v152
    %v619 = vunpack.c.h.b16 %v152
    %v620 = vunpack.c.l.b16 %v153
    %v621 = vunpack.c.h.b16 %v153
    %v622 = vunpack.c.l.b16 %v154
    %v623 = vunpack.c.h.b16 %v154
    %v624 = vunpack.c.l.b16 %v155
    %v625 = vunpack.c.h.b16 %v155
    %v626 = vpack.c.b16 %v506, %v498
    %v627 = vpack.c.b16 %v507, %v499
    %v628 = vpack.c.b16 %v508, %v500
    %v629 = vpack.c.b16 %v509, %v501
    %v630 = vpack.c.b16 %v510, %v502
    %v631 = vpack.c.b16 %v511, %v503
    %v632 = vpack.c.b16 %v512, %v504
    %v633 = vpack.c.b16 %v513, %v505
    %v634 = vpack.c.b16 %v522, %v514
    %v635 = vpack.c.b16 %v523, %v515
    %v636 = vpack.c.b16 %v524, %v516
    %v637 = vpack.c.b16 %v525, %v517
    %v638 = vpack.c.b16 %v526, %v518
    %v639 = vpack.c.b16 %v527, %v519
    %v640 = vpack.c.b16 %v528, %v520
    %v641 = vpack.c.b16 %v529, %v521
    %v642 = vpack.c.b16 %v538, %v530
    %v643 = vpack.c.b16 %v539, %v531
    %v644 = vpack.c.b16 %v540, %v532
    %v645 = vpack.c.b16 %v541, %v533
    %v646 = vpack.c.b16 %v542, %v534
    %v647 = vpack.c.b16 %v543, %v535
    %v648 = vpack.c.b16 %v544, %v536
    %v649 = vpack.c.b16 %v545, %v537
    %v650 = vpack.c.b16 %v554, %v546
    %v651 = vpack.c.b16 %v555, %v547
    %v652 = vpack.c.b16 %v556, %v548
    %v653 = vpack.c.b16 %v557, %v549
    %v654 = vpack.c.b16 %v558, %v550
    %v655 = vpack.c.b16 %v559, %v551
    %v656 = vpack.c.b16 %v560, %v552
    %v657 = vpack.c.b16 %v561, %v553
    %v658 = vpack.c.b16 %v570, %v562
    %v659 = vpack.c.b16 %v571, %v563
    %v660 = vpack.c.b16 %v572, %v564
    %v661 = vpack.c.b16 %v573, %v565
    %v662 = vpack.c.b16 %v574, %v566
    %v663 = vpack.c.b16 %v575, %v567
    %v664 = vpack.c.b16 %v576, %v568
    %v665 = vpack.c.b16 %v577, %v569
    %v666 = vpack.c.b16 %v586, %v578
    %v667 = vpack.c.b16 %v587, %v579
    %v668 = vpack.c.b16 %v588, %v580
    %v669 = vpack.c.b16 %v589, %v581
    %v670 = vpack.c.b16 %v590, %v582
    %v671 = vpack.c.b16 %v591, %v583
    %v672 = vpack.c.b16 %v592, %v584
    %v673 = vpack.c.b16 %v593, %v585
    %v674 = vpack.c.b16 %v602, %v594
    %v675 = vpack.c.b16 %v603, %v595
    %v676 = vpack.c.b16 %v604, %v596
    %v677 = vpack.c.b16 %v605, %v597
    %v678 = vpack.c.b16 %v606, %v598
    %v679 = vpack.c.b16 %v607, %v599
    %v680 = vpack.c.b16 %v608, %v600
    %v681 = vpack.c.b16 %v609, %v601
    %v682 = vpack.c.b16 %v618, %v610
    %v683 = vpack.c.b16 %v619, %v611
    %v684 = vpack.c.b16 %v620, %v612
    %v685 = vpack.c.b16 %v621, %v613
    %v686 = vpack.c.b16 %v622, %v614
    %v687 = vpack.c.b16 %v623, %v615
    %v688 = vpack.c.b16 %v624, %v616
    %v689 = vpack.c.b16 %v625, %v617
    %v1010 = vunpack.c.l.b16 %v156
    %v1011 = vunpack.c.h.b16 %v156
    %v1012 = vunpack.c.l.b16 %v157
    %v1013 = vunpack.c.h.b16 %v157
    %v1014 = vunpack.c.l.b16 %v158
    %v1015 = vunpack.c.h.b16 %v158
    %v1016 = vunpack.c.l.b16 %v159
    %v1017 = vunpack.c.h.b16 %v159
    %v1018 = vunpack.c.l.b16 %v160
    %v1019 = vunpack.c.h.b16 %v160
    %v1020 = vunpack.c.l.b16 %v161
    %v1021 = vunpack.c.h.b16 %v161
    %v1022 = vunpack.c.l.b16 %v162
    %v1023 = vunpack.c.h.b16 %v162
    %v1024 = vunpack.c.l.b16 %v163
    %v1025 = vunpack.c.h.b16 %v163
    %v1026 = vunpack.c.l.b16 %v164
    %v1027 = vunpack.c.h.b16 %v164
    %v1028 = vunpack.c.l.b16 %v165
    %v1029 = vunpack.c.h.b16 %v165
    %v1030 = vunpack.c.l.b16 %v166
    %v1031 = vunpack.c.h.b16 %v166
    %v1032 = vunpack.c.l.b16 %v167
    %v1033 = vunpack.c.h.b16 %v167
    %v1034 = vunpack.c.l.b16 %v168
    %v1035 = vunpack.c.h.b16 %v168
    %v1036 = vunpack.c.l.b16 %v169
    %v1037 = vunpack.c.h.b16 %v169
    %v1038 = vunpack.c.l.b16 %v170
    %v1039 = vunpack.c.h.b16 %v170
    %v1040 = vunpack.c.l.b16 %v171
    %v1041 = vunpack.c.h.b16 %v171
    %v1042 = vunpack.c.l.b16 %v172
    %v1043 = vunpack.c.h.b16 %v172
    %v1044 = vunpack.c.l.b16 %v173
    %v1045 = vunpack.c.h.b16 %v173
    %v1046 = vunpack.c.l.b16 %v174
    %v1047 = vunpack.c.h.b16 %v174
    %v1048 = vunpack.c.l.b16 %v175
    %v1049 = vunpack.c.h.b16 %v175
    %v1050 = vunpack.c.l.b16 %v176
    %v1051 = vunpack.c.h.b16 %v176
    %v1052 = vunpack.c.l.b16 %v177
    %v1053 = vunpack.c.h.b16 %v177
    %v1054 = vunpack.c.l.b16 %v178
    %v1055 = vunpack.c.h.b16 %v178
    %v1056 = vunpack.c.l.b16 %v179
    %v1057 = vunpack.c.h.b16 %v179
    %v1058 = vunpack.c.l.b16 %v180
    %v1059 = vunpack.c.h.b16 %v180
    %v1060 = vunpack.c.l.b16 %v181
    %v1061 = vunpack.c.h.b16 %v181
    %v1062 = vunpack.c.l.b16 %v182
    %v1063 = vunpack.c.h.b16 %v182
    %v1064 = vunpack.c.l.b16 %v183
    %v1065 = vunpack.c.h.b16 %v183
    %v1066 = vunpack.c.l.b16 %v184
    %v1067 = vunpack.c.h.b16 %v184
    %v1068 = vunpack.c.l.b16 %v185
    %v1069 = vunpack.c.h.b16 %v185
    %v1070 = vunpack.c.l.b16 %v186
    %v1071 = vunpack.c.h.b16 %v186
    %v1072 = vunpack.c.l.b16 %v187
    %v1073 = vunpack.c.h.b16 %v187
    %v1074 = vunpack.c.l.b16 %v188
    %v1075 = vunpack.c.h.b16 %v188
    %v1076 = vunpack.c.l.b16 %v189
    %v1077 = vunpack.c.h.b16 %v189
    %v1078 = vunpack.c.l.b16 %v190
    %v1079 = vunpack.c.h.b16 %v190
    %v1080 = vunpack.c.l.b16 %v191
    %v1081 = vunpack.c.h.b16 %v191
    %v1082 = vunpack.c.l.b16 %v192
    %v1083 = vunpack.c.h.b16 %v192
    %v1084 = vunpack.c.l.b16 %v193
    %v1085 = vunpack.c.h.b16 %v193
    %v1086 = vunpack.c.l.b16 %v194
    %v1087 = vunpack.c.h.b16 %v194
    %v1088 = vunpack.c.l.b16 %v195
    %v1089 = vunpack.c.h.b16 %v195
    %v1090 = vunpack.c.l.b16 %v196
    %v1091 = vunpack.c.h.b16 %v196
    %v1092 = vunpack.c.l.b16 %v197
    %v1093 = vunpack.c.h.b16 %v197
    %v1094 = vunpack.c.l.b16 %v198
    %v1095 = vunpack.c.h.b16 %v198
    %v1096 = vunpack.c.l.b16 %v199
    %v1097 = vunpack.c.h.b16 %v199
    %v1098 = vunpack.c.l.b16 %v200
    %v1099 = vunpack.c.h.b16 %v200
    %v1100 = vunpack.c.l.b16 %v201
    %v1101 = vunpack.c.h.b16 %v201
    %v1102 = vunpack.c.l.b16 %v202
    %v1103 = vunpack.c.h.b16 %v202
    %v1104 = vunpack.c.l.b16 %v203
    %v1105 = vunpack.c.h.b16 %v203
    %v1106 = vunpack.c.l.b16 %v204
    %v1107 = vunpack.c.h.b16 %v204
    %v1108 = vunpack.c.l.b16 %v205
    %v1109 = vunpack.c.h.b16 %v205
    %v1110 = vunpack.c.l.b16 %v206
    %v1111 = vunpack.c.h.b16 %v206
    %v1112 = vunpack.c.l.b16 %v207
    %v1113 = vunpack.c.h.b16 %v207
    %v1114 = vunpack.c.l.b16 %v208
    %v1115 = vunpack.c.h.b16 %v208
    %v1116 = vunpack.c.l.b16 %v209
    %v1117 = vunpack.c.h.b16 %v209
    %v1118 = vunpack.c.l.b16 %v210
    %v1119 = vunpack.c.h.b16 %v210
    %v1120 = vunpack.c.l.b16 %v211
    %v1121 = vunpack.c.h.b16 %v211
    %v1122 = vunpack.c.l.b16 %v212
    %v1123 = vunpack.c.h.b16 %v212
    %v1124 = vunpack.c.l.b16 %v213
    %v1125 = vunpack.c.h.b16 %v213
    %v1126 = vunpack.c.l.b16 %v214
    %v1127 = vunpack.c.h.b16 %v214
    %v1128 = vunpack.c.l.b16 %v215
    %v1129 = vunpack.c.h.b16 %v215
    %v1130 = vunpack.c.l.b16 %v216
    %v1131 = vunpack.c.h.b16 %v216
    %v1132 = vunpack.c.l.b16 %v217
    %v1133 = vunpack.c.h.b16 %v217
    %v1134 = vunpack.c.l.b16 %v218
    %v1135 = vunpack.c.h.b16 %v218
    %v1136 = vunpack.c.l.b16 %v219
    %v1137 = vunpack.c.h.b16 %v219
    %v1138 = vunpack.c.l.b16 %v220
    %v1139 = vunpack.c.h.b16 %v220
    %v1140 = vunpack.c.l.b16 %v221
    %v1141 = vunpack.c.h.b16 %v221
    %v1142 = vunpack.c.l.b16 %v222
    %v1143 = vunpack.c.h.b16 %v222
    %v1144 = vunpack.c.l.b16 %v223
    %v1145 = vunpack.c.h.b16 %v223
    %v1146 = vunpack.c.l.b16 %v224
    %v1147 = vunpack.c.h.b16 %v224
    %v1148 = vunpack.c.l.b16 %v225
    %v1149 = vunpack.c.h.b16 %v225
    %v1150 = vunpack.c.l.b16 %v226
    %v1151 = vunpack.c.h.b16 %v226
    %v1152 = vunpack.c.l.b16 %v227
    %v1153 = vunpack.c.h.b16 %v227
    %v1154 = vunpack.c.l.b16 %v228
    %v1155 = vunpack.c.h.b16 %v228
    %v1156 = vunpack.c.l.b16 %v229
    %v1157 = vunpack.c.h.b16 %v229
    %v1158 = vunpack.c.l.b16 %v230
    %v1159 = vunpack.c.h.b16 %v230
    %v1160 = vunpack.c.l.b16 %v231
    %v1161 = vunpack.c.h.b16 %v231
    %v1162 = vunpack.c.l.b16 %v232
    %v1163 = vunpack.c.h.b16 %v232
    %v1164 = vunpack.c.l.b16 %v233
    %v1165 = vunpack.c.h.b16 %v233
    %v1166 = vunpack.c.l.b16 %v234
    %v1167 = vunpack.c.h.b16 %v234
    %v1168 = vunpack.c.l.b16 %v235
    %v1169 = vunpack.c.h.b16 %v235
    %v1170 = vunpack.c.l.b16 %v236
    %v1171 = vunpack.c.h.b16 %v236
    %v1172 = vunpack.c.l.b16 %v237
    %v1173 = vunpack.c.h.b16 %v237
    %v1174 = vunpack.c.l.b16 %v238
    %v1175 = vunpack.c.h.b16 %v238
    %v1176 = vunpack.c.l.b16 %v239
    %v1177 = vunpack.c.h.b16 %v239
    %v1178 = vunpack.c.l.b16 %v240
    %v1179 = vunpack.c.h.b16 %v240
    %v1180 = vunpack.c.l.b16 %v241
    %v1181 = vunpack.c.h.b16 %v241
    %v1182 = vunpack.c.l.b16 %v242
    %v1183 = vunpack.c.h.b16 %v242
    %v1184 = vunpack.c.l.b16 %v243
    %v1185 = vunpack.c.h.b16 %v243
    %v1186 = vunpack.c.l.b16 %v244
    %v1187 = vunpack.c.h.b16 %v244
    %v1188 = vunpack.c.l.b16 %v245
    %v1189 = vunpack.c.h.b16 %v245
    %v1190 = vunpack.c.l.b16 %v246
    %v1191 = vunpack.c.h.b16 %v246
    %v1192 = vunpack.c.l.b16 %v247
    %v1193 = vunpack.c.h.b16 %v247
    %v1194 = vunpack.c.l.b16 %v248
    %v1195 = vunpack.c.h.b16 %v248
    %v1196 = vunpack.c.l.b16 %v249
    %v1197 = vunpack.c.h.b16 %v249
    %v1198 = vunpack.c.l.b16 %v250
    %v1199 = vunpack.c.h.b16 %v250
    %v1200 = vunpack.c.l.b16 %v251
    %v1201 = vunpack.c.h.b16 %v251
    %v1202 = vunpack.c.l.b16 %v252
    %v1203 = vunpack.c.h.b16 %v252
    %v1204 = vunpack.c.l.b16 %v253
    %v1205 = vunpack.c.h.b16 %v253
    %v1206 = vunpack.c.l.b16 %v254
    %v1207 = vunpack.c.h.b16 %v254
    %v1208 = vunpack.c.l.b16 %v255
    %v1209 = vunpack.c.h.b16 %v255
    %v1210 = vunpack.c.l.b16 %v256
    %v1211 = vunpack.c.h.b16 %v256
    %v1212 = vunpack.c.l.b16 %v257
    %v1213 = vunpack.c.h.b16 %v257
    %v1214 = vunpack.c.l.b16 %v258
    %v1215 = vunpack.c.h.b16 %v258
    %v1216 = vunpack.c.l.b16 %v259
    %v1217 = vunpack.c.h.b16 %v259
    %v1218 = vunpack.c.l.b16 %v260
    %v1219 = vunpack.c.h.b16 %v260
    %v1220 = vunpack.c.l.b16 %v261
    %v1221 = vunpack.c.h.b16 %v261
    %v1222 = vunpack.c.l.b16 %v262
    %v1223 = vunpack.c.h.b16 %v262
    %v1224 = vunpack.c.l.b16 %v263
    %v1225 = vunpack.c.h.b16 %v263
    %v1226 = vunpack.c.l.b16 %v264
    %v1227 = vunpack.c.h.b16 %v264
    %v1228 = vunpack.c.l.b16 %v265
    %v1229 = vunpack.c.h.b16 %v265
    %v1230 = vunpack.c.l.b16 %v266
    %v1231 = vunpack.c.h.b16 %v266
    %v1232 = vunpack.c.l.b16 %v267
    %v1233 = vunpack.c.h.b16 %v267
    %v1234 = vunpack.c.l.b16 %v268
    %v1235 = vunpack.c.h.b16 %v268
    %v1236 = vunpack.c.l.b16 %v269
    %v1237 = vunpack.c.h.b16 %v269
    %v1238 = vunpack.c.l.b16 %v270
    %v1239 = vunpack.c.h.b16 %v270
    %v1240 = vunpack.c.l.b16 %v271
    %v1241 = vunpack.c.h.b16 %v271
    %v1242 = vunpack.c.l.b16 %v272
    %v1243 = vunpack.c.h.b16 %v272
    %v1244 = vunpack.c.l.b16 %v273
    %v1245 = vunpack.c.h.b16 %v273
    %v1246 = vunpack.c.l.b16 %v274
    %v1247 = vunpack.c.h.b16 %v274
    %v1248 = vunpack.c.l.b16 %v275
    %v1249 = vunpack.c.h.b16 %v275
    %v1250 = vunpack.c.l.b16 %v276
    %v1251 = vunpack.c.h.b16 %v276
    %v1252 = vunpack.c.l.b16 %v277
    %v1253 = vunpack.c.h.b16 %v277
    %v1254 = vunpack.c.l.b16 %v278
    %v1255 = vunpack.c.h.b16 %v278
    %v1256 = vunpack.c.l.b16 %v279
    %v1257 = vunpack.c.h.b16 %v279
    %v1258 = vunpack.c.l.b16 %v280
    %v1259 = vunpack.c.h.b16 %v280
    %v1260 = vunpack.c.l.b16 %v281
    %v1261 = vunpack.c.h.b16 %v281
    %v1262 = vunpack.c.l.b16 %v282
    %v1263 = vunpack.c.h.b16 %v282
    %v1264 = vunpack.c.l.b16 %v283
    %v1265 = vunpack.c.h.b16 %v283
    %v1266 = vunpack.c.l.b16 %v284
    %v1267 = vunpack.c.h.b16 %v284
    %v1268 = vunpack.c.l.b16 %v285
    %v1269 = vunpack.c.h.b16 %v285
    %v1270 = vunpack.c.l.b16 %v286
    %v1271 = vunpack.c.h.b16 %v286
    %v1272 = vunpack.c.l.b16 %v287
    %v1273 = vunpack.c.h.b16 %v287
    %v1274 = vunpack.c.l.b16 %v288
    %v1275 = vunpack.c.h.b16 %v288
    %v1276 = vunpack.c.l.b16 %v289
    %v1277 = vunpack.c.h.b16 %v289
    %v1278 = vunpack.c.l.b16 %v290
    %v1279 = vunpack.c.h.b16 %v290
    %v1280 = vunpack.c.l.b16 %v291
    %v1281 = vunpack.c.h.b16 %v291
    %v1282 = vunpack.c.l.b16 %v292
    %v1283 = vunpack.c.h.b16 %v292
    %v1284 = vunpack.c.l.b16 %v293
    %v1285 = vunpack.c.h.b16 %v293
    %v1286 = vunpack.c.l.b16 %v294
    %v1287 = vunpack.c.h.b16 %v294
    %v1288 = vunpack.c.l.b16 %v295
    %v1289 = vunpack.c.h.b16 %v295
    %v1290 = vunpack.c.l.b16 %v296
    %v1291 = vunpack.c.h.b16 %v296
    %v1292 = vunpack.c.l.b16 %v297
    %v1293 = vunpack.c.h.b16 %v297
    %v1294 = vunpack.c.l.b16 %v298
    %v1295 = vunpack.c.h.b16 %v298
    %v1296 = vunpack.c.l.b16 %v299
    %v1297 = vunpack.c.h.b16 %v299
    %v1298 = vunpack.c.l.b16 %v300
    %v1299 = vunpack.c.h.b16 %v300
    %v1300 = vunpack.c.l.b16 %v301
    %v1301 = vunpack.c.h.b16 %v301
    %v1302 = vunpack.c.l.b16 %v302
    %v1303 = vunpack.c.h.b16 %v302
    %v1304 = vunpack.c.l.b16 %v303
    %v1305 = vunpack.c.h.b16 %v303
    %v1306 = vunpack.c.l.b16 %v304
    %v1307 = vunpack.c.h.b16 %v304
    %v1308 = vunpack.c.l.b16 %v305
    %v1309 = vunpack.c.h.b16 %v305
    %v1310 = vunpack.c.l.b16 %v306
    %v1311 = vunpack.c.h.b16 %v306
    %v1312 = vunpack.c.l.b16 %v307
    %v1313 = vunpack.c.h.b16 %v307
    %v1314 = vunpack.c.l.b16 %v308
    %v1315 = vunpack.c.h.b16 %v308
    %v1316 = vunpack.c.l.b16 %v309
    %v1317 = vunpack.c.h.b16 %v309
    %v1318 = vunpack.c.l.b16 %v310
    %v1319 = vunpack.c.h.b16 %v310
    %v1320 = vunpack.c.l.b16 %v311
    %v1321 = vunpack.c.h.b16 %v311
    %v1322 = vunpack.c.l.b16 %v312
    %v1323 = vunpack.c.h.b16 %v312
    %v1324 = vunpack.c.l.b16 %v313
    %v1325 = vunpack.c.h.b16 %v313
    %v1326 = vunpack.c.l.b16 %v314
    %v1327 = vunpack.c.h.b16 %v314
    %v1328 = vunpack.c.l.b16 %v315
    %v1329 = vunpack.c.h.b16 %v315
    %v1330 = vunpack.c.l.b16 %v316
    %v1331 = vunpack.c.h.b16 %v316
    %v1332 = vunpack.c.l.b16 %v317
    %v1333 = vunpack.c.h.b16 %v317
    %v1334 = vunpack.c.l.b16 %v318
    %v1335 = vunpack.c.h.b16 %v318
    %v1336 = vunpack.c.l.b16 %v319
    %v1337 = vunpack.c.h.b16 %v319
    %v1338 = vunpack.c.l.b16 %v320
    %v1339 = vunpack.c.h.b16 %v320
    %v1340 = vunpack.c.l.b16 %v321
    %v1341 = vunpack.c.h.b16 %v321
    %v1342 = vunpack.c.l.b16 %v322
    %v1343 = vunpack.c.h.b16 %v322
    %v1344 = vunpack.c.l.b16 %v323
    %v1345 = vunpack.c.h.b16 %v323
    %v1346 = vunpack.c.l.b16 %v324
    %v1347 = vunpack.c.h.b16 %v324
    %v1348 = vunpack.c.l.b16 %v325
    %v1349 = vunpack.c.h.b16 %v325
    %v1350 = vunpack.c.l.b16 %v326
    %v1351 = vunpack.c.h.b16 %v326
    %v1352 = vunpack.c.l.b16 %v327
    %v1353 = vunpack.c.h.b16 %v327
    %v1354 = vunpack.c.l.b16 %v328
    %v1355 = vunpack.c.h.b16 %v328
    %v1356 = vunpack.c.l.b16 %v329
    %v1357 = vunpack.c.h.b16 %v329
    %v1358 = vunpack.c.l.b16 %v330
    %v1359 = vunpack.c.h.b16 %v330
    %v1360 = vunpack.c.l.b16 %v331
    %v1361 = vunpack.c.h.b16 %v331
    %v1362 = vunpack.c.l.b16 %v332
    %v1363 = vunpack.c.h.b16 %v332
    %v1364 = vunpack.c.l.b16 %v333
    %v1365 = vunpack.c.h.b16 %v333
    %v1366 = vunpack.c.l.b16 %v334
    %v1367 = vunpack.c.h.b16 %v334
    %v1368 = vunpack.c.l.b16 %v335
    %v1369 = vunpack.c.h.b16 %v335
    %v1370 = vunpack.c.l.b16 %v336
    %v1371 = vunpack.c.h.b16 %v336
    %v1372 = vunpack.c.l.b16 %v337
    %v1373 = vunpack.c.h.b16 %v337
    %v1374 = vunpack.c.l.b16 %v338
    %v1375 = vunpack.c.h.b16 %v338
    %v1376 = vunpack.c.l.b16 %v339
    %v1377 = vunpack.c.h.b16 %v339
    %v1378 = vunpack.c.l.b16 %v340
    %v1379 = vunpack.c.h.b16 %v340
    %v1380 = vunpack.c.l.b16 %v341
    %v1381 = vunpack.c.h.b16 %v341
    %v1382 = vunpack.c.l.b16 %v342
    %v1383 = vunpack.c.h.b16 %v342
    %v1384 = vunpack.c.l.b16 %v343
    %v1385 = vunpack.c.h.b16 %v343
    %v1386 = vunpack.c.l.b16 %v344
    %v1387 = vunpack.c.h.b16 %v344
    %v1388 = vunpack.c.l.b16 %v345
    %v1389 = vunpack.c.h.b16 %v345
    %v1390 = vunpack.c.l.b16 %v346
    %v1391 = vunpack.c.h.b16 %v346
    %v1392 = vunpack.c.l.b16 %v347
    %v1393 = vunpack.c.h.b16 %v347
    %v1394 = vunpack.c.l.b16 %v348
    %v1395 = vunpack.c.h.b16 %v348
    %v1396 = vunpack.c.l.b16 %v349
    %v1397 = vunpack.c.h.b16 %v349
    %v1398 = vunpack.c.l.b16 %v350
    %v1399 = vunpack.c.h.b16 %v350
    %v1400 = vunpack.c.l.b16 %v351
    %v1401 = vunpack.c.h.b16 %v351
    %v1402 = vunpack.c.l.b16 %v352
    %v1403 = vunpack.c.h.b16 %v352
    %v1404 = vunpack.c.l.b16 %v353
    %v1405 = vunpack.c.h.b16 %v353
    %v1406 = vunpack.c.l.b16 %v354
    %v1407 = vunpack.c.h.b16 %v354
    %v1408 = vunpack.c.l.b16 %v355
    %v1409 = vunpack.c.h.b16 %v355
    %v1410 = vunpack.c.l.b16 %v356
    %v1411 = vunpack.c.h.b16 %v356
    %v1412 = vunpack.c.l.b16 %v357
    %v1413 = vunpack.c.h.b16 %v357
    %v1414 = vunpack.c.l.b16 %v358
    %v1415 = vunpack.c.h.b16 %v358
    %v1416 = vunpack.c.l.b16 %v359
    %v1417 = vunpack.c.h.b16 %v359
    %v1418 = vunpack.c.l.b16 %v360
    %v1419 = vunpack.c.h.b16 %v360
    %v1420 = vunpack.c.l.b16 %v361
    %v1421 = vunpack.c.h.b16 %v361
    %v1422 = vunpack.c.l.b16 %v362
    %v1423 = vunpack.c.h.b16 %v362
    %v1424 = vunpack.c.l.b16 %v363
    %v1425 = vunpack.c.h.b16 %v363
    %v1426 = vunpack.c.l.b16 %v364
    %v1427 = vunpack.c.h.b16 %v364
    %v1428 = vunpack.c.l.b16 %v365
    %v1429 = vunpack.c.h.b16 %v365
    %v1430 = vunpack.c.l.b16 %v366
    %v1431 = vunpack.c.h.b16 %v366
    %v1432 = vunpack.c.l.b16 %v367
    %v1433 = vunpack.c.h.b16 %v367
    %v1434 = vunpack.c.l.b16 %v368
    %v1435 = vunpack.c.h.b16 %v368
    %v1436 = vunpack.c.l.b16 %v369
    %v1437 = vunpack.c.h.b16 %v369
    %v1438 = vunpack.c.l.b16 %v370
    %v1439 = vunpack.c.h.b16 %v370
    %v1440 = vunpack.c.l.b16 %v371
    %v1441 = vunpack.c.h.b16 %v371
    %v1442 = vunpack.c.l.b16 %v372
    %v1443 = vunpack.c.h.b16 %v372
    %v1444 = vunpack.c.l.b16 %v373
    %v1445 = vunpack.c.h.b16 %v373
    %v1446 = vunpack.c.l.b16 %v374
    %v1447 = vunpack.c.h.b16 %v374
    %v1448 = vunpack.c.l.b16 %v375
    %v1449 = vunpack.c.h.b16 %v375
    %v1450 = vunpack.c.l.b16 %v376
    %v1451 = vunpack.c.h.b16 %v376
    %v1452 = vunpack.c.l.b16 %v377
    %v1453 = vunpack.c.h.b16 %v377
    %v1454 = vunpack.c.l.b16 %v378
    %v1455 = vunpack.c.h.b16 %v378
    %v1456 = vunpack.c.l.b16 %v379
    %v1457 = vunpack.c.h.b16 %v379
    %v1458 = vunpack.c.l.b16 %v380
    %v1459 = vunpack.c.h.b16 %v380
    %v1460 = vunpack.c.l.b16 %v381
    %v1461 = vunpack.c.h.b16 %v381
    %v1462 = vunpack.c.l.b16 %v382
    %v1463 = vunpack.c.h.b16 %v382
    %v1464 = vunpack.c.l.b16 %v383
    %v1465 = vunpack.c.h.b16 %v383
    %v1466 = vunpack.c.l.b16 %v384
    %v1467 = vunpack.c.h.b16 %v384
    %v1468 = vunpack.c.l.b16 %v385
    %v1469 = vunpack.c.h.b16 %v385
    %v1470 = vunpack.c.l.b16 %v386
    %v1471 = vunpack.c.h.b16 %v386
    %v1472 = vunpack.c.l.b16 %v387
    %v1473 = vunpack.c.h.b16 %v387
    %v1474 = vunpack.c.l.b16 %v388
    %v1475 = vunpack.c.h.b16 %v388
    %v1476 = vunpack.c.l.b16 %v389
    %v1477 = vunpack.c.h.b16 %v389
    %v1478 = vunpack.c.l.b16 %v390
    %v1479 = vunpack.c.h.b16 %v390
    %v1480 = vunpack.c.l.b16 %v391
    %v1481 = vunpack.c.h.b16 %v391
    %v1482 = vunpack.c.l.b16 %v392
    %v1483 = vunpack.c.h.b16 %v392
    %v1484 = vunpack.c.l.b16 %v393
    %v1485 = vunpack.c.h.b16 %v393
    %v1486 = vunpack.c.l.b16 %v394
    %v1487 = vunpack.c.h.b16 %v394
    %v1488 = vunpack.c.l.b16 %v395
    %v1489 = vunpack.c.h.b16 %v395
    %v1490 = vunpack.c.l.b16 %v396
    %v1491 = vunpack.c.h.b16 %v396
    %v1492 = vunpack.c.l.b16 %v397
    %v1493 = vunpack.c.h.b16 %v397
    %v1494 = vunpack.c.l.b16 %v398
    %v1495 = vunpack.c.h.b16 %v398
    %v1496 = vunpack.c.l.b16 %v399
    %v1497 = vunpack.c.h.b16 %v399
    %v1498 = vunpack.c.l.b16 %v400
    %v1499 = vunpack.c.h.b16 %v400
    %v1500 = vunpack.c.l.b16 %v401
    %v1501 = vunpack.c.h.b16 %v401
    %v1502 = vunpack.c.l.b16 %v402
    %v1503 = vunpack.c.h.b16 %v402
    %v1504 = vunpack.c.l.b16 %v403
    %v1505 = vunpack.c.h.b16 %v403
    %v1506 = vunpack.c.l.b16 %v404
    %v1507 = vunpack.c.h.b16 %v404
    %v1508 = vunpack.c.l.b16 %v405
    %v1509 = vunpack.c.h.b16 %v405
    %v1510 = vunpack.c.l.b16 %v406
    %v1511 = vunpack.c.h.b16 %v406
    %v1512 = vunpack.c.l.b16 %v407
    %v1513 = vunpack.c.h.b16 %v407
    %v1514 = vunpack.c.l.b16 %v408
    %v1515 = vunpack.c.h.b16 %v408
    %v1516 = vunpack.c.l.b16 %v409
    %v1517 = vunpack.c.h.b16 %v409
    %v1518 = vunpack.c.l.b16 %v410
    %v1519 = vunpack.c.h.b16 %v410
    %v1520 = vunpack.c.l.b16 %v411
    %v1521 = vunpack.c.h.b16 %v411
    %v1522 = vpack.c.b16 %v1014, %v1010
    %v1523 = vpack.c.b16 %v1015, %v1011
    %v1524 = vpack.c.b16 %v1016, %v1012
    %v1525 = vpack.c.b16 %v1017, %v1013
    %v1526 = vpack.c.b16 %v1022, %v1018
    %v1527 = vpack.c.b16 %v1023, %v1019
    %v1528 = vpack.c.b16 %v1024, %v1020
    %v1529 = vpack.c.b16 %v1025, %v1021
    %v1530 = vpack.c.b16 %v1030, %v1026
    %v1531 = vpack.c.b16 %v1031, %v1027
    %v1532 = vpack.c.b16 %v1032, %v1028
    %v1533 = vpack.c.b16 %v1033, %v1029
    %v1534 = vpack.c.b16 %v1038, %v1034
    %v1535 = vpack.c.b16 %v1039, %v1035
    %v1536 = vpack.c.b16 %v1040, %v1036
    %v1537 = vpack.c.b16 %v1041, %v1037
    %v1538 = vpack.c.b16 %v1046, %v1042
    %v1539 = vpack.c.b16 %v1047, %v1043
    %v1540 = vpack.c.b16 %v1048, %v1044
    %v1541 = vpack.c.b16 %v1049, %v1045
    %v1542 = vpack.c.b16 %v1054, %v1050
    %v1543 = vpack.c.b16 %v1055, %v1051
    %v1544 = vpack.c.b16 %v1056, %v1052
    %v1545 = vpack.c.b16 %v1057, %v1053
    %v1546 = vpack.c.b16 %v1062, %v1058
    %v1547 = vpack.c.b16 %v1063, %v1059
    %v1548 = vpack.c.b16 %v1064, %v1060
    %v1549 = vpack.c.b16 %v1065, %v1061
    %v1550 = vpack.c.b16 %v1070, %v1066
    %v1551 = vpack.c.b16 %v1071, %v1067
    %v1552 = vpack.c.b16 %v1072, %v1068
    %v1553 = vpack.c.b16 %v1073, %v1069
    %v1554 = vpack.c.b16 %v1078, %v1074
    %v1555 = vpack.c.b16 %v1079, %v1075
    %v1556 = vpack.c.b16 %v1080, %v1076
    %v1557 = vpack.c.b16 %v1081, %v1077
    %v1558 = vpack.c.b16 %v1086, %v1082
    %v1559 = vpack.c.b16 %v1087, %v1083
    %v1560 = vpack.c.b16 %v1088, %v1084
    %v1561 = vpack.c.b16 %v1089, %v1085
    %v1562 = vpack.c.b16 %v1094, %v1090
    %v1563 = vpack.c.b16 %v1095, %v1091
    %v1564 = vpack.c.b16 %v1096, %v1092
    %v1565 = vpack.c.b16 %v1097, %v1093
    %v1566 = vpack.c.b16 %v1102, %v1098
    %v1567 = vpack.c.b16 %v1103, %v1099
    %v1568 = vpack.c.b16 %v1104, %v1100
    %v1569 = vpack.c.b16 %v1105, %v1101
    %v1570 = vpack.c.b16 %v1110, %v1106
    %v1571 = vpack.c.b16 %v1111, %v1107
    %v1572 = vpack.c.b16 %v1112, %v1108
    %v1573 = vpack.c.b16 %v1113, %v1109
    %v1574 = vpack.c.b16 %v1118, %v1114
    %v1575 = vpack.c.b16 %v1119, %v1115
    %v1576 = vpack.c.b16 %v1120, %v1116
    %v1577 = vpack.c.b16 %v1121, %v1117
    %v1578 = vpack.c.b16 %v1126, %v1122
    %v1579 = vpack.c.b16 %v1127, %v1123
    %v1580 = vpack.c.b16 %v1128, %v1124
    %v1581 = vpack.c.b16 %v1129, %v1125
    %v1582 = vpack.c.b16 %v1134, %v1130
    %v1583 = vpack.c.b16 %v1135, %v1131
    %v1584 = vpack.c.b16 %v1136, %v1132
    %v1585 = vpack.c.b16 %v1137, %v1133
    %v1586 = vpack.c.b16 %v1142, %v1138
    %v1587 = vpack.c.b16 %v1143, %v1139
    %v1588 = vpack.c.b16 %v1144, %v1140
    %v1589 = vpack.c.b16 %v1145, %v1141
    %v1590 = vpack.c.b16 %v1150, %v1146
    %v1591 = vpack.c.b16 %v1151, %v1147
    %v1592 = vpack.c.b16 %v1152, %v1148
    %v1593 = vpack.c.b16 %v1153, %v1149
    %v1594 = vpack.c.b16 %v1158, %v1154
    %v1595 = vpack.c.b16 %v1159, %v1155
    %v1596 = vpack.c.b16 %v1160, %v1156
    %v1597 = vpack.c.b16 %v1161, %v1157
    %v1598 = vpack.c.b16 %v1166, %v1162
    %v1599 = vpack.c.b16 %v1167, %v1163
    %v1600 = vpack.c.b16 %v1168, %v1164
    %v1601 = vpack.c.b16 %v1169, %v1165
    %v1602 = vpack.c.b16 %v1174, %v1170
    %v1603 = vpack.c.b16 %v1175, %v1171
    %v1604 = vpack.c.b16 %v1176, %v1172
    %v1605 = vpack.c.b16 %v1177, %v1173
    %v1606 = vpack.c.b16 %v1182, %v1178
    %v1607 = vpack.c.b16 %v1183, %v1179
    %v1608 = vpack.c.b16 %v1184, %v1180
    %v1609 = vpack.c.b16 %v1185, %v1181
    %v1610 = vpack.c.b16 %v1190, %v1186
    %v1611 = vpack.c.b16 %v1191, %v1187
    %v1612 = vpack.c.b16 %v1192, %v1188
    %v1613 = vpack.c.b16 %v1193, %v1189
    %v1614 = vpack.c.b16 %v1198, %v1194
    %v1615 = vpack.c.b16 %v1199, %v1195
    %v1616 = vpack.c.b16 %v1200, %v1196
    %v1617 = vpack.c.b16 %v1201, %v1197
    %v1618 = vpack.c.b16 %v1206, %v1202
    %v1619 = vpack.c.b16 %v1207, %v1203
    %v1620 = vpack.c.b16 %v1208, %v1204
    %v1621 = vpack.c.b16 %v1209, %v1205
    %v1622 = vpack.c.b16 %v1214, %v1210
    %v1623 = vpack.c.b16 %v1215, %v1211
    %v1624 = vpack.c.b16 %v1216, %v1212
    %v1625 = vpack.c.b16 %v1217, %v1213
    %v1626 = vpack.c.b16 %v1222, %v1218
    %v1627 = vpack.c.b16 %v1223, %v1219
    %v1628 = vpack.c.b16 %v1224, %v1220
    %v1629 = vpack.c.b16 %v1225, %v1221
    %v1630 = vpack.c.b16 %v1230, %v1226
    %v1631 = vpack.c.b16 %v1231, %v1227
    %v1632 = vpack.c.b16 %v1232, %v1228
    %v1633 = vpack.c.b16 %v1233, %v1229
    %v1634 = vpack.c.b16 %v1238, %v1234
    %v1635 = vpack.c.b16 %v1239, %v1235
    %v1636 = vpack.c.b16 %v1240, %v1236
    %v1637 = vpack.c.b16 %v1241, %v1237
    %v1638 = vpack.c.b16 %v1246, %v1242
    %v1639 = vpack.c.b16 %v1247, %v1243
    %v1640 = vpack.c.b16 %v1248, %v1244
    %v1641 = vpack.c.b16 %v1249, %v1245
    %v1642 = vpack.c.b16 %v1254, %v1250
    %v1643 = vpack.c.b16 %v1255, %v1251
    %v1644 = vpack.c.b16 %v1256, %v1252
    %v1645 = vpack.c.b16 %v1257, %v1253
    %v1646 = vpack.c.b16 %v1262, %v1258
    %v1647 = vpack.c.b16 %v1263, %v1259
    %v1648 = vpack.c.b16 %v1264, %v1260
    %v1649 = vpack.c.b16 %v1265, %v1261
    %v1650 = vpack.c.b16 %v1270, %v1266
    %v1651 = vpack.c.b16 %v1271, %v1267
    %v1652 = vpack.c.b16 %v1272, %v1268
    %v1653 = vpack.c.b16 %v1273, %v1269
    %v1654 = vpack.c.b16 %v1278, %v1274
    %v1655 = vpack.c.b16 %v1279, %v1275
    %v1656 = vpack.c.b16 %v1280, %v1276
    %v1657 = vpack.c.b16 %v1281, %v1277
    %v1658 = vpack.c.b16 %v1286, %v1282
    %v1659 = vpack.c.b16 %v1287, %v1283
    %v1660 = vpack.c.b16 %v1288, %v1284
    %v1661 = vpack.c.b16 %v1289, %v1285
    %v1662 = vpack.c.b16 %v1294, %v1290
    %v1663 = vpack.c.b16 %v1295, %v1291
    %v1664 = vpack.c.b16 %v1296, %v1292
    %v1665 = vpack.c.b16 %v1297, %v1293
    %v1666 = vpack.c.b16 %v1302, %v1298
    %v1667 = vpack.c.b16 %v1303, %v1299
    %v1668 = vpack.c.b16 %v1304, %v1300
    %v1669 = vpack.c.b16 %v1305, %v1301
    %v1670 = vpack.c.b16 %v1310, %v1306
    %v1671 = vpack.c.b16 %v1311, %v1307
    %v1672 = vpack.c.b16 %v1312, %v1308
    %v1673 = vpack.c.b16 %v1313, %v1309
    %v1674 = vpack.c.b16 %v1318, %v1314
    %v1675 = vpack.c.b16 %v1319, %v1315
    %v1676 = vpack.c.b16 %v1320, %v1316
    %v1677 = vpack.c.b16 %v1321, %v1317
    %v1678 = vpack.c.b16 %v1326, %v1322
    %v1679 = vpack.c.b16 %v1327, %v1323
    %v1680 = vpack.c.b16 %v1328, %v1324
    %v1681 = vpack.c.b16 %v1329, %v1325
    %v1682 = vpack.c.b16 %v1334, %v1330
    %v1683 = vpack.c.b16 %v1335, %v1331
    %v1684 = vpack.c.b16 %v1336, %v1332
    %v1685 = vpack.c.b16 %v1337, %v1333
    %v1686 = vpack.c.b16 %v1342, %v1338
    %v1687 = vpack.c.b16 %v1343, %v1339
    %v1688 = vpack.c.b16 %v1344, %v1340
    %v1689 = vpack.c.b16 %v1345, %v1341
    %v1690 = vpack.c.b16 %v1350, %v1346
    %v1691 = vpack.c.b16 %v1351, %v1347
    %v1692 = vpack.c.b16 %v1352, %v1348
    %v1693 = vpack.c.b16 %v1353, %v1349
    %v1694 = vpack.c.b16 %v1358, %v1354
    %v1695 = vpack.c.b16 %v1359, %v1355
    %v1696 = vpack.c.b16 %v1360, %v1356
    %v1697 = vpack.c.b16 %v1361, %v1357
    %v1698 = vpack.c.b16 %v1366, %v1362
    %v1699 = vpack.c.b16 %v1367, %v1363
    %v1700 = vpack.c.b16 %v1368, %v1364
    %v1701 = vpack.c.b16 %v1369, %v1365
    %v1702 = vpack.c.b16 %v1374, %v1370
    %v1703 = vpack.c.b16 %v1375, %v1371
    %v1704 = vpack.c.b16 %v1376, %v1372
    %v1705 = vpack.c.b16 %v1377, %v1373
    %v1706 = vpack.c.b16 %v1382, %v1378
    %v1707 = vpack.c.b16 %v1383, %v1379
    %v1708 = vpack.c.b16 %v1384, %v1380
    %v1709 = vpack.c.b16 %v1385, %v1381
    %v1710 = vpack.c.b16 %v1390, %v1386
    %v1711 = vpack.c.b16 %v1391, %v1387
    %v1712 = vpack.c.b16 %v1392, %v1388
    %v1713 = vpack.c.b16 %v1393, %v1389
    %v1714 = vpack.c.b16 %v1398, %v1394
    %v1715 = vpack.c.b16 %v1399, %v1395
    %v1716 = vpack.c.b16 %v1400, %v1396
    %v1717 = vpack.c.b16 %v1401, %v1397
    %v1718 = vpack.c.b16 %v1406, %v1402
    %v1719 = vpack.c.b16 %v1407, %v1403
    %v1720 = vpack.c.b16 %v1408, %v1404
    %v1721 = vpack.c.b16 %v1409, %v1405
    %v1722 = vpack.c.b16 %v1414, %v1410
    %v1723 = vpack.c.b16 %v1415, %v1411
    %v1724 = vpack.c.b16 %v1416, %v1412
    %v1725 = vpack.c.b16 %v1417, %v1413
    %v1726 = vpack.c.b16 %v1422, %v1418
    %v1727 = vpack.c.b16 %v1423, %v1419
    %v1728 = vpack.c.b16 %v1424, %v1420
    %v1729 = vpack.c.b16 %v1425, %v1421
    %v1730 = vpack.c.b16 %v1430, %v1426
    %v1731 = vpack.c.b16 %v1431, %v1427
    %v1732 = vpack.c.b16 %v1432, %v1428
    %v1733 = vpack.c.b16 %v1433, %v1429
    %v1734 = vpack.c.b16 %v1438, %v1434
    %v1735 = vpack.c.b16 %v1439, %v1435
    %v1736 = vpack.c.b16 %v1440, %v1436
    %v1737 = vpack.c.b16 %v1441, %v1437
    %v1738 = vpack.c.b16 %v1446, %v1442
    %v1739 = vpack.c.b16 %v1447, %v1443
    %v1740 = vpack.c.b16 %v1448, %v1444
    %v1741 = vpack.c.b16 %v1449, %v1445
    %v1742 = vpack.c.b16 %v1454, %v1450
    %v1743 = vpack.c.b16 %v1455, %v1451
    %v1744 = vpack.c.b16 %v1456, %v1452
    %v1745 = vpack.c.b16 %v1457, %v1453
    %v1746 = vpack.c.b16 %v1462, %v1458
    %v1747 = vpack.c.b16 %v1463, %v1459
    %v1748 = vpack.c.b16 %v1464, %v1460
    %v1749 = vpack.c.b16 %v1465, %v1461
    %v1750 = vpack.c.b16 %v1470, %v1466
    %v1751 = vpack.c.b16 %v1471, %v1467
    %v1752 = vpack.c.b16 %v1472, %v1468
    %v1753 = vpack.c.b16 %v1473, %v1469
    %v1754 = vpack.c.b16 %v1478, %v1474
    %v1755 = vpack.c.b16 %v1479, %v1475
    %v1756 = vpack.c.b16 %v1480, %v1476
    %v1757 = vpack.c.b16 %v1481, %v1477
    %v1758 = vpack.c.b16 %v1486, %v1482
    %v1759 = vpack.c.b16 %v1487, %v1483
    %v1760 = vpack.c.b16 %v1488, %v1484
    %v1761 = vpack.c.b16 %v1489, %v1485
    %v1762 = vpack.c.b16 %v1494, %v1490
    %v1763 = vpack.c.b16 %v1495, %v1491
    %v1764 = vpack.c.b16 %v1496, %v1492
    %v1765 = vpack.c.b16 %v1497, %v1493
    %v1766 = vpack.c.b16 %v1502, %v1498
    %v1767 = vpack.c.b16 %v1503, %v1499
    %v1768 = vpack.c.b16 %v1504, %v1500
    %v1769 = vpack.c.b16 %v1505, %v1501
    %v1770 = vpack.c.b16 %v1510, %v1506
    %v1771 = vpack.c.b16 %v1511, %v1507
    %v1772 = vpack.c.b16 %v1512, %v1508
    %v1773 = vpack.c.b16 %v1513, %v1509
    %v1774 = vpack.c.b16 %v1518, %v1514
    %v1775 = vpack.c.b16 %v1519, %v1515
    %v1776 = vpack.c.b16 %v1520, %v1516
    %v1777 = vpack.c.b16 %v1521, %v1517
    %2034 = vmatprep.subr.bf16.mxu0 %v1551
    %2035 = vmatpush1.bf16.msra.mxu0 %v1550
    %2036 = vmatprep.subr.bf16.mxu0 %v1547
    %2037 = vmatpush1.bf16.msra.mxu0 %v1546
    %2038 = vmatprep.subr.bf16.mxu0 %v1543
    %2039 = vmatpush1.bf16.msra.mxu0 %v1542
    %2040 = vmatprep.subr.bf16.mxu0 %v1539
    %2041 = vmatpush1.bf16.msra.mxu0 %v1538
    %2042 = vmatprep.subr.bf16.mxu0 %v1535
    %2043 = vmatpush1.bf16.msra.mxu0 %v1534
    %2044 = vmatprep.subr.bf16.mxu0 %v1531
    %2045 = vmatpush1.bf16.msra.mxu0 %v1530
    %2046 = vmatprep.subr.bf16.mxu0 %v1527
    %2047 = vmatpush1.bf16.msra.mxu0 %v1526
    %2048 = vmatprep.subr.bf16.mxu0 %v1523
    %2049 = vmatpush1.bf16.msra.mxu0 %v1522
    %2050 = vmatprep.subr.bf16.mxu0 %v1583
    %2051 = vmatpush2.bf16.msra.mxu0 %v1582
    %2052 = vmatprep.subr.bf16.mxu0 %v1579
    %2053 = vmatpush2.bf16.msra.mxu0 %v1578
    %2054 = vmatprep.subr.bf16.mxu0 %v1575
    %2055 = vmatpush2.bf16.msra.mxu0 %v1574
    %2056 = vmatprep.subr.bf16.mxu0 %v1571
    %2057 = vmatpush2.bf16.msra.mxu0 %v1570
    %2058 = vmatprep.subr.bf16.mxu0 %v1567
    %2059 = vmatpush2.bf16.msra.mxu0 %v1566
    %2060 = vmatprep.subr.bf16.mxu0 %v1563
    %2061 = vmatpush2.bf16.msra.mxu0 %v1562
    %2062 = vmatprep.subr.bf16.mxu0 %v1559
    %2063 = vmatpush2.bf16.msra.mxu0 %v1558
    %2064 = vmatprep.subr.bf16.mxu0 %v1555
    %2065 = vmatpush2.bf16.msra.mxu0 %v1554
    %2066 = vmatprep.mubr.bf16.mxu0 %v627
    %2067 = vmatmul.mubr.bf16.gmra.mxu0 %v626
    %v2068 = vpop.f32.mrf.mxu0
    %v2069 = vadd.f32 %v417, %v2068
    %v2070 = vpop.f32.mrf.mxu0
    %v2071 = vadd.f32 %v421, %v2070
    %v2072 = vpop.f32.mrf.mxu0
    %v2073 = vadd.f32 %v417, %v2072
    %v2074 = vpop.f32.mrf.mxu0
    %v2075 = vadd.f32 %v421, %v2074
    %2076 = vmatprep.mubr.bf16.mxu0 %v635
    %2077 = vmatmul.mubr.bf16.gmra.mxu0 %v634
    %v2078 = vpop.f32.mrf.mxu0
    %v2079 = vadd.f32 %v417, %v2078
    %v2080 = vpop.f32.mrf.mxu0
    %v2081 = vadd.f32 %v421, %v2080
    %v2082 = vpop.f32.mrf.mxu0
    %v2083 = vadd.f32 %v417, %v2082
    %v2084 = vpop.f32.mrf.mxu0
    %v2085 = vadd.f32 %v421, %v2084
    %2086 = vmatprep.mubr.bf16.mxu0 %v643
    %2087 = vmatmul.mubr.bf16.gmra.mxu0 %v642
    %v2088 = vpop.f32.mrf.mxu0
    %v2089 = vadd.f32 %v417, %v2088
    %v2090 = vpop.f32.mrf.mxu0
    %v2091 = vadd.f32 %v421, %v2090
    %v2092 = vpop.f32.mrf.mxu0
    %v2093 = vadd.f32 %v417, %v2092
    %v2094 = vpop.f32.mrf.mxu0
    %v2095 = vadd.f32 %v421, %v2094
    %2096 = vmatprep.mubr.bf16.mxu0 %v651
    %2097 = vmatmul.mubr.bf16.gmra.mxu0 %v650
    %v2098 = vpop.f32.mrf.mxu0
    %v2099 = vadd.f32 %v417, %v2098
    %v2100 = vpop.f32.mrf.mxu0
    %v2101 = vadd.f32 %v421, %v2100
    %v2102 = vpop.f32.mrf.mxu0
    %v2103 = vadd.f32 %v417, %v2102
    %v2104 = vpop.f32.mrf.mxu0
    %v2105 = vadd.f32 %v421, %v2104
    %2106 = vmatprep.mubr.bf16.mxu0 %v659
    %2107 = vmatmul.mubr.bf16.gmra.mxu0 %v658
    %v2108 = vpop.f32.mrf.mxu0
    %v2109 = vadd.f32 %v417, %v2108
    %v2110 = vpop.f32.mrf.mxu0
    %v2111 = vadd.f32 %v421, %v2110
    %v2112 = vpop.f32.mrf.mxu0
    %v2113 = vadd.f32 %v417, %v2112
    %v2114 = vpop.f32.mrf.mxu0
    %v2115 = vadd.f32 %v421, %v2114
    %2116 = vmatprep.mubr.bf16.mxu0 %v667
    %2117 = vmatmul.mubr.bf16.gmra.mxu0 %v666
    %v2118 = vpop.f32.mrf.mxu0
    %v2119 = vadd.f32 %v417, %v2118
    %v2120 = vpop.f32.mrf.mxu0
    %v2121 = vadd.f32 %v421, %v2120
    %v2122 = vpop.f32.mrf.mxu0
    %v2123 = vadd.f32 %v417, %v2122
    %v2124 = vpop.f32.mrf.mxu0
    %v2125 = vadd.f32 %v421, %v2124
    %2126 = vmatprep.mubr.bf16.mxu0 %v675
    %2127 = vmatmul.mubr.bf16.gmra.mxu0 %v674
    %v2128 = vpop.f32.mrf.mxu0
    %v2129 = vadd.f32 %v417, %v2128
    %v2130 = vpop.f32.mrf.mxu0
    %v2131 = vadd.f32 %v421, %v2130
    %v2132 = vpop.f32.mrf.mxu0
    %v2133 = vadd.f32 %v417, %v2132
    %v2134 = vpop.f32.mrf.mxu0
    %v2135 = vadd.f32 %v421, %v2134
    %2136 = vmatprep.mubr.bf16.mxu0 %v683
    %2137 = vmatmul.mubr.bf16.gmra.mxu0 %v682
    %v2138 = vpop.f32.mrf.mxu0
    %v2139 = vadd.f32 %v417, %v2138
    %v2140 = vpop.f32.mrf.mxu0
    %v2141 = vadd.f32 %v421, %v2140
    %v2142 = vpop.f32.mrf.mxu0
    %v2143 = vadd.f32 %v417, %v2142
    %v2144 = vpop.f32.mrf.mxu0
    %v2145 = vadd.f32 %v421, %v2144
    %2146 = vdwg.mxu0
    %2147 = vmatprep.subr.bf16.mxu0 %v1615
    %2148 = vmatpush1.bf16.msra.mxu0 %v1614
    %2149 = vmatprep.subr.bf16.mxu0 %v1611
    %2150 = vmatpush1.bf16.msra.mxu0 %v1610
    %2151 = vmatprep.subr.bf16.mxu0 %v1607
    %2152 = vmatpush1.bf16.msra.mxu0 %v1606
    %2153 = vmatprep.subr.bf16.mxu0 %v1603
    %2154 = vmatpush1.bf16.msra.mxu0 %v1602
    %2155 = vmatprep.subr.bf16.mxu0 %v1599
    %2156 = vmatpush1.bf16.msra.mxu0 %v1598
    %2157 = vmatprep.subr.bf16.mxu0 %v1595
    %2158 = vmatpush1.bf16.msra.mxu0 %v1594
    %2159 = vmatprep.subr.bf16.mxu0 %v1591
    %2160 = vmatpush1.bf16.msra.mxu0 %v1590
    %2161 = vmatprep.subr.bf16.mxu0 %v1587
    %2162 = vmatpush1.bf16.msra.mxu0 %v1586
    %2163 = vmatprep.subr.bf16.mxu0 %v1647
    %2164 = vmatpush2.bf16.msra.mxu0 %v1646
    %2165 = vmatprep.subr.bf16.mxu0 %v1643
    %2166 = vmatpush2.bf16.msra.mxu0 %v1642
    %2167 = vmatprep.subr.bf16.mxu0 %v1639
    %2168 = vmatpush2.bf16.msra.mxu0 %v1638
    %2169 = vmatprep.subr.bf16.mxu0 %v1635
    %2170 = vmatpush2.bf16.msra.mxu0 %v1634
    %2171 = vmatprep.subr.bf16.mxu0 %v1631
    %2172 = vmatpush2.bf16.msra.mxu0 %v1630
    %2173 = vmatprep.subr.bf16.mxu0 %v1627
    %2174 = vmatpush2.bf16.msra.mxu0 %v1626
    %2175 = vmatprep.subr.bf16.mxu0 %v1623
    %2176 = vmatpush2.bf16.msra.mxu0 %v1622
    %2177 = vmatprep.subr.bf16.mxu0 %v1619
    %2178 = vmatpush2.bf16.msra.mxu0 %v1618
    %2179 = vmatprep.mubr.bf16.mxu0 %v629
    %2180 = vmatmul.mubr.bf16.gmra.mxu0 %v628
    %v2181 = vpop.f32.mrf.mxu0
    %v2182 = vadd.f32 %v2069, %v2181
    %v2183 = vpop.f32.mrf.mxu0
    %v2184 = vadd.f32 %v2071, %v2183
    %v2185 = vpop.f32.mrf.mxu0
    %v2186 = vadd.f32 %v2073, %v2185
    %v2187 = vpop.f32.mrf.mxu0
    %v2188 = vadd.f32 %v2075, %v2187
    %2189 = vmatprep.mubr.bf16.mxu0 %v637
    %2190 = vmatmul.mubr.bf16.gmra.mxu0 %v636
    %v2191 = vpop.f32.mrf.mxu0
    %v2192 = vadd.f32 %v2079, %v2191
    %v2193 = vpop.f32.mrf.mxu0
    %v2194 = vadd.f32 %v2081, %v2193
    %v2195 = vpop.f32.mrf.mxu0
    %v2196 = vadd.f32 %v2083, %v2195
    %v2197 = vpop.f32.mrf.mxu0
    %v2198 = vadd.f32 %v2085, %v2197
    %2199 = vmatprep.mubr.bf16.mxu0 %v645
    %2200 = vmatmul.mubr.bf16.gmra.mxu0 %v644
    %v2201 = vpop.f32.mrf.mxu0
    %v2202 = vadd.f32 %v2089, %v2201
    %v2203 = vpop.f32.mrf.mxu0
    %v2204 = vadd.f32 %v2091, %v2203
    %v2205 = vpop.f32.mrf.mxu0
    %v2206 = vadd.f32 %v2093, %v2205
    %v2207 = vpop.f32.mrf.mxu0
    %v2208 = vadd.f32 %v2095, %v2207
    %2209 = vmatprep.mubr.bf16.mxu0 %v653
    %2210 = vmatmul.mubr.bf16.gmra.mxu0 %v652
    %v2211 = vpop.f32.mrf.mxu0
    %v2212 = vadd.f32 %v2099, %v2211
    %v2213 = vpop.f32.mrf.mxu0
    %v2214 = vadd.f32 %v2101, %v2213
    %v2215 = vpop.f32.mrf.mxu0
    %v2216 = vadd.f32 %v2103, %v2215
    %v2217 = vpop.f32.mrf.mxu0
    %v2218 = vadd.f32 %v2105, %v2217
    %2219 = vmatprep.mubr.bf16.mxu0 %v661
    %2220 = vmatmul.mubr.bf16.gmra.mxu0 %v660
    %v2221 = vpop.f32.mrf.mxu0
    %v2222 = vadd.f32 %v2109, %v2221
    %v2223 = vpop.f32.mrf.mxu0
    %v2224 = vadd.f32 %v2111, %v2223
    %v2225 = vpop.f32.mrf.mxu0
    %v2226 = vadd.f32 %v2113, %v2225
    %v2227 = vpop.f32.mrf.mxu0
    %v2228 = vadd.f32 %v2115, %v2227
    %2229 = vmatprep.mubr.bf16.mxu0 %v669
    %2230 = vmatmul.mubr.bf16.gmra.mxu0 %v668
    %v2231 = vpop.f32.mrf.mxu0
    %v2232 = vadd.f32 %v2119, %v2231
    %v2233 = vpop.f32.mrf.mxu0
    %v2234 = vadd.f32 %v2121, %v2233
    %v2235 = vpop.f32.mrf.mxu0
    %v2236 = vadd.f32 %v2123, %v2235
    %v2237 = vpop.f32.mrf.mxu0
    %v2238 = vadd.f32 %v2125, %v2237
    %2239 = vmatprep.mubr.bf16.mxu0 %v677
    %2240 = vmatmul.mubr.bf16.gmra.mxu0 %v676
    %v2241 = vpop.f32.mrf.mxu0
    %v2242 = vadd.f32 %v2129, %v2241
    %v2243 = vpop.f32.mrf.mxu0
    %v2244 = vadd.f32 %v2131, %v2243
    %v2245 = vpop.f32.mrf.mxu0
    %v2246 = vadd.f32 %v2133, %v2245
    %v2247 = vpop.f32.mrf.mxu0
    %v2248 = vadd.f32 %v2135, %v2247
    %2249 = vmatprep.mubr.bf16.mxu0 %v685
    %2250 = vmatmul.mubr.bf16.gmra.mxu0 %v684
    %v2251 = vpop.f32.mrf.mxu0
    %v2252 = vadd.f32 %v2139, %v2251
    %v2253 = vpop.f32.mrf.mxu0
    %v2254 = vadd.f32 %v2141, %v2253
    %v2255 = vpop.f32.mrf.mxu0
    %v2256 = vadd.f32 %v2143, %v2255
    %v2257 = vpop.f32.mrf.mxu0
    %v2258 = vadd.f32 %v2145, %v2257
    %2259 = vdwg.mxu0
    %2260 = vmatprep.subr.bf16.mxu0 %v1679
    %2261 = vmatpush1.bf16.msra.mxu0 %v1678
    %2262 = vmatprep.subr.bf16.mxu0 %v1675
    %2263 = vmatpush1.bf16.msra.mxu0 %v1674
    %2264 = vmatprep.subr.bf16.mxu0 %v1671
    %2265 = vmatpush1.bf16.msra.mxu0 %v1670
    %2266 = vmatprep.subr.bf16.mxu0 %v1667
    %2267 = vmatpush1.bf16.msra.mxu0 %v1666
    %2268 = vmatprep.subr.bf16.mxu0 %v1663
    %2269 = vmatpush1.bf16.msra.mxu0 %v1662
    %2270 = vmatprep.subr.bf16.mxu0 %v1659
    %2271 = vmatpush1.bf16.msra.mxu0 %v1658
    %2272 = vmatprep.subr.bf16.mxu0 %v1655
    %2273 = vmatpush1.bf16.msra.mxu0 %v1654
    %2274 = vmatprep.subr.bf16.mxu0 %v1651
    %2275 = vmatpush1.bf16.msra.mxu0 %v1650
    %2276 = vmatprep.subr.bf16.mxu0 %v1711
    %2277 = vmatpush2.bf16.msra.mxu0 %v1710
    %2278 = vmatprep.subr.bf16.mxu0 %v1707
    %2279 = vmatpush2.bf16.msra.mxu0 %v1706
    %2280 = vmatprep.subr.bf16.mxu0 %v1703
    %2281 = vmatpush2.bf16.msra.mxu0 %v1702
    %2282 = vmatprep.subr.bf16.mxu0 %v1699
    %2283 = vmatpush2.bf16.msra.mxu0 %v1698
    %2284 = vmatprep.subr.bf16.mxu0 %v1695
    %2285 = vmatpush2.bf16.msra.mxu0 %v1694
    %2286 = vmatprep.subr.bf16.mxu0 %v1691
    %2287 = vmatpush2.bf16.msra.mxu0 %v1690
    %2288 = vmatprep.subr.bf16.mxu0 %v1687
    %2289 = vmatpush2.bf16.msra.mxu0 %v1686
    %2290 = vmatprep.subr.bf16.mxu0 %v1683
    %2291 = vmatpush2.bf16.msra.mxu0 %v1682
    %2292 = vmatprep.mubr.bf16.mxu0 %v631
    %2293 = vmatmul.mubr.bf16.gmra.mxu0 %v630
    %v2294 = vpop.f32.mrf.mxu0
    %v2295 = vadd.f32 %v2182, %v2294
    %v2296 = vpop.f32.mrf.mxu0
    %v2297 = vadd.f32 %v2184, %v2296
    %v2298 = vpop.f32.mrf.mxu0
    %v2299 = vadd.f32 %v2186, %v2298
    %v2300 = vpop.f32.mrf.mxu0
    %v2301 = vadd.f32 %v2188, %v2300
    %2302 = vmatprep.mubr.bf16.mxu0 %v639
    %2303 = vmatmul.mubr.bf16.gmra.mxu0 %v638
    %v2304 = vpop.f32.mrf.mxu0
    %v2305 = vadd.f32 %v2192, %v2304
    %v2306 = vpop.f32.mrf.mxu0
    %v2307 = vadd.f32 %v2194, %v2306
    %v2308 = vpop.f32.mrf.mxu0
    %v2309 = vadd.f32 %v2196, %v2308
    %v2310 = vpop.f32.mrf.mxu0
    %v2311 = vadd.f32 %v2198, %v2310
    %2312 = vmatprep.mubr.bf16.mxu0 %v647
    %2313 = vmatmul.mubr.bf16.gmra.mxu0 %v646
    %v2314 = vpop.f32.mrf.mxu0
    %v2315 = vadd.f32 %v2202, %v2314
    %v2316 = vpop.f32.mrf.mxu0
    %v2317 = vadd.f32 %v2204, %v2316
    %v2318 = vpop.f32.mrf.mxu0
    %v2319 = vadd.f32 %v2206, %v2318
    %v2320 = vpop.f32.mrf.mxu0
    %v2321 = vadd.f32 %v2208, %v2320
    %2322 = vmatprep.mubr.bf16.mxu0 %v655
    %2323 = vmatmul.mubr.bf16.gmra.mxu0 %v654
    %v2324 = vpop.f32.mrf.mxu0
    %v2325 = vadd.f32 %v2212, %v2324
    %v2326 = vpop.f32.mrf.mxu0
    %v2327 = vadd.f32 %v2214, %v2326
    %v2328 = vpop.f32.mrf.mxu0
    %v2329 = vadd.f32 %v2216, %v2328
    %v2330 = vpop.f32.mrf.mxu0
    %v2331 = vadd.f32 %v2218, %v2330
    %2332 = vmatprep.mubr.bf16.mxu0 %v663
    %2333 = vmatmul.mubr.bf16.gmra.mxu0 %v662
    %v2334 = vpop.f32.mrf.mxu0
    %v2335 = vadd.f32 %v2222, %v2334
    %v2336 = vpop.f32.mrf.mxu0
    %v2337 = vadd.f32 %v2224, %v2336
    %v2338 = vpop.f32.mrf.mxu0
    %v2339 = vadd.f32 %v2226, %v2338
    %v2340 = vpop.f32.mrf.mxu0
    %v2341 = vadd.f32 %v2228, %v2340
    %2342 = vmatprep.mubr.bf16.mxu0 %v671
    %2343 = vmatmul.mubr.bf16.gmra.mxu0 %v670
    %v2344 = vpop.f32.mrf.mxu0
    %v2345 = vadd.f32 %v2232, %v2344
    %v2346 = vpop.f32.mrf.mxu0
    %v2347 = vadd.f32 %v2234, %v2346
    %v2348 = vpop.f32.mrf.mxu0
    %v2349 = vadd.f32 %v2236, %v2348
    %v2350 = vpop.f32.mrf.mxu0
    %v2351 = vadd.f32 %v2238, %v2350
    %2352 = vmatprep.mubr.bf16.mxu0 %v679
    %2353 = vmatmul.mubr.bf16.gmra.mxu0 %v678
    %v2354 = vpop.f32.mrf.mxu0
    %v2355 = vadd.f32 %v2242, %v2354
    %v2356 = vpop.f32.mrf.mxu0
    %v2357 = vadd.f32 %v2244, %v2356
    %v2358 = vpop.f32.mrf.mxu0
    %v2359 = vadd.f32 %v2246, %v2358
    %v2360 = vpop.f32.mrf.mxu0
    %v2361 = vadd.f32 %v2248, %v2360
    %2362 = vmatprep.mubr.bf16.mxu0 %v687
    %2363 = vmatmul.mubr.bf16.gmra.mxu0 %v686
    %v2364 = vpop.f32.mrf.mxu0
    %v2365 = vadd.f32 %v2252, %v2364
    %v2366 = vpop.f32.mrf.mxu0
    %v2367 = vadd.f32 %v2254, %v2366
    %v2368 = vpop.f32.mrf.mxu0
    %v2369 = vadd.f32 %v2256, %v2368
    %v2370 = vpop.f32.mrf.mxu0
    %v2371 = vadd.f32 %v2258, %v2370
    %2372 = vdwg.mxu0
    %2373 = vmatprep.subr.bf16.mxu0 %v1743
    %2374 = vmatpush1.bf16.msra.mxu0 %v1742
    %2375 = vmatprep.subr.bf16.mxu0 %v1739
    %2376 = vmatpush1.bf16.msra.mxu0 %v1738
    %2377 = vmatprep.subr.bf16.mxu0 %v1735
    %2378 = vmatpush1.bf16.msra.mxu0 %v1734
    %2379 = vmatprep.subr.bf16.mxu0 %v1731
    %2380 = vmatpush1.bf16.msra.mxu0 %v1730
    %2381 = vmatprep.subr.bf16.mxu0 %v1727
    %2382 = vmatpush1.bf16.msra.mxu0 %v1726
    %2383 = vmatprep.subr.bf16.mxu0 %v1723
    %2384 = vmatpush1.bf16.msra.mxu0 %v1722
    %2385 = vmatprep.subr.bf16.mxu0 %v1719
    %2386 = vmatpush1.bf16.msra.mxu0 %v1718
    %2387 = vmatprep.subr.bf16.mxu0 %v1715
    %2388 = vmatpush1.bf16.msra.mxu0 %v1714
    %2389 = vmatprep.subr.bf16.mxu0 %v1775
    %2390 = vmatpush2.bf16.msra.mxu0 %v1774
    %2391 = vmatprep.subr.bf16.mxu0 %v1771
    %2392 = vmatpush2.bf16.msra.mxu0 %v1770
    %2393 = vmatprep.subr.bf16.mxu0 %v1767
    %2394 = vmatpush2.bf16.msra.mxu0 %v1766
    %2395 = vmatprep.subr.bf16.mxu0 %v1763
    %2396 = vmatpush2.bf16.msra.mxu0 %v1762
    %2397 = vmatprep.subr.bf16.mxu0 %v1759
    %2398 = vmatpush2.bf16.msra.mxu0 %v1758
    %2399 = vmatprep.subr.bf16.mxu0 %v1755
    %2400 = vmatpush2.bf16.msra.mxu0 %v1754
    %2401 = vmatprep.subr.bf16.mxu0 %v1751
    %2402 = vmatpush2.bf16.msra.mxu0 %v1750
    %2403 = vmatprep.subr.bf16.mxu0 %v1747
    %2404 = vmatpush2.bf16.msra.mxu0 %v1746
    %2405 = vmatprep.mubr.bf16.mxu0 %v633
    %2406 = vmatmul.mubr.bf16.gmra.mxu0 %v632
    %v2407 = vpop.f32.mrf.mxu0
    %v2408 = vadd.f32 %v2295, %v2407
    %v2409 = vpop.f32.mrf.mxu0
    %v2410 = vadd.f32 %v2297, %v2409
    %v2411 = vpop.f32.mrf.mxu0
    %v2412 = vadd.f32 %v2299, %v2411
    %v2413 = vpop.f32.mrf.mxu0
    %v2414 = vadd.f32 %v2301, %v2413
    %2415 = vmatprep.mubr.bf16.mxu0 %v641
    %2416 = vmatmul.mubr.bf16.gmra.mxu0 %v640
    %v2417 = vpop.f32.mrf.mxu0
    %v2418 = vadd.f32 %v2305, %v2417
    %v2419 = vpop.f32.mrf.mxu0
    %v2420 = vadd.f32 %v2307, %v2419
    %v2421 = vpop.f32.mrf.mxu0
    %v2422 = vadd.f32 %v2309, %v2421
    %v2423 = vpop.f32.mrf.mxu0
    %v2424 = vadd.f32 %v2311, %v2423
    %2425 = vmatprep.mubr.bf16.mxu0 %v649
    %2426 = vmatmul.mubr.bf16.gmra.mxu0 %v648
    %v2427 = vpop.f32.mrf.mxu0
    %v2428 = vadd.f32 %v2315, %v2427
    %v2429 = vpop.f32.mrf.mxu0
    %v2430 = vadd.f32 %v2317, %v2429
    %v2431 = vpop.f32.mrf.mxu0
    %v2432 = vadd.f32 %v2319, %v2431
    %v2433 = vpop.f32.mrf.mxu0
    %v2434 = vadd.f32 %v2321, %v2433
    %2435 = vmatprep.mubr.bf16.mxu0 %v657
    %2436 = vmatmul.mubr.bf16.gmra.mxu0 %v656
    %v2437 = vpop.f32.mrf.mxu0
    %v2438 = vadd.f32 %v2325, %v2437
    %v2439 = vpop.f32.mrf.mxu0
    %v2440 = vadd.f32 %v2327, %v2439
    %v2441 = vpop.f32.mrf.mxu0
    %v2442 = vadd.f32 %v2329, %v2441
    %v2443 = vpop.f32.mrf.mxu0
    %v2444 = vadd.f32 %v2331, %v2443
    %2445 = vmatprep.mubr.bf16.mxu0 %v665
    %2446 = vmatmul.mubr.bf16.gmra.mxu0 %v664
    %v2447 = vpop.f32.mrf.mxu0
    %v2448 = vadd.f32 %v2335, %v2447
    %v2449 = vpop.f32.mrf.mxu0
    %v2450 = vadd.f32 %v2337, %v2449
    %v2451 = vpop.f32.mrf.mxu0
    %v2452 = vadd.f32 %v2339, %v2451
    %v2453 = vpop.f32.mrf.mxu0
    %v2454 = vadd.f32 %v2341, %v2453
    %2455 = vmatprep.mubr.bf16.mxu0 %v673
    %2456 = vmatmul.mubr.bf16.gmra.mxu0 %v672
    %v2457 = vpop.f32.mrf.mxu0
    %v2458 = vadd.f32 %v2345, %v2457
    %v2459 = vpop.f32.mrf.mxu0
    %v2460 = vadd.f32 %v2347, %v2459
    %v2461 = vpop.f32.mrf.mxu0
    %v2462 = vadd.f32 %v2349, %v2461
    %v2463 = vpop.f32.mrf.mxu0
    %v2464 = vadd.f32 %v2351, %v2463
    %2465 = vmatprep.mubr.bf16.mxu0 %v681
    %2466 = vmatmul.mubr.bf16.gmra.mxu0 %v680
    %v2467 = vpop.f32.mrf.mxu0
    %v2468 = vadd.f32 %v2355, %v2467
    %v2469 = vpop.f32.mrf.mxu0
    %v2470 = vadd.f32 %v2357, %v2469
    %v2471 = vpop.f32.mrf.mxu0
    %v2472 = vadd.f32 %v2359, %v2471
    %v2473 = vpop.f32.mrf.mxu0
    %v2474 = vadd.f32 %v2361, %v2473
    %2475 = vmatprep.mubr.bf16.mxu0 %v689
    %2476 = vmatmul.mubr.bf16.gmra.mxu0 %v688
    %v2477 = vpop.f32.mrf.mxu0
    %v2478 = vadd.f32 %v2365, %v2477
    %v2479 = vpop.f32.mrf.mxu0
    %v2480 = vadd.f32 %v2367, %v2479
    %v2481 = vpop.f32.mrf.mxu0
    %v2482 = vadd.f32 %v2369, %v2481
    %v2483 = vpop.f32.mrf.mxu0
    %v2484 = vadd.f32 %v2371, %v2483
    %2485 = vdwg.mxu0
    %2486 = vmatprep.subr.bf16.mxu0 %v1553
    %2487 = vmatpush1.bf16.msra.mxu0 %v1552
    %2488 = vmatprep.subr.bf16.mxu0 %v1549
    %2489 = vmatpush1.bf16.msra.mxu0 %v1548
    %2490 = vmatprep.subr.bf16.mxu0 %v1545
    %2491 = vmatpush1.bf16.msra.mxu0 %v1544
    %2492 = vmatprep.subr.bf16.mxu0 %v1541
    %2493 = vmatpush1.bf16.msra.mxu0 %v1540
    %2494 = vmatprep.subr.bf16.mxu0 %v1537
    %2495 = vmatpush1.bf16.msra.mxu0 %v1536
    %2496 = vmatprep.subr.bf16.mxu0 %v1533
    %2497 = vmatpush1.bf16.msra.mxu0 %v1532
    %2498 = vmatprep.subr.bf16.mxu0 %v1529
    %2499 = vmatpush1.bf16.msra.mxu0 %v1528
    %2500 = vmatprep.subr.bf16.mxu0 %v1525
    %2501 = vmatpush1.bf16.msra.mxu0 %v1524
    %2502 = vmatprep.subr.bf16.mxu0 %v1585
    %2503 = vmatpush2.bf16.msra.mxu0 %v1584
    %2504 = vmatprep.subr.bf16.mxu0 %v1581
    %2505 = vmatpush2.bf16.msra.mxu0 %v1580
    %2506 = vmatprep.subr.bf16.mxu0 %v1577
    %2507 = vmatpush2.bf16.msra.mxu0 %v1576
    %2508 = vmatprep.subr.bf16.mxu0 %v1573
    %2509 = vmatpush2.bf16.msra.mxu0 %v1572
    %2510 = vmatprep.subr.bf16.mxu0 %v1569
    %2511 = vmatpush2.bf16.msra.mxu0 %v1568
    %2512 = vmatprep.subr.bf16.mxu0 %v1565
    %2513 = vmatpush2.bf16.msra.mxu0 %v1564
    %2514 = vmatprep.subr.bf16.mxu0 %v1561
    %2515 = vmatpush2.bf16.msra.mxu0 %v1560
    %2516 = vmatprep.subr.bf16.mxu0 %v1557
    %2517 = vmatpush2.bf16.msra.mxu0 %v1556
    %2518 = vmatprep.mubr.bf16.mxu0 %v627
    %2519 = vmatmul.mubr.bf16.gmra.mxu0 %v626
    %v2520 = vpop.f32.mrf.mxu0
    %v2521 = vadd.f32 %v425, %v2520
    %v2522 = vpop.f32.mrf.mxu0
    %v2523 = vadd.f32 %v429, %v2522
    %v2524 = vpop.f32.mrf.mxu0
    %v2525 = vadd.f32 %v425, %v2524
    %v2526 = vpop.f32.mrf.mxu0
    %v2527 = vadd.f32 %v429, %v2526
    %2528 = vmatprep.mubr.bf16.mxu0 %v635
    %2529 = vmatmul.mubr.bf16.gmra.mxu0 %v634
    %v2530 = vpop.f32.mrf.mxu0
    %v2531 = vadd.f32 %v425, %v2530
    %v2532 = vpop.f32.mrf.mxu0
    %v2533 = vadd.f32 %v429, %v2532
    %v2534 = vpop.f32.mrf.mxu0
    %v2535 = vadd.f32 %v425, %v2534
    %v2536 = vpop.f32.mrf.mxu0
    %v2537 = vadd.f32 %v429, %v2536
    %2538 = vmatprep.mubr.bf16.mxu0 %v643
    %2539 = vmatmul.mubr.bf16.gmra.mxu0 %v642
    %v2540 = vpop.f32.mrf.mxu0
    %v2541 = vadd.f32 %v425, %v2540
    %v2542 = vpop.f32.mrf.mxu0
    %v2543 = vadd.f32 %v429, %v2542
    %v2544 = vpop.f32.mrf.mxu0
    %v2545 = vadd.f32 %v425, %v2544
    %v2546 = vpop.f32.mrf.mxu0
    %v2547 = vadd.f32 %v429, %v2546
    %2548 = vmatprep.mubr.bf16.mxu0 %v651
    %2549 = vmatmul.mubr.bf16.gmra.mxu0 %v650
    %v2550 = vpop.f32.mrf.mxu0
    %v2551 = vadd.f32 %v425, %v2550
    %v2552 = vpop.f32.mrf.mxu0
    %v2553 = vadd.f32 %v429, %v2552
    %v2554 = vpop.f32.mrf.mxu0
    %v2555 = vadd.f32 %v425, %v2554
    %v2556 = vpop.f32.mrf.mxu0
    %v2557 = vadd.f32 %v429, %v2556
    %2558 = vmatprep.mubr.bf16.mxu0 %v659
    %2559 = vmatmul.mubr.bf16.gmra.mxu0 %v658
    %v2560 = vpop.f32.mrf.mxu0
    %v2561 = vadd.f32 %v425, %v2560
    %v2562 = vpop.f32.mrf.mxu0
    %v2563 = vadd.f32 %v429, %v2562
    %v2564 = vpop.f32.mrf.mxu0
    %v2565 = vadd.f32 %v425, %v2564
    %v2566 = vpop.f32.mrf.mxu0
    %v2567 = vadd.f32 %v429, %v2566
    %2568 = vmatprep.mubr.bf16.mxu0 %v667
    %2569 = vmatmul.mubr.bf16.gmra.mxu0 %v666
    %v2570 = vpop.f32.mrf.mxu0
    %v2571 = vadd.f32 %v425, %v2570
    %v2572 = vpop.f32.mrf.mxu0
    %v2573 = vadd.f32 %v429, %v2572
    %v2574 = vpop.f32.mrf.mxu0
    %v2575 = vadd.f32 %v425, %v2574
    %v2576 = vpop.f32.mrf.mxu0
    %v2577 = vadd.f32 %v429, %v2576
    %2578 = vmatprep.mubr.bf16.mxu0 %v675
    %2579 = vmatmul.mubr.bf16.gmra.mxu0 %v674
    %v2580 = vpop.f32.mrf.mxu0
    %v2581 = vadd.f32 %v425, %v2580
    %v2582 = vpop.f32.mrf.mxu0
    %v2583 = vadd.f32 %v429, %v2582
    %v2584 = vpop.f32.mrf.mxu0
    %v2585 = vadd.f32 %v425, %v2584
    %v2586 = vpop.f32.mrf.mxu0
    %v2587 = vadd.f32 %v429, %v2586
    %2588 = vmatprep.mubr.bf16.mxu0 %v683
    %2589 = vmatmul.mubr.bf16.gmra.mxu0 %v682
    %v2590 = vpop.f32.mrf.mxu0
    %v2591 = vadd.f32 %v425, %v2590
    %v2592 = vpop.f32.mrf.mxu0
    %v2593 = vadd.f32 %v429, %v2592
    %v2594 = vpop.f32.mrf.mxu0
    %v2595 = vadd.f32 %v425, %v2594
    %v2596 = vpop.f32.mrf.mxu0
    %v2597 = vadd.f32 %v429, %v2596
    %2598 = vdwg.mxu0
    %2599 = vmatprep.subr.bf16.mxu0 %v1617
    %2600 = vmatpush1.bf16.msra.mxu0 %v1616
    %2601 = vmatprep.subr.bf16.mxu0 %v1613
    %2602 = vmatpush1.bf16.msra.mxu0 %v1612
    %2603 = vmatprep.subr.bf16.mxu0 %v1609
    %2604 = vmatpush1.bf16.msra.mxu0 %v1608
    %2605 = vmatprep.subr.bf16.mxu0 %v1605
    %2606 = vmatpush1.bf16.msra.mxu0 %v1604
    %2607 = vmatprep.subr.bf16.mxu0 %v1601
    %2608 = vmatpush1.bf16.msra.mxu0 %v1600
    %2609 = vmatprep.subr.bf16.mxu0 %v1597
    %2610 = vmatpush1.bf16.msra.mxu0 %v1596
    %2611 = vmatprep.subr.bf16.mxu0 %v1593
    %2612 = vmatpush1.bf16.msra.mxu0 %v1592
    %2613 = vmatprep.subr.bf16.mxu0 %v1589
    %2614 = vmatpush1.bf16.msra.mxu0 %v1588
    %2615 = vmatprep.subr.bf16.mxu0 %v1649
    %2616 = vmatpush2.bf16.msra.mxu0 %v1648
    %2617 = vmatprep.subr.bf16.mxu0 %v1645
    %2618 = vmatpush2.bf16.msra.mxu0 %v1644
    %2619 = vmatprep.subr.bf16.mxu0 %v1641
    %2620 = vmatpush2.bf16.msra.mxu0 %v1640
    %2621 = vmatprep.subr.bf16.mxu0 %v1637
    %2622 = vmatpush2.bf16.msra.mxu0 %v1636
    %2623 = vmatprep.subr.bf16.mxu0 %v1633
    %2624 = vmatpush2.bf16.msra.mxu0 %v1632
    %2625 = vmatprep.subr.bf16.mxu0 %v1629
    %2626 = vmatpush2.bf16.msra.mxu0 %v1628
    %2627 = vmatprep.subr.bf16.mxu0 %v1625
    %2628 = vmatpush2.bf16.msra.mxu0 %v1624
    %2629 = vmatprep.subr.bf16.mxu0 %v1621
    %2630 = vmatpush2.bf16.msra.mxu0 %v1620
    %2631 = vmatprep.mubr.bf16.mxu0 %v629
    %2632 = vmatmul.mubr.bf16.gmra.mxu0 %v628
    %v2633 = vpop.f32.mrf.mxu0
    %v2634 = vadd.f32 %v2521, %v2633
    %v2635 = vpop.f32.mrf.mxu0
    %v2636 = vadd.f32 %v2523, %v2635
    %v2637 = vpop.f32.mrf.mxu0
    %v2638 = vadd.f32 %v2525, %v2637
    %v2639 = vpop.f32.mrf.mxu0
    %v2640 = vadd.f32 %v2527, %v2639
    %2641 = vmatprep.mubr.bf16.mxu0 %v637
    %2642 = vmatmul.mubr.bf16.gmra.mxu0 %v636
    %v2643 = vpop.f32.mrf.mxu0
    %v2644 = vadd.f32 %v2531, %v2643
    %v2645 = vpop.f32.mrf.mxu0
    %v2646 = vadd.f32 %v2533, %v2645
    %v2647 = vpop.f32.mrf.mxu0
    %v2648 = vadd.f32 %v2535, %v2647
    %v2649 = vpop.f32.mrf.mxu0
    %v2650 = vadd.f32 %v2537, %v2649
    %2651 = vmatprep.mubr.bf16.mxu0 %v645
    %2652 = vmatmul.mubr.bf16.gmra.mxu0 %v644
    %v2653 = vpop.f32.mrf.mxu0
    %v2654 = vadd.f32 %v2541, %v2653
    %v2655 = vpop.f32.mrf.mxu0
    %v2656 = vadd.f32 %v2543, %v2655
    %v2657 = vpop.f32.mrf.mxu0
    %v2658 = vadd.f32 %v2545, %v2657
    %v2659 = vpop.f32.mrf.mxu0
    %v2660 = vadd.f32 %v2547, %v2659
    %2661 = vmatprep.mubr.bf16.mxu0 %v653
    %2662 = vmatmul.mubr.bf16.gmra.mxu0 %v652
    %v2663 = vpop.f32.mrf.mxu0
    %v2664 = vadd.f32 %v2551, %v2663
    %v2665 = vpop.f32.mrf.mxu0
    %v2666 = vadd.f32 %v2553, %v2665
    %v2667 = vpop.f32.mrf.mxu0
    %v2668 = vadd.f32 %v2555, %v2667
    %v2669 = vpop.f32.mrf.mxu0
    %v2670 = vadd.f32 %v2557, %v2669
    %2671 = vmatprep.mubr.bf16.mxu0 %v661
    %2672 = vmatmul.mubr.bf16.gmra.mxu0 %v660
    %v2673 = vpop.f32.mrf.mxu0
    %v2674 = vadd.f32 %v2561, %v2673
    %v2675 = vpop.f32.mrf.mxu0
    %v2676 = vadd.f32 %v2563, %v2675
    %v2677 = vpop.f32.mrf.mxu0
    %v2678 = vadd.f32 %v2565, %v2677
    %v2679 = vpop.f32.mrf.mxu0
    %v2680 = vadd.f32 %v2567, %v2679
    %2681 = vmatprep.mubr.bf16.mxu0 %v669
    %2682 = vmatmul.mubr.bf16.gmra.mxu0 %v668
    %v2683 = vpop.f32.mrf.mxu0
    %v2684 = vadd.f32 %v2571, %v2683
    %v2685 = vpop.f32.mrf.mxu0
    %v2686 = vadd.f32 %v2573, %v2685
    %v2687 = vpop.f32.mrf.mxu0
    %v2688 = vadd.f32 %v2575, %v2687
    %v2689 = vpop.f32.mrf.mxu0
    %v2690 = vadd.f32 %v2577, %v2689
    %2691 = vmatprep.mubr.bf16.mxu0 %v677
    %2692 = vmatmul.mubr.bf16.gmra.mxu0 %v676
    %v2693 = vpop.f32.mrf.mxu0
    %v2694 = vadd.f32 %v2581, %v2693
    %v2695 = vpop.f32.mrf.mxu0
    %v2696 = vadd.f32 %v2583, %v2695
    %v2697 = vpop.f32.mrf.mxu0
    %v2698 = vadd.f32 %v2585, %v2697
    %v2699 = vpop.f32.mrf.mxu0
    %v2700 = vadd.f32 %v2587, %v2699
    %2701 = vmatprep.mubr.bf16.mxu0 %v685
    %2702 = vmatmul.mubr.bf16.gmra.mxu0 %v684
    %v2703 = vpop.f32.mrf.mxu0
    %v2704 = vadd.f32 %v2591, %v2703
    %v2705 = vpop.f32.mrf.mxu0
    %v2706 = vadd.f32 %v2593, %v2705
    %v2707 = vpop.f32.mrf.mxu0
    %v2708 = vadd.f32 %v2595, %v2707
    %v2709 = vpop.f32.mrf.mxu0
    %v2710 = vadd.f32 %v2597, %v2709
    %2711 = vdwg.mxu0
    %2712 = vmatprep.subr.bf16.mxu0 %v1681
    %2713 = vmatpush1.bf16.msra.mxu0 %v1680
    %2714 = vmatprep.subr.bf16.mxu0 %v1677
    %2715 = vmatpush1.bf16.msra.mxu0 %v1676
    %2716 = vmatprep.subr.bf16.mxu0 %v1673
    %2717 = vmatpush1.bf16.msra.mxu0 %v1672
    %2718 = vmatprep.subr.bf16.mxu0 %v1669
    %2719 = vmatpush1.bf16.msra.mxu0 %v1668
    %2720 = vmatprep.subr.bf16.mxu0 %v1665
    %2721 = vmatpush1.bf16.msra.mxu0 %v1664
    %2722 = vmatprep.subr.bf16.mxu0 %v1661
    %2723 = vmatpush1.bf16.msra.mxu0 %v1660
    %2724 = vmatprep.subr.bf16.mxu0 %v1657
    %2725 = vmatpush1.bf16.msra.mxu0 %v1656
    %2726 = vmatprep.subr.bf16.mxu0 %v1653
    %2727 = vmatpush1.bf16.msra.mxu0 %v1652
    %2728 = vmatprep.subr.bf16.mxu0 %v1713
    %2729 = vmatpush2.bf16.msra.mxu0 %v1712
    %2730 = vmatprep.subr.bf16.mxu0 %v1709
    %2731 = vmatpush2.bf16.msra.mxu0 %v1708
    %2732 = vmatprep.subr.bf16.mxu0 %v1705
    %2733 = vmatpush2.bf16.msra.mxu0 %v1704
    %2734 = vmatprep.subr.bf16.mxu0 %v1701
    %2735 = vmatpush2.bf16.msra.mxu0 %v1700
    %2736 = vmatprep.subr.bf16.mxu0 %v1697
    %2737 = vmatpush2.bf16.msra.mxu0 %v1696
    %2738 = vmatprep.subr.bf16.mxu0 %v1693
    %2739 = vmatpush2.bf16.msra.mxu0 %v1692
    %2740 = vmatprep.subr.bf16.mxu0 %v1689
    %2741 = vmatpush2.bf16.msra.mxu0 %v1688
    %2742 = vmatprep.subr.bf16.mxu0 %v1685
    %2743 = vmatpush2.bf16.msra.mxu0 %v1684
    %2744 = vmatprep.mubr.bf16.mxu0 %v631
    %2745 = vmatmul.mubr.bf16.gmra.mxu0 %v630
    %v2746 = vpop.f32.mrf.mxu0
    %v2747 = vadd.f32 %v2634, %v2746
    %v2748 = vpop.f32.mrf.mxu0
    %v2749 = vadd.f32 %v2636, %v2748
    %v2750 = vpop.f32.mrf.mxu0
    %v2751 = vadd.f32 %v2638, %v2750
    %v2752 = vpop.f32.mrf.mxu0
    %v2753 = vadd.f32 %v2640, %v2752
    %2754 = vmatprep.mubr.bf16.mxu0 %v639
    %2755 = vmatmul.mubr.bf16.gmra.mxu0 %v638
    %v2756 = vpop.f32.mrf.mxu0
    %v2757 = vadd.f32 %v2644, %v2756
    %v2758 = vpop.f32.mrf.mxu0
    %v2759 = vadd.f32 %v2646, %v2758
    %v2760 = vpop.f32.mrf.mxu0
    %v2761 = vadd.f32 %v2648, %v2760
    %v2762 = vpop.f32.mrf.mxu0
    %v2763 = vadd.f32 %v2650, %v2762
    %2764 = vmatprep.mubr.bf16.mxu0 %v647
    %2765 = vmatmul.mubr.bf16.gmra.mxu0 %v646
    %v2766 = vpop.f32.mrf.mxu0
    %v2767 = vadd.f32 %v2654, %v2766
    %v2768 = vpop.f32.mrf.mxu0
    %v2769 = vadd.f32 %v2656, %v2768
    %v2770 = vpop.f32.mrf.mxu0
    %v2771 = vadd.f32 %v2658, %v2770
    %v2772 = vpop.f32.mrf.mxu0
    %v2773 = vadd.f32 %v2660, %v2772
    %2774 = vmatprep.mubr.bf16.mxu0 %v655
    %2775 = vmatmul.mubr.bf16.gmra.mxu0 %v654
    %v2776 = vpop.f32.mrf.mxu0
    %v2777 = vadd.f32 %v2664, %v2776
    %v2778 = vpop.f32.mrf.mxu0
    %v2779 = vadd.f32 %v2666, %v2778
    %v2780 = vpop.f32.mrf.mxu0
    %v2781 = vadd.f32 %v2668, %v2780
    %v2782 = vpop.f32.mrf.mxu0
    %v2783 = vadd.f32 %v2670, %v2782
    %2784 = vmatprep.mubr.bf16.mxu0 %v663
    %2785 = vmatmul.mubr.bf16.gmra.mxu0 %v662
    %v2786 = vpop.f32.mrf.mxu0
    %v2787 = vadd.f32 %v2674, %v2786
    %v2788 = vpop.f32.mrf.mxu0
    %v2789 = vadd.f32 %v2676, %v2788
    %v2790 = vpop.f32.mrf.mxu0
    %v2791 = vadd.f32 %v2678, %v2790
    %v2792 = vpop.f32.mrf.mxu0
    %v2793 = vadd.f32 %v2680, %v2792
    %2794 = vmatprep.mubr.bf16.mxu0 %v671
    %2795 = vmatmul.mubr.bf16.gmra.mxu0 %v670
    %v2796 = vpop.f32.mrf.mxu0
    %v2797 = vadd.f32 %v2684, %v2796
    %v2798 = vpop.f32.mrf.mxu0
    %v2799 = vadd.f32 %v2686, %v2798
    %v2800 = vpop.f32.mrf.mxu0
    %v2801 = vadd.f32 %v2688, %v2800
    %v2802 = vpop.f32.mrf.mxu0
    %v2803 = vadd.f32 %v2690, %v2802
    %2804 = vmatprep.mubr.bf16.mxu0 %v679
    %2805 = vmatmul.mubr.bf16.gmra.mxu0 %v678
    %v2806 = vpop.f32.mrf.mxu0
    %v2807 = vadd.f32 %v2694, %v2806
    %v2808 = vpop.f32.mrf.mxu0
    %v2809 = vadd.f32 %v2696, %v2808
    %v2810 = vpop.f32.mrf.mxu0
    %v2811 = vadd.f32 %v2698, %v2810
    %v2812 = vpop.f32.mrf.mxu0
    %v2813 = vadd.f32 %v2700, %v2812
    %2814 = vmatprep.mubr.bf16.mxu0 %v687
    %2815 = vmatmul.mubr.bf16.gmra.mxu0 %v686
    %v2816 = vpop.f32.mrf.mxu0
    %v2817 = vadd.f32 %v2704, %v2816
    %v2818 = vpop.f32.mrf.mxu0
    %v2819 = vadd.f32 %v2706, %v2818
    %v2820 = vpop.f32.mrf.mxu0
    %v2821 = vadd.f32 %v2708, %v2820
    %v2822 = vpop.f32.mrf.mxu0
    %v2823 = vadd.f32 %v2710, %v2822
    %2824 = vdwg.mxu0
    %2825 = vmatprep.subr.bf16.mxu0 %v1745
    %2826 = vmatpush1.bf16.msra.mxu0 %v1744
    %2827 = vmatprep.subr.bf16.mxu0 %v1741
    %2828 = vmatpush1.bf16.msra.mxu0 %v1740
    %2829 = vmatprep.subr.bf16.mxu0 %v1737
    %2830 = vmatpush1.bf16.msra.mxu0 %v1736
    %2831 = vmatprep.subr.bf16.mxu0 %v1733
    %2832 = vmatpush1.bf16.msra.mxu0 %v1732
    %2833 = vmatprep.subr.bf16.mxu0 %v1729
    %2834 = vmatpush1.bf16.msra.mxu0 %v1728
    %2835 = vmatprep.subr.bf16.mxu0 %v1725
    %2836 = vmatpush1.bf16.msra.mxu0 %v1724
    %2837 = vmatprep.subr.bf16.mxu0 %v1721
    %2838 = vmatpush1.bf16.msra.mxu0 %v1720
    %2839 = vmatprep.subr.bf16.mxu0 %v1717
    %2840 = vmatpush1.bf16.msra.mxu0 %v1716
    %2841 = vmatprep.subr.bf16.mxu0 %v1777
    %2842 = vmatpush2.bf16.msra.mxu0 %v1776
    %2843 = vmatprep.subr.bf16.mxu0 %v1773
    %2844 = vmatpush2.bf16.msra.mxu0 %v1772
    %2845 = vmatprep.subr.bf16.mxu0 %v1769
    %2846 = vmatpush2.bf16.msra.mxu0 %v1768
    %2847 = vmatprep.subr.bf16.mxu0 %v1765
    %2848 = vmatpush2.bf16.msra.mxu0 %v1764
    %2849 = vmatprep.subr.bf16.mxu0 %v1761
    %2850 = vmatpush2.bf16.msra.mxu0 %v1760
    %2851 = vmatprep.subr.bf16.mxu0 %v1757
    %2852 = vmatpush2.bf16.msra.mxu0 %v1756
    %2853 = vmatprep.subr.bf16.mxu0 %v1753
    %2854 = vmatpush2.bf16.msra.mxu0 %v1752
    %2855 = vmatprep.subr.bf16.mxu0 %v1749
    %2856 = vmatpush2.bf16.msra.mxu0 %v1748
    %2857 = vmatprep.mubr.bf16.mxu0 %v633
    %2858 = vmatmul.mubr.bf16.gmra.mxu0 %v632
    %v2859 = vpop.f32.mrf.mxu0
    %v2860 = vadd.f32 %v2747, %v2859
    %v2861 = vpop.f32.mrf.mxu0
    %v2862 = vadd.f32 %v2749, %v2861
    %v2863 = vpop.f32.mrf.mxu0
    %v2864 = vadd.f32 %v2751, %v2863
    %v2865 = vpop.f32.mrf.mxu0
    %v2866 = vadd.f32 %v2753, %v2865
    %2867 = vmatprep.mubr.bf16.mxu0 %v641
    %2868 = vmatmul.mubr.bf16.gmra.mxu0 %v640
    %v2869 = vpop.f32.mrf.mxu0
    %v2870 = vadd.f32 %v2757, %v2869
    %v2871 = vpop.f32.mrf.mxu0
    %v2872 = vadd.f32 %v2759, %v2871
    %v2873 = vpop.f32.mrf.mxu0
    %v2874 = vadd.f32 %v2761, %v2873
    %v2875 = vpop.f32.mrf.mxu0
    %v2876 = vadd.f32 %v2763, %v2875
    %2877 = vmatprep.mubr.bf16.mxu0 %v649
    %2878 = vmatmul.mubr.bf16.gmra.mxu0 %v648
    %v2879 = vpop.f32.mrf.mxu0
    %v2880 = vadd.f32 %v2767, %v2879
    %v2881 = vpop.f32.mrf.mxu0
    %v2882 = vadd.f32 %v2769, %v2881
    %v2883 = vpop.f32.mrf.mxu0
    %v2884 = vadd.f32 %v2771, %v2883
    %v2885 = vpop.f32.mrf.mxu0
    %v2886 = vadd.f32 %v2773, %v2885
    %2887 = vmatprep.mubr.bf16.mxu0 %v657
    %2888 = vmatmul.mubr.bf16.gmra.mxu0 %v656
    %v2889 = vpop.f32.mrf.mxu0
    %v2890 = vadd.f32 %v2777, %v2889
    %v2891 = vpop.f32.mrf.mxu0
    %v2892 = vadd.f32 %v2779, %v2891
    %v2893 = vpop.f32.mrf.mxu0
    %v2894 = vadd.f32 %v2781, %v2893
    %v2895 = vpop.f32.mrf.mxu0
    %v2896 = vadd.f32 %v2783, %v2895
    %2897 = vmatprep.mubr.bf16.mxu0 %v665
    %2898 = vmatmul.mubr.bf16.gmra.mxu0 %v664
    %v2899 = vpop.f32.mrf.mxu0
    %v2900 = vadd.f32 %v2787, %v2899
    %v2901 = vpop.f32.mrf.mxu0
    %v2902 = vadd.f32 %v2789, %v2901
    %v2903 = vpop.f32.mrf.mxu0
    %v2904 = vadd.f32 %v2791, %v2903
    %v2905 = vpop.f32.mrf.mxu0
    %v2906 = vadd.f32 %v2793, %v2905
    %2907 = vmatprep.mubr.bf16.mxu0 %v673
    %2908 = vmatmul.mubr.bf16.gmra.mxu0 %v672
    %v2909 = vpop.f32.mrf.mxu0
    %v2910 = vadd.f32 %v2797, %v2909
    %v2911 = vpop.f32.mrf.mxu0
    %v2912 = vadd.f32 %v2799, %v2911
    %v2913 = vpop.f32.mrf.mxu0
    %v2914 = vadd.f32 %v2801, %v2913
    %v2915 = vpop.f32.mrf.mxu0
    %v2916 = vadd.f32 %v2803, %v2915
    %2917 = vmatprep.mubr.bf16.mxu0 %v681
    %2918 = vmatmul.mubr.bf16.gmra.mxu0 %v680
    %v2919 = vpop.f32.mrf.mxu0
    %v2920 = vadd.f32 %v2807, %v2919
    %v2921 = vpop.f32.mrf.mxu0
    %v2922 = vadd.f32 %v2809, %v2921
    %v2923 = vpop.f32.mrf.mxu0
    %v2924 = vadd.f32 %v2811, %v2923
    %v2925 = vpop.f32.mrf.mxu0
    %v2926 = vadd.f32 %v2813, %v2925
    %2927 = vmatprep.mubr.bf16.mxu0 %v689
    %2928 = vmatmul.mubr.bf16.gmra.mxu0 %v688
    %v2929 = vpop.f32.mrf.mxu0
    %v2930 = vadd.f32 %v2817, %v2929
    %v2931 = vpop.f32.mrf.mxu0
    %v2932 = vadd.f32 %v2819, %v2931
    %v2933 = vpop.f32.mrf.mxu0
    %v2934 = vadd.f32 %v2821, %v2933
    %v2935 = vpop.f32.mrf.mxu0
    %v2936 = vadd.f32 %v2823, %v2935
    %2937 = vdwg.mxu0
    %v2938 = vmax.f32 %v2408, 0.0
    %v2939 = vmax.f32 %v2410, 0.0
    %v2940 = vmax.f32 %v2860, 0.0
    %v2941 = vmax.f32 %v2862, 0.0
    %v2942 = vmax.f32 %v2412, 0.0
    %v2943 = vmax.f32 %v2414, 0.0
    %v2944 = vmax.f32 %v2864, 0.0
    %v2945 = vmax.f32 %v2866, 0.0
    %v2946 = vmax.f32 %v2418, 0.0
    %v2947 = vmax.f32 %v2420, 0.0
    %v2948 = vmax.f32 %v2870, 0.0
    %v2949 = vmax.f32 %v2872, 0.0
    %v2950 = vmax.f32 %v2422, 0.0
    %v2951 = vmax.f32 %v2424, 0.0
    %v2952 = vmax.f32 %v2874, 0.0
    %v2953 = vmax.f32 %v2876, 0.0
    %v2954 = vmax.f32 %v2428, 0.0
    %v2955 = vmax.f32 %v2430, 0.0
    %v2956 = vmax.f32 %v2880, 0.0
    %v2957 = vmax.f32 %v2882, 0.0
    %v2958 = vmax.f32 %v2432, 0.0
    %v2959 = vmax.f32 %v2434, 0.0
    %v2960 = vmax.f32 %v2884, 0.0
    %v2961 = vmax.f32 %v2886, 0.0
    %v2962 = vmax.f32 %v2438, 0.0
    %v2963 = vmax.f32 %v2440, 0.0
    %v2964 = vmax.f32 %v2890, 0.0
    %v2965 = vmax.f32 %v2892, 0.0
    %v2966 = vmax.f32 %v2442, 0.0
    %v2967 = vmax.f32 %v2444, 0.0
    %v2968 = vmax.f32 %v2894, 0.0
    %v2969 = vmax.f32 %v2896, 0.0
    %v2970 = vmax.f32 %v2448, 0.0
    %v2971 = vmax.f32 %v2450, 0.0
    %v2972 = vmax.f32 %v2900, 0.0
    %v2973 = vmax.f32 %v2902, 0.0
    %v2974 = vmax.f32 %v2452, 0.0
    %v2975 = vmax.f32 %v2454, 0.0
    %v2976 = vmax.f32 %v2904, 0.0
    %v2977 = vmax.f32 %v2906, 0.0
    %v2978 = vmax.f32 %v2458, 0.0
    %v2979 = vmax.f32 %v2460, 0.0
    %v2980 = vmax.f32 %v2910, 0.0
    %v2981 = vmax.f32 %v2912, 0.0
    %v2982 = vmax.f32 %v2462, 0.0
    %v2983 = vmax.f32 %v2464, 0.0
    %v2984 = vmax.f32 %v2914, 0.0
    %v2985 = vmax.f32 %v2916, 0.0
    %v2986 = vmax.f32 %v2468, 0.0
    %v2987 = vmax.f32 %v2470, 0.0
    %v2988 = vmax.f32 %v2920, 0.0
    %v2989 = vmax.f32 %v2922, 0.0
    %v2990 = vmax.f32 %v2472, 0.0
    %v2991 = vmax.f32 %v2474, 0.0
    %v2992 = vmax.f32 %v2924, 0.0
    %v2993 = vmax.f32 %v2926, 0.0
    %v2994 = vmax.f32 %v2478, 0.0
    %v2995 = vmax.f32 %v2480, 0.0
    %v2996 = vmax.f32 %v2930, 0.0
    %v2997 = vmax.f32 %v2932, 0.0
    %v2998 = vmax.f32 %v2482, 0.0
    %v2999 = vmax.f32 %v2484, 0.0
    %v3000 = vmax.f32 %v2934, 0.0
    %v3001 = vmax.f32 %v2936, 0.0
    %v3002 = vpack.c.bf16 %v2942, %v2938
    %v3003 = vpack.c.bf16 %v2943, %v2939
    %v3004 = vpack.c.bf16 %v2944, %v2940
    %v3005 = vpack.c.bf16 %v2945, %v2941
    %v3006 = vpack.c.bf16 %v2950, %v2946
    %v3007 = vpack.c.bf16 %v2951, %v2947
    %v3008 = vpack.c.bf16 %v2952, %v2948
    %v3009 = vpack.c.bf16 %v2953, %v2949
    %v3010 = vpack.c.bf16 %v2958, %v2954
    %v3011 = vpack.c.bf16 %v2959, %v2955
    %v3012 = vpack.c.bf16 %v2960, %v2956
    %v3013 = vpack.c.bf16 %v2961, %v2957
    %v3014 = vpack.c.bf16 %v2966, %v2962
    %v3015 = vpack.c.bf16 %v2967, %v2963
    %v3016 = vpack.c.bf16 %v2968, %v2964
    %v3017 = vpack.c.bf16 %v2969, %v2965
    %v3018 = vpack.c.bf16 %v2974, %v2970
    %v3019 = vpack.c.bf16 %v2975, %v2971
    %v3020 = vpack.c.bf16 %v2976, %v2972
    %v3021 = vpack.c.bf16 %v2977, %v2973
    %v3022 = vpack.c.bf16 %v2982, %v2978
    %v3023 = vpack.c.bf16 %v2983, %v2979
    %v3024 = vpack.c.bf16 %v2984, %v2980
    %v3025 = vpack.c.bf16 %v2985, %v2981
    %v3026 = vpack.c.bf16 %v2990, %v2986
    %v3027 = vpack.c.bf16 %v2991, %v2987
    %v3028 = vpack.c.bf16 %v2992, %v2988
    %v3029 = vpack.c.bf16 %v2993, %v2989
    %v3030 = vpack.c.bf16 %v2998, %v2994
    %v3031 = vpack.c.bf16 %v2999, %v2995
    %v3032 = vpack.c.bf16 %v3000, %v2996
    %v3033 = vpack.c.bf16 %v3001, %v2997
    %v3034 = vld [vmem:[#allocation9] sm:$0xf]
    %v3035 = vld [vmem:[#allocation9 + $0x4] sm:$0xf]
    %v3036 = vld [vmem:[#allocation9 + $0x8] sm:$0xf]
    %v3037 = vld [vmem:[#allocation9 + $0xc] sm:$0xf]
    %v3038 = vld [vmem:[#allocation9 + $0x10] sm:$0xf]
    %v3039 = vld [vmem:[#allocation9 + $0x14] sm:$0xf]
    %v3040 = vld [vmem:[#allocation9 + $0x18] sm:$0xf]
    %v3041 = vld [vmem:[#allocation9 + $0x1c] sm:$0xf]
    %v3042 = vld [vmem:[#allocation9 + $0x20] sm:$0xf]
    %v3043 = vld [vmem:[#allocation9 + $0x24] sm:$0xf]
    %v3044 = vld [vmem:[#allocation9 + $0x28] sm:$0xf]
    %v3045 = vld [vmem:[#allocation9 + $0x2c] sm:$0xf]
    %v3046 = vld [vmem:[#allocation9 + $0x30] sm:$0xf]
    %v3047 = vld [vmem:[#allocation9 + $0x34] sm:$0xf]
    %v3048 = vld [vmem:[#allocation9 + $0x38] sm:$0xf]
    %v3049 = vld [vmem:[#allocation9 + $0x3c] sm:$0xf]
    %v3050 = vld [vmem:[#allocation9 + $0x40] sm:$0xf]
    %v3051 = vld [vmem:[#allocation9 + $0x44] sm:$0xf]
    %v3052 = vld [vmem:[#allocation9 + $0x48] sm:$0xf]
    %v3053 = vld [vmem:[#allocation9 + $0x4c] sm:$0xf]
    %v3054 = vld [vmem:[#allocation9 + $0x50] sm:$0xf]
    %v3055 = vld [vmem:[#allocation9 + $0x54] sm:$0xf]
    %v3056 = vld [vmem:[#allocation9 + $0x58] sm:$0xf]
    %v3057 = vld [vmem:[#allocation9 + $0x5c] sm:$0xf]
    %v3058 = vld [vmem:[#allocation9 + $0x60] sm:$0xf]
    %v3059 = vld [vmem:[#allocation9 + $0x64] sm:$0xf]
    %v3060 = vld [vmem:[#allocation9 + $0x68] sm:$0xf]
    %v3061 = vld [vmem:[#allocation9 + $0x6c] sm:$0xf]
    %v3062 = vld [vmem:[#allocation9 + $0x70] sm:$0xf]
    %v3063 = vld [vmem:[#allocation9 + $0x74] sm:$0xf]
    %v3064 = vld [vmem:[#allocation9 + $0x78] sm:$0xf]
    %v3065 = vld [vmem:[#allocation9 + $0x7c] sm:$0xf]
    %v3066 = vld [vmem:[#allocation9 + $0x80] sm:$0xf]
    %v3067 = vld [vmem:[#allocation9 + $0x84] sm:$0xf]
    %v3068 = vld [vmem:[#allocation9 + $0x88] sm:$0xf]
    %v3069 = vld [vmem:[#allocation9 + $0x8c] sm:$0xf]
    %v3070 = vld [vmem:[#allocation9 + $0x90] sm:$0xf]
    %v3071 = vld [vmem:[#allocation9 + $0x94] sm:$0xf]
    %v3072 = vld [vmem:[#allocation9 + $0x98] sm:$0xf]
    %v3073 = vld [vmem:[#allocation9 + $0x9c] sm:$0xf]
    %v3074 = vld [vmem:[#allocation9 + $0xa0] sm:$0xf]
    %v3075 = vld [vmem:[#allocation9 + $0xa4] sm:$0xf]
    %v3076 = vld [vmem:[#allocation9 + $0xa8] sm:$0xf]
    %v3077 = vld [vmem:[#allocation9 + $0xac] sm:$0xf]
    %v3078 = vld [vmem:[#allocation9 + $0xb0] sm:$0xf]
    %v3079 = vld [vmem:[#allocation9 + $0xb4] sm:$0xf]
    %v3080 = vld [vmem:[#allocation9 + $0xb8] sm:$0xf]
    %v3081 = vld [vmem:[#allocation9 + $0xbc] sm:$0xf]
    %v3082 = vld [vmem:[#allocation9 + $0xc0] sm:$0xf]
    %v3083 = vld [vmem:[#allocation9 + $0xc4] sm:$0xf]
    %v3084 = vld [vmem:[#allocation9 + $0xc8] sm:$0xf]
    %v3085 = vld [vmem:[#allocation9 + $0xcc] sm:$0xf]
    %v3086 = vld [vmem:[#allocation9 + $0xd0] sm:$0xf]
    %v3087 = vld [vmem:[#allocation9 + $0xd4] sm:$0xf]
    %v3088 = vld [vmem:[#allocation9 + $0xd8] sm:$0xf]
    %v3089 = vld [vmem:[#allocation9 + $0xdc] sm:$0xf]
    %v3090 = vld [vmem:[#allocation9 + $0xe0] sm:$0xf]
    %v3091 = vld [vmem:[#allocation9 + $0xe4] sm:$0xf]
    %v3092 = vld [vmem:[#allocation9 + $0xe8] sm:$0xf]
    %v3093 = vld [vmem:[#allocation9 + $0xec] sm:$0xf]
    %v3094 = vld [vmem:[#allocation9 + $0xf0] sm:$0xf]
    %v3095 = vld [vmem:[#allocation9 + $0xf4] sm:$0xf]
    %v3096 = vld [vmem:[#allocation9 + $0xf8] sm:$0xf]
    %v3097 = vld [vmem:[#allocation9 + $0xfc] sm:$0xf]
    %v3098 = vld [vmem:[%s4] sm:$0x1]
    %v3100 = vlaneseq
    %v3101 = vshrl.u32 %v3100, 7
    %v3102 = vsub.s32 0, %v3101
    %v3103 = vrot.slane %v3098, %v3102
    %v3169 = vunpack.c.l.b16 %v3034
    %v3170 = vunpack.c.l.b16 %v3035
    %v3171 = vunpack.c.l.b16 %v3036
    %v3172 = vunpack.c.l.b16 %v3037
    %v3173 = vunpack.c.l.b16 %v3038
    %v3174 = vunpack.c.l.b16 %v3039
    %v3175 = vunpack.c.l.b16 %v3040
    %v3176 = vunpack.c.l.b16 %v3041
    %v3177 = vunpack.c.l.b16 %v3042
    %v3178 = vunpack.c.l.b16 %v3043
    %v3179 = vunpack.c.l.b16 %v3044
    %v3180 = vunpack.c.l.b16 %v3045
    %v3181 = vunpack.c.l.b16 %v3046
    %v3182 = vunpack.c.l.b16 %v3047
    %v3183 = vunpack.c.l.b16 %v3048
    %v3184 = vunpack.c.l.b16 %v3049
    %v3185 = vunpack.c.l.b16 %v3050
    %v3186 = vunpack.c.l.b16 %v3051
    %v3187 = vunpack.c.l.b16 %v3052
    %v3188 = vunpack.c.l.b16 %v3053
    %v3189 = vunpack.c.l.b16 %v3054
    %v3190 = vunpack.c.l.b16 %v3055
    %v3191 = vunpack.c.l.b16 %v3056
    %v3192 = vunpack.c.l.b16 %v3057
    %v3193 = vunpack.c.l.b16 %v3058
    %v3194 = vunpack.c.l.b16 %v3059
    %v3195 = vunpack.c.l.b16 %v3060
    %v3196 = vunpack.c.l.b16 %v3061
    %v3197 = vunpack.c.l.b16 %v3062
    %v3198 = vunpack.c.l.b16 %v3063
    %v3199 = vunpack.c.l.b16 %v3064
    %v3200 = vunpack.c.l.b16 %v3065
    %v3201 = vunpack.c.l.b16 %v3066
    %v3202 = vunpack.c.l.b16 %v3067
    %v3203 = vunpack.c.l.b16 %v3068
    %v3204 = vunpack.c.l.b16 %v3069
    %v3205 = vunpack.c.l.b16 %v3070
    %v3206 = vunpack.c.l.b16 %v3071
    %v3207 = vunpack.c.l.b16 %v3072
    %v3208 = vunpack.c.l.b16 %v3073
    %v3209 = vunpack.c.l.b16 %v3074
    %v3210 = vunpack.c.l.b16 %v3075
    %v3211 = vunpack.c.l.b16 %v3076
    %v3212 = vunpack.c.l.b16 %v3077
    %v3213 = vunpack.c.l.b16 %v3078
    %v3214 = vunpack.c.l.b16 %v3079
    %v3215 = vunpack.c.l.b16 %v3080
    %v3216 = vunpack.c.l.b16 %v3081
    %v3217 = vunpack.c.l.b16 %v3082
    %v3218 = vunpack.c.l.b16 %v3083
    %v3219 = vunpack.c.l.b16 %v3084
    %v3220 = vunpack.c.l.b16 %v3085
    %v3221 = vunpack.c.l.b16 %v3086
    %v3222 = vunpack.c.l.b16 %v3087
    %v3223 = vunpack.c.l.b16 %v3088
    %v3224 = vunpack.c.l.b16 %v3089
    %v3225 = vunpack.c.l.b16 %v3090
    %v3226 = vunpack.c.l.b16 %v3091
    %v3227 = vunpack.c.l.b16 %v3092
    %v3228 = vunpack.c.l.b16 %v3093
    %v3229 = vunpack.c.l.b16 %v3094
    %v3230 = vunpack.c.l.b16 %v3095
    %v3231 = vunpack.c.l.b16 %v3096
    %v3232 = vunpack.c.l.b16 %v3097
    %v3233 = vpack.c.b16 %v3170, %v3169
    %v3234 = vpack.c.b16 %v3172, %v3171
    %v3235 = vpack.c.b16 %v3174, %v3173
    %v3236 = vpack.c.b16 %v3176, %v3175
    %v3237 = vpack.c.b16 %v3178, %v3177
    %v3238 = vpack.c.b16 %v3180, %v3179
    %v3239 = vpack.c.b16 %v3182, %v3181
    %v3240 = vpack.c.b16 %v3184, %v3183
    %v3241 = vpack.c.b16 %v3186, %v3185
    %v3242 = vpack.c.b16 %v3188, %v3187
    %v3243 = vpack.c.b16 %v3190, %v3189
    %v3244 = vpack.c.b16 %v3192, %v3191
    %v3245 = vpack.c.b16 %v3194, %v3193
    %v3246 = vpack.c.b16 %v3196, %v3195
    %v3247 = vpack.c.b16 %v3198, %v3197
    %v3248 = vpack.c.b16 %v3200, %v3199
    %v3249 = vpack.c.b16 %v3202, %v3201
    %v3250 = vpack.c.b16 %v3204, %v3203
    %v3251 = vpack.c.b16 %v3206, %v3205
    %v3252 = vpack.c.b16 %v3208, %v3207
    %v3253 = vpack.c.b16 %v3210, %v3209
    %v3254 = vpack.c.b16 %v3212, %v3211
    %v3255 = vpack.c.b16 %v3214, %v3213
    %v3256 = vpack.c.b16 %v3216, %v3215
    %v3257 = vpack.c.b16 %v3218, %v3217
    %v3258 = vpack.c.b16 %v3220, %v3219
    %v3259 = vpack.c.b16 %v3222, %v3221
    %v3260 = vpack.c.b16 %v3224, %v3223
    %v3261 = vpack.c.b16 %v3226, %v3225
    %v3262 = vpack.c.b16 %v3228, %v3227
    %v3263 = vpack.c.b16 %v3230, %v3229
    %v3264 = vpack.c.b16 %v3232, %v3231
    %3297 = vmatprep.subr.bf16.mxu0 0
    %3298 = vmatpush1.bf16.msra.mxu0 %v3240
    %3299 = vmatprep.subr.bf16.mxu0 0
    %3300 = vmatpush1.bf16.msra.mxu0 %v3239
    %3301 = vmatprep.subr.bf16.mxu0 0
    %3302 = vmatpush1.bf16.msra.mxu0 %v3238
    %3303 = vmatprep.subr.bf16.mxu0 0
    %3304 = vmatpush1.bf16.msra.mxu0 %v3237
    %3305 = vmatprep.subr.bf16.mxu0 0
    %3306 = vmatpush1.bf16.msra.mxu0 %v3236
    %3307 = vmatprep.subr.bf16.mxu0 0
    %3308 = vmatpush1.bf16.msra.mxu0 %v3235
    %3309 = vmatprep.subr.bf16.mxu0 0
    %3310 = vmatpush1.bf16.msra.mxu0 %v3234
    %3311 = vmatprep.subr.bf16.mxu0 0
    %3312 = vmatpush1.bf16.msra.mxu0 %v3233
    %3313 = vmatprep.subr.bf16.mxu0 0
    %3314 = vmatpush2.bf16.msra.mxu0 %v3248
    %3315 = vmatprep.subr.bf16.mxu0 0
    %3316 = vmatpush2.bf16.msra.mxu0 %v3247
    %3317 = vmatprep.subr.bf16.mxu0 0
    %3318 = vmatpush2.bf16.msra.mxu0 %v3246
    %3319 = vmatprep.subr.bf16.mxu0 0
    %3320 = vmatpush2.bf16.msra.mxu0 %v3245
    %3321 = vmatprep.subr.bf16.mxu0 0
    %3322 = vmatpush2.bf16.msra.mxu0 %v3244
    %3323 = vmatprep.subr.bf16.mxu0 0
    %3324 = vmatpush2.bf16.msra.mxu0 %v3243
    %3325 = vmatprep.subr.bf16.mxu0 0
    %3326 = vmatpush2.bf16.msra.mxu0 %v3242
    %3327 = vmatprep.subr.bf16.mxu0 0
    %3328 = vmatpush2.bf16.msra.mxu0 %v3241
    %3329 = vmatprep.mubr.bf16.mxu0 %v3003
    %3330 = vmatmul.mubr.bf16.gmra.mxu0 %v3002
    %v3331 = vpop.f32.mrf.mxu0
    %v3332 = vadd.f32 %v3103, %v3331
    %v3333 = vpop.f32.mrf.mxu0
    %v3334 = vpop.f32.mrf.mxu0
    %v3335 = vadd.f32 %v3103, %v3334
    %v3336 = vpop.f32.mrf.mxu0
    %3337 = vmatprep.mubr.bf16.mxu0 %v3007
    %3338 = vmatmul.mubr.bf16.gmra.mxu0 %v3006
    %v3339 = vpop.f32.mrf.mxu0
    %v3340 = vadd.f32 %v3103, %v3339
    %v3341 = vpop.f32.mrf.mxu0
    %v3342 = vpop.f32.mrf.mxu0
    %v3343 = vadd.f32 %v3103, %v3342
    %v3344 = vpop.f32.mrf.mxu0
    %3345 = vmatprep.mubr.bf16.mxu0 %v3011
    %3346 = vmatmul.mubr.bf16.gmra.mxu0 %v3010
    %v3347 = vpop.f32.mrf.mxu0
    %v3348 = vadd.f32 %v3103, %v3347
    %v3349 = vpop.f32.mrf.mxu0
    %v3350 = vpop.f32.mrf.mxu0
    %v3351 = vadd.f32 %v3103, %v3350
    %v3352 = vpop.f32.mrf.mxu0
    %3353 = vmatprep.mubr.bf16.mxu0 %v3015
    %3354 = vmatmul.mubr.bf16.gmra.mxu0 %v3014
    %v3355 = vpop.f32.mrf.mxu0
    %v3356 = vadd.f32 %v3103, %v3355
    %v3357 = vpop.f32.mrf.mxu0
    %v3358 = vpop.f32.mrf.mxu0
    %v3359 = vadd.f32 %v3103, %v3358
    %v3360 = vpop.f32.mrf.mxu0
    %3361 = vmatprep.mubr.bf16.mxu0 %v3019
    %3362 = vmatmul.mubr.bf16.gmra.mxu0 %v3018
    %v3363 = vpop.f32.mrf.mxu0
    %v3364 = vadd.f32 %v3103, %v3363
    %v3365 = vpop.f32.mrf.mxu0
    %v3366 = vpop.f32.mrf.mxu0
    %v3367 = vadd.f32 %v3103, %v3366
    %v3368 = vpop.f32.mrf.mxu0
    %3369 = vmatprep.mubr.bf16.mxu0 %v3023
    %3370 = vmatmul.mubr.bf16.gmra.mxu0 %v3022
    %v3371 = vpop.f32.mrf.mxu0
    %v3372 = vadd.f32 %v3103, %v3371
    %v3373 = vpop.f32.mrf.mxu0
    %v3374 = vpop.f32.mrf.mxu0
    %v3375 = vadd.f32 %v3103, %v3374
    %v3376 = vpop.f32.mrf.mxu0
    %3377 = vmatprep.mubr.bf16.mxu0 %v3027
    %3378 = vmatmul.mubr.bf16.gmra.mxu0 %v3026
    %v3379 = vpop.f32.mrf.mxu0
    %v3380 = vadd.f32 %v3103, %v3379
    %v3381 = vpop.f32.mrf.mxu0
    %v3382 = vpop.f32.mrf.mxu0
    %v3383 = vadd.f32 %v3103, %v3382
    %v3384 = vpop.f32.mrf.mxu0
    %3385 = vmatprep.mubr.bf16.mxu0 %v3031
    %3386 = vmatmul.mubr.bf16.gmra.mxu0 %v3030
    %v3387 = vpop.f32.mrf.mxu0
    %v3388 = vadd.f32 %v3103, %v3387
    %v3389 = vpop.f32.mrf.mxu0
    %v3390 = vpop.f32.mrf.mxu0
    %v3391 = vadd.f32 %v3103, %v3390
    %v3392 = vpop.f32.mrf.mxu0
    %3393 = vdwg.mxu0
    %3394 = vmatprep.subr.bf16.mxu0 0
    %3395 = vmatpush1.bf16.msra.mxu0 %v3256
    %3396 = vmatprep.subr.bf16.mxu0 0
    %3397 = vmatpush1.bf16.msra.mxu0 %v3255
    %3398 = vmatprep.subr.bf16.mxu0 0
    %3399 = vmatpush1.bf16.msra.mxu0 %v3254
    %3400 = vmatprep.subr.bf16.mxu0 0
    %3401 = vmatpush1.bf16.msra.mxu0 %v3253
    %3402 = vmatprep.subr.bf16.mxu0 0
    %3403 = vmatpush1.bf16.msra.mxu0 %v3252
    %3404 = vmatprep.subr.bf16.mxu0 0
    %3405 = vmatpush1.bf16.msra.mxu0 %v3251
    %3406 = vmatprep.subr.bf16.mxu0 0
    %3407 = vmatpush1.bf16.msra.mxu0 %v3250
    %3408 = vmatprep.subr.bf16.mxu0 0
    %3409 = vmatpush1.bf16.msra.mxu0 %v3249
    %3410 = vmatprep.subr.bf16.mxu0 0
    %3411 = vmatpush2.bf16.msra.mxu0 %v3264
    %3412 = vmatprep.subr.bf16.mxu0 0
    %3413 = vmatpush2.bf16.msra.mxu0 %v3263
    %3414 = vmatprep.subr.bf16.mxu0 0
    %3415 = vmatpush2.bf16.msra.mxu0 %v3262
    %3416 = vmatprep.subr.bf16.mxu0 0
    %3417 = vmatpush2.bf16.msra.mxu0 %v3261
    %3418 = vmatprep.subr.bf16.mxu0 0
    %3419 = vmatpush2.bf16.msra.mxu0 %v3260
    %3420 = vmatprep.subr.bf16.mxu0 0
    %3421 = vmatpush2.bf16.msra.mxu0 %v3259
    %3422 = vmatprep.subr.bf16.mxu0 0
    %3423 = vmatpush2.bf16.msra.mxu0 %v3258
    %3424 = vmatprep.subr.bf16.mxu0 0
    %3425 = vmatpush2.bf16.msra.mxu0 %v3257
    %3426 = vmatprep.mubr.bf16.mxu0 %v3005
    %3427 = vmatmul.mubr.bf16.gmra.mxu0 %v3004
    %v3428 = vpop.f32.mrf.mxu0
    %v3429 = vadd.f32 %v3332, %v3428
    %v3430 = vpop.f32.mrf.mxu0
    %v3431 = vpop.f32.mrf.mxu0
    %v3432 = vadd.f32 %v3335, %v3431
    %v3433 = vpop.f32.mrf.mxu0
    %3434 = vmatprep.mubr.bf16.mxu0 %v3009
    %3435 = vmatmul.mubr.bf16.gmra.mxu0 %v3008
    %v3436 = vpop.f32.mrf.mxu0
    %v3437 = vadd.f32 %v3340, %v3436
    %v3438 = vpop.f32.mrf.mxu0
    %v3439 = vpop.f32.mrf.mxu0
    %v3440 = vadd.f32 %v3343, %v3439
    %v3441 = vpop.f32.mrf.mxu0
    %3442 = vmatprep.mubr.bf16.mxu0 %v3013
    %3443 = vmatmul.mubr.bf16.gmra.mxu0 %v3012
    %v3444 = vpop.f32.mrf.mxu0
    %v3445 = vadd.f32 %v3348, %v3444
    %v3446 = vpop.f32.mrf.mxu0
    %v3447 = vpop.f32.mrf.mxu0
    %v3448 = vadd.f32 %v3351, %v3447
    %v3449 = vpop.f32.mrf.mxu0
    %3450 = vmatprep.mubr.bf16.mxu0 %v3017
    %3451 = vmatmul.mubr.bf16.gmra.mxu0 %v3016
    %v3452 = vpop.f32.mrf.mxu0
    %v3453 = vadd.f32 %v3356, %v3452
    %v3454 = vpop.f32.mrf.mxu0
    %v3455 = vpop.f32.mrf.mxu0
    %v3456 = vadd.f32 %v3359, %v3455
    %v3457 = vpop.f32.mrf.mxu0
    %3458 = vmatprep.mubr.bf16.mxu0 %v3021
    %3459 = vmatmul.mubr.bf16.gmra.mxu0 %v3020
    %v3460 = vpop.f32.mrf.mxu0
    %v3461 = vadd.f32 %v3364, %v3460
    %v3462 = vpop.f32.mrf.mxu0
    %v3463 = vpop.f32.mrf.mxu0
    %v3464 = vadd.f32 %v3367, %v3463
    %v3465 = vpop.f32.mrf.mxu0
    %3466 = vmatprep.mubr.bf16.mxu0 %v3025
    %3467 = vmatmul.mubr.bf16.gmra.mxu0 %v3024
    %v3468 = vpop.f32.mrf.mxu0
    %v3469 = vadd.f32 %v3372, %v3468
    %v3470 = vpop.f32.mrf.mxu0
    %v3471 = vpop.f32.mrf.mxu0
    %v3472 = vadd.f32 %v3375, %v3471
    %v3473 = vpop.f32.mrf.mxu0
    %3474 = vmatprep.mubr.bf16.mxu0 %v3029
    %3475 = vmatmul.mubr.bf16.gmra.mxu0 %v3028
    %v3476 = vpop.f32.mrf.mxu0
    %v3477 = vadd.f32 %v3380, %v3476
    %v3478 = vpop.f32.mrf.mxu0
    %v3479 = vpop.f32.mrf.mxu0
    %v3480 = vadd.f32 %v3383, %v3479
    %v3481 = vpop.f32.mrf.mxu0
    %3482 = vmatprep.mubr.bf16.mxu0 %v3033
    %3483 = vmatmul.mubr.bf16.gmra.mxu0 %v3032
    %v3484 = vpop.f32.mrf.mxu0
    %v3485 = vadd.f32 %v3388, %v3484
    %v3486 = vpop.f32.mrf.mxu0
    %v3487 = vpop.f32.mrf.mxu0
    %v3488 = vadd.f32 %v3391, %v3487
    %v3489 = vpop.f32.mrf.mxu0
    %3490 = vdwg.mxu0
    %v3491 = vmax.f32 %v3429, 0.0
    %v3492 = vmax.f32 %v3432, 0.0
    %v3493 = vmax.f32 %v3437, 0.0
    %v3494 = vmax.f32 %v3440, 0.0
    %v3495 = vmax.f32 %v3445, 0.0
    %v3496 = vmax.f32 %v3448, 0.0
    %v3497 = vmax.f32 %v3453, 0.0
    %v3498 = vmax.f32 %v3456, 0.0
    %v3499 = vmax.f32 %v3461, 0.0
    %v3500 = vmax.f32 %v3464, 0.0
    %v3501 = vmax.f32 %v3469, 0.0
    %v3502 = vmax.f32 %v3472, 0.0
    %v3503 = vmax.f32 %v3477, 0.0
    %v3504 = vmax.f32 %v3480, 0.0
    %v3505 = vmax.f32 %v3485, 0.0
    %v3506 = vmax.f32 %v3488, 0.0
    %v3507 = vld [vmem:[%s5] sm:$0xff]
    %3508 = vmatprep.subr.mxu0 0.0
    %3509 = vmatpush1.xpose.msra.mxu0 %v3506
    %3510 = vmatprep.subr.mxu0 0.0
    %3511 = vmatpush1.xpose.msra.mxu0 %v3505
    %3512 = vmatprep.subr.mxu0 0.0
    %3513 = vmatpush1.xpose.msra.mxu0 %v3504
    %3514 = vmatprep.subr.mxu0 0.0
    %3515 = vmatpush1.xpose.msra.mxu0 %v3503
    %3516 = vmatprep.subr.mxu0 0.0
    %3517 = vmatpush1.xpose.msra.mxu0 %v3502
    %3518 = vmatprep.subr.mxu0 0.0
    %3519 = vmatpush1.xpose.msra.mxu0 %v3501
    %3520 = vmatprep.subr.mxu0 0.0
    %3521 = vmatpush1.xpose.msra.mxu0 %v3500
    %3522 = vmatprep.subr.mxu0 0.0
    %3523 = vmatpush1.xpose.msra.mxu0 %v3499
    %3524 = vmatprep.subr.mxu0 0.0
    %3525 = vmatpush1.xpose.msra.mxu0 %v3498
    %3526 = vmatprep.subr.mxu0 0.0
    %3527 = vmatpush1.xpose.msra.mxu0 %v3497
    %3528 = vmatprep.subr.mxu0 0.0
    %3529 = vmatpush1.xpose.msra.mxu0 %v3496
    %3530 = vmatprep.subr.mxu0 0.0
    %3531 = vmatpush1.xpose.msra.mxu0 %v3495
    %3532 = vmatprep.subr.mxu0 0.0
    %3533 = vmatpush1.xpose.msra.mxu0 %v3494
    %3534 = vmatprep.subr.mxu0 0.0
    %3535 = vmatpush1.xpose.msra.mxu0 %v3493
    %3536 = vmatprep.subr.mxu0 0.0
    %3537 = vmatpush1.xpose.msra.mxu0 %v3492
    %3538 = vmatprep.subr.mxu0 0.0
    %3539 = vmatpush1.xpose.msra.mxu0 %v3491
    %3540 = vmatprep.subr.mxu0 0.0
    %3541 = vmatpush2.xpose.msra.mxu0 0.0
    %3542 = vmatprep.subr.mxu0 0.0
    %3543 = vmatpush2.xpose.msra.mxu0 0.0
    %3544 = vmatprep.subr.mxu0 0.0
    %3545 = vmatpush2.xpose.msra.mxu0 0.0
    %3546 = vmatprep.subr.mxu0 0.0
    %3547 = vmatpush2.xpose.msra.mxu0 0.0
    %3548 = vmatprep.subr.mxu0 0.0
    %3549 = vmatpush2.xpose.msra.mxu0 0.0
    %3550 = vmatprep.subr.mxu0 0.0
    %3551 = vmatpush2.xpose.msra.mxu0 0.0
    %3552 = vmatprep.subr.mxu0 0.0
    %3553 = vmatpush2.xpose.msra.mxu0 0.0
    %3554 = vmatprep.subr.mxu0 0.0
    %3555 = vmatpush2.xpose.msra.mxu0 0.0
    %3556 = vmatprep.subr.mxu0 0.0
    %3557 = vmatpush2.xpose.msra.mxu0 0.0
    %3558 = vmatprep.subr.mxu0 0.0
    %3559 = vmatpush2.xpose.msra.mxu0 0.0
    %3560 = vmatprep.subr.mxu0 0.0
    %3561 = vmatpush2.xpose.msra.mxu0 0.0
    %3562 = vmatprep.subr.mxu0 0.0
    %3563 = vmatpush2.xpose.msra.mxu0 0.0
    %3564 = vmatprep.subr.mxu0 0.0
    %3565 = vmatpush2.xpose.msra.mxu0 0.0
    %3566 = vmatprep.subr.mxu0 0.0
    %3567 = vmatpush2.xpose.msra.mxu0 0.0
    %3568 = vmatprep.subr.mxu0 0.0
    %3569 = vmatpush2.xpose.msra.mxu0 0.0
    %3570 = vmatprep.subr.mxu0 0.0
    %3571 = vmatpush2.xpose.msra.mxu0 0.0
    %3572 = vmatprep.mubr.f32.mxu0 0.0
    %3573 = vmatmul.mubr.f32.gmra.mxu0 %v3507
    %v3574 = vpop.f32.mrf.mxu0
    %v3575 = vadd.f32 0.0, %v3574
    %v3576 = vpop.f32.mrf.mxu0
    %3577 = vdwg.mxu0
    %v3578 = vld [vmem:[#allocation2] sm:$0x1]
    %s3579 = vtos %v3578
    %v3580 = vstv %s3579
    %v3581 = vadd.f32 %v3575, %v3580
    %3582 = vst [vmem:[#allocation11] sm:$0x1] %v3581
    %v3583 = vld [vmem:[%s8] sm:$0x1]
    %v3584 = vld [vmem:[%s7] sm:$0x1]
    %v3585 = vand.u32 2147483647, %v3581
    %v3586 = vsub.f32 0.0, %v3585
    %v3587 = vmul.f32 %v3586, 1.442695
    %v3588 = vpow.pop %v3587
    %v3589 = vadd.f32 %v3588, 1.0
    %v3590 = vlog2.pop %v3589
    %v3591 = vmul.f32 %v3590, 0.6931472
    %v3592 = vmul.f32 -0.5, %v3588
    %v3593 = vadd.f32 %v3592, 1.0
    %v3594 = vmul.f32 %v3593, %v3588
    %v3595 = vand.u32 2147483647, %v3588
    %vm3596 = vcmp.lt.f32.partialorder %v3595, 0.0004427343
    %v3597 = vsel %vm3596, %v3594, %v3591
    %v3598 = vmax.f32 %v3581, 0.0
    %v3599 = vadd.f32 %v3598, %v3597
    %v3600 = vsub.f32 0.0, %v3581
    %v3601 = vmax.f32 %v3600, 0.0
    %v3602 = vadd.f32 %v3601, %v3597
    %v3603 = vmul.f32 %v3583, 2.0
    %v3604 = vmul.f32 %v3603, %v3602
    %v3605 = vsub.f32 1.0, %v3583
    %v3606 = vmul.f32 %v3605, %v3599
    %v3607 = vadd.f32 %v3604, %v3606
    %v3608 = vmul.f32 %v3584, %v3607
    %vm3609 = vcmask 1040384
    %v3610 = vsel %vm3609, %v3608, 0.0
    %3611 = vadd.xlane.f32.xlu0 %v3610
    %v3612 = vpop.xlane.xlu0 %3611
    %v3613 = vrot.slane %v3612, 4
    %v3614 = vadd.f32 %v3612, %v3613
    %v3615 = vrot.slane %v3614, 2
    %v3616 = vadd.f32 %v3614, %v3615
    %v3617 = vrot.slane %v3616, 1
    %v3618 = vadd.f32 %v3616, %v3617
    %s3619 = vtos %v3618
    %v3620 = vsel %vm3609, %v3584, 0.0
    %3621 = vadd.xlane.f32.xlu0 %v3620
    %v3622 = vpop.xlane.xlu0 %3621
    %v3623 = vrot.slane %v3622, 4
    %v3624 = vadd.f32 %v3622, %v3623
    %v3625 = vrot.slane %v3624, 2
    %v3626 = vadd.f32 %v3624, %v3625
    %v3627 = vrot.slane %v3626, 1
    %v3628 = vadd.f32 %v3626, %v3627
    %s3629 = vtos %v3628
    %v3630 = vlaneseq
    %v3631 = vand.u32 %v3630, 127
    %vm3632 = vcmp.eq.s32.totalorder %v3631, 0
    %v3633 = vstv %s3619
    %v3634 = vsel %vm3632, %v3633, 0.0
    %vm3635 = vcmp.eq.s32.totalorder %v3631, 1
    %v3636 = vstv %s3629
    %v3637 = vsel %vm3635, %v3636, 0.0
    %v3638 = vadd.f32 %v3634, %v3637
    %3639 = vst [vmem:[#allocation12] sm:$0x1] %v3638
    // Predicated region
    $region54: #{tpu_custom_call.1} parent=1 // pred_check
      _
    $region55: #{tpu_custom_call.1} parent=1 // pred_check_branch
      %3641 = sbr.rel (0) target = $region57
    $region56: #{tpu_custom_call.1} parent=1 // pred_region
      %s3643 = ssub.s32 16, 16
      %3644 = vsyncadd [#allocation5], %s3643
      %s3646 = sshll.u32 [#allocation11], 4
      %s3647 = int_to_ptr.vmem [resolvable:$true] %s3646
      %3649 = dma.vmem_to_hbm [thread:$0]  %s3647, 16, %s9, [#allocation5]
    $region57: #{tpu_custom_call.1} parent=1 // pred_fallthru
      _
    // Predicated region
    $region58: #{tpu_custom_call.1} parent=1 // pred_check
      _
    $region59: #{tpu_custom_call.1} parent=1 // pred_check_branch
      %3651 = sbr.rel (0) target = $region61
    $region60: #{tpu_custom_call.1} parent=1 // pred_region
      %s3653 = ssub.s32 16, 16
      %3654 = vsyncadd [#allocation13], %s3653
      %s3656 = sshll.u32 [#allocation12], 4
      %s3657 = int_to_ptr.vmem [resolvable:$true] %s3656
      %3659 = dma.vmem_to_hbm [thread:$0]  %s3657, 16, %s10, [#allocation13]
    $region61: #{tpu_custom_call.1} parent=1 // pred_fallthru
      _
    // Predicated region
    $region62: #{tpu_custom_call.1} parent=1 // pred_check
      _
    $region63: #{tpu_custom_call.1} parent=1 // pred_check_branch
      %3661 = sbr.rel (0) target = $region65
    $region64: #{tpu_custom_call.1} parent=1 // pred_region
      %3662 = dma.done [#allocation5], 16
    $region65: #{tpu_custom_call.1} parent=1 // pred_fallthru
      _
    // Predicated region
    $region66: #{tpu_custom_call.1} parent=1 // pred_check
      _
    $region67: #{tpu_custom_call.1} parent=1 // pred_check_branch
      %3664 = sbr.rel (0) target = $region69
    $region68: #{tpu_custom_call.1} parent=1 // pred_region
      %3665 = dma.done [#allocation13], 16
    $region69: #{tpu_custom_call.1} parent=1 // pred_fallthru
      _
    %3666 = vsyncpa [#allocation4], 1
    %3667 = vsyncpa [#allocation7], 1
    %3668 = vsyncpa [#allocation10], 1
    %3669 = vsyncpa [#allocation5], 1
    %3670 = vsyncpa [#allocation13], 1

</llo_original>
